<compile_context>
chip_gen: v5e
topology: v5e:2x2
jax: 0.10.0
libtpu: 0.0.40
codegen_flags: <defaults>
</compile_context>

<pallas_src>
import math

import jax
import jax.numpy as jnp
from jax.experimental import pallas as pl
from jax.experimental.pallas import tpu as pltpu


# ----------------------------------------------------------------------------
# Kernel: fused (conv3x3 + BN + ReLU) x 2 for one batch element
# ----------------------------------------------------------------------------
def _double_conv_kernel(x_ref, w1_ref, b1_ref, w2_ref, b2_ref, o_ref,
                        pad1, pad2):
    # x_ref:  (1, H, W, Cin)          NHWC input tile
    # w1_ref: (3, 3, Cin, Cout)       conv1 weights (HWIO), BN1 scale folded in
    # b1_ref: (1, Cout)               fused conv1 bias + BN1 shift
    # w2_ref: (3, 3, Cout, Cout)      conv2 weights (HWIO), BN2 scale folded in
    # b2_ref: (1, Cout)
    # o_ref:  (1, Cout, H*W)          lane-dense, NCHW-flat output tile
    # pad1:   VMEM (H+2, W_pad, Cin)  halo scratch for conv1
    # pad2:   VMEM (H+2, W_pad, Cout) halo scratch for conv2
    #
    # Scratch layout: data rows at [1:H+1], data columns at [0:W) (sublane
    # aligned).  Rows 0 / H+1 and columns [W:W_pad) stay zero: column W is the
    # right halo, the (zero) column W_pad-1 acts as the left halo through the
    # cyclic sublane roll below.
    H, W, Cin = x_ref.shape[1], x_ref.shape[2], x_ref.shape[3]
    Cout = w1_ref.shape[3]
    W_pad = pad1.shape[1]

    def zero_halo(ref, c):
        # Border-only zeroing; the interior is fully overwritten every step.
        ref[0] = jnp.zeros((W_pad, c), jnp.float32)
        ref[H + 1] = jnp.zeros((W_pad, c), jnp.float32)
        ref[:, W:, :] = jnp.zeros((H + 2, W_pad - W, c), jnp.float32)

    def conv3x3_bias_relu(pad_ref, w_ref, b_ref, cin):
        # 3x3 'same' conv as 9 (H*W, cin) @ (cin, Cout) MXU matmuls with f32
        # accumulation; kw offsets via sublane roll so slices stay aligned.
        base = pad_ref[...]                                  # (H+2, W_pad, cin)
        acc = jnp.zeros((H * W, Cout), jnp.float32)
        for kw in range(3):
            shift = (1 - kw) % W_pad                         # +1, 0, W_pad-1
            src = base if shift == 0 else pltpu.roll(base, shift=shift, axis=1)
            window = src[:, 0:W, :]                          # sublane-aligned
            for kh in range(3):
                patch = window[kh:kh + H].reshape(H * W, cin)
                acc = acc + jnp.dot(patch, w_ref[kh, kw],
                                    preferred_element_type=jnp.float32)
        return jnp.maximum(acc + b_ref[...], 0.0)            # (H*W, Cout)

    zero_halo(pad1, Cin)
    zero_halo(pad2, Cout)

    # Block 1: conv1 + BN1 + ReLU  (intermediate stays in VMEM).
    pad1[1:H + 1, 0:W, :] = x_ref[0]
    y1 = conv3x3_bias_relu(pad1, w1_ref, b1_ref, Cin)
    pad2[1:H + 1, 0:W, :] = y1.reshape(H, W, Cout)

    # Block 2: conv2 + BN2 + ReLU, stored lane-dense / NCHW-flat.
    y2 = conv3x3_bias_relu(pad2, w2_ref, b2_ref, Cout)
    o_ref[0] = y2.T.astype(o_ref.dtype)                      # (Cout, H*W)


# ----------------------------------------------------------------------------
# Wrapper
# ----------------------------------------------------------------------------
def _fold_bn_into_conv(w_oihw, conv_b, gamma, beta, mean, var, eps=1e-5):
    """Fold inference-mode BN into conv weights/bias (trace-time, f32)."""
    scale = gamma / jnp.sqrt(var + eps)                      # (Cout,)
    w_hwio = jnp.transpose(w_oihw, (2, 3, 1, 0)) * scale     # scale folded in
    bias = (conv_b - mean) * scale + beta                    # fused bias
    cout = w_oihw.shape[0]
    return w_hwio.astype(jnp.float32), bias.reshape(1, cout).astype(jnp.float32)


def _tiled_bytes(shape, itemsize=4):
    """VMEM footprint of a buffer, honoring (8,128) tiling of the last 2 dims."""
    shape = tuple(shape)
    if len(shape) < 2:
        shape = (1,) + shape
    lead = math.prod(shape[:-2]) if len(shape) > 2 else 1
    sub = -(-shape[-2] // 8) * 8
    lane = -(-shape[-1] // 128) * 128
    return lead * sub * lane * itemsize


def double_conv_forward(x_nchw, p, eps=1e-5):
    """Pallas implementation of DoubleConv.forward. x_nchw: (N, Cin, H, W)."""
    # NCHW -> NHWC for the kernel (one XLA HBM pass).  A real NHWC network
    # would feed NHWC directly; the kernel output is already NCHW-flat so no
    # transpose is needed on the way out.
    x = jnp.transpose(x_nchw, (0, 2, 3, 1))
    N, H, W, Cin = x.shape
    Cout = p["w1"].shape[0]
    W_pad = ((W + 1 + 7) // 8) * 8                           # >= W+1, mult of 8

    w1, b1 = _fold_bn_into_conv(p["w1"], p["b1"], p["g1"], p["beta1"],
                                p["mean1"], p["var1"], eps)
    w2, b2 = _fold_bn_into_conv(p["w2"], p["b2"], p["g2"], p["beta2"],
                                p["mean2"], p["var2"], eps)

    # Scoped-VMEM budget: double-buffered in/out blocks + single scratches,
    # with headroom for in-kernel temporaries (rolled copies, accumulators).
    blocks = [
        (2, (1, H, W, Cin)),            # x block
        (2, (3, 3, Cin, Cout)),         # w1
        (2, (1, Cout)),                 # b1
        (2, (3, 3, Cout, Cout)),        # w2
        (2, (1, Cout)),                 # b2
        (2, (1, Cout, H * W)),          # out block
        (1, (H + 2, W_pad, Cin)),       # pad1 scratch
        (1, (H + 2, W_pad, Cout)),      # pad2 scratch
    ]
    vmem_bytes = sum(n * _tiled_bytes(s) for n, s in blocks)
    vmem_limit = int(min(max(4 * vmem_bytes, 32 * 1024 * 1024),
                         64 * 1024 * 1024))

    out = pl.pallas_call(
        _double_conv_kernel,
        out_shape=jax.ShapeDtypeStruct((N, Cout, H * W), jnp.float32),
        grid=(N,),
        in_specs=[
            pl.BlockSpec((1, H, W, Cin), lambda n: (n, 0, 0, 0)),
            pl.BlockSpec((3, 3, Cin, Cout), lambda n: (0, 0, 0, 0)),
            pl.BlockSpec((1, Cout), lambda n: (0, 0)),
            pl.BlockSpec((3, 3, Cout, Cout), lambda n: (0, 0, 0, 0)),
            pl.BlockSpec((1, Cout), lambda n: (0, 0)),
        ],
        out_specs=pl.BlockSpec((1, Cout, H * W), lambda n: (n, 0, 0)),
        scratch_shapes=[
            pltpu.VMEM((H + 2, W_pad, Cin), jnp.float32),
            pltpu.VMEM((H + 2, W_pad, Cout), jnp.float32),
        ],
        compiler_params=pltpu.CompilerParams(
            dimension_semantics=("parallel",),
            vmem_limit_bytes=vmem_limit),
    )(x, w1, b1, w2, b2)

    return out.reshape(N, Cout, H, W)                        # free reshape: NCHW


# ----------------------------------------------------------------------------
# Pure-JAX reference (for correctness check only)
# ----------------------------------------------------------------------------
def _ref_double_conv(x, p, eps=1e-5):
    def block(x, w, b, g, beta, mean, var):
        y = jax.lax.conv_general_dilated(
            x, w, (1, 1), ((1, 1), (1, 1)),
            dimension_numbers=("NCHW", "OIHW", "NCHW"))
        y = y + b[None, :, None, None]
        y = (y - mean[None, :, None, None]) / jnp.sqrt(
            var[None, :, None, None] + eps)
        y = y * g[None, :, None, None] + beta[None, :, None, None]
        return jnp.maximum(y, 0.0)

    x = block(x, p["w1"], p["b1"], p["g1"], p["beta1"], p["mean1"], p["var1"])
    x = block(x, p["w2"], p["b2"], p["g2"], p["beta2"], p["mean2"], p["var2"])
    return x


# ----------------------------------------------------------------------------
if __name__ == "__main__":
    N, in_ch, out_ch, H, W = 2, 4, 8, 16, 16

    key = jax.random.PRNGKey(0)
    ks = jax.random.split(key, 13)

    params = {
        # conv1: in_ch -> out_ch (OIHW, PyTorch layout)
        "w1": 0.1 * jax.random.normal(ks[0], (out_ch, in_ch, 3, 3), jnp.float32),
        "b1": 0.1 * jax.random.normal(ks[1], (out_ch,), jnp.float32),
        "g1": 1.0 + 0.1 * jax.random.normal(ks[2], (out_ch,), jnp.float32),
        "beta1": 0.1 * jax.random.normal(ks[3], (out_ch,), jnp.float32),
        "mean1": 0.1 * jax.random.normal(ks[4], (out_ch,), jnp.float32),
        "var1": jax.random.uniform(ks[5], (out_ch,), jnp.float32, 0.5, 1.5),
        # conv2: out_ch -> out_ch
        "w2": 0.1 * jax.random.normal(ks[6], (out_ch, out_ch, 3, 3), jnp.float32),
        "b2": 0.1 * jax.random.normal(ks[7], (out_ch,), jnp.float32),
        "g2": 1.0 + 0.1 * jax.random.normal(ks[8], (out_ch,), jnp.float32),
        "beta2": 0.1 * jax.random.normal(ks[9], (out_ch,), jnp.float32),
        "mean2": 0.1 * jax.random.normal(ks[10], (out_ch,), jnp.float32),
        "var2": jax.random.uniform(ks[11], (out_ch,), jnp.float32, 0.5, 1.5),
    }

    x = jax.random.normal(ks[12], (N, in_ch, H, W), jnp.float32)

    out = jax.block_until_ready(double_conv_forward(x, params))
    ref = jax.block_until_ready(_ref_double_conv(x, params))

    assert out.shape == (N, out_ch, H, W), out.shape
    assert jnp.allclose(out, ref, rtol=1e-4, atol=1e-4), (
        float(jnp.max(jnp.abs(out - ref))))

    print("KERNEL_OK")
</pallas_src>

<mosaic_0001>
module attributes {stable_mosaic.version = 11 : i64} {
  func.func @_double_conv_kernel(%arg0: i32, %arg1: memref<1x16x16x4xf32, #tpu.memory_space<vmem>>, %arg2: memref<3x3x4x8xf32, #tpu.memory_space<vmem>>, %arg3: memref<1x8xf32, #tpu.memory_space<vmem>>, %arg4: memref<3x3x8x8xf32, #tpu.memory_space<vmem>>, %arg5: memref<1x8xf32, #tpu.memory_space<vmem>>, %arg6: memref<1x8x256xf32, #tpu.memory_space<vmem>>, %arg7: memref<18x24x4xf32, #tpu.memory_space<vmem>>, %arg8: memref<18x24x8xf32, #tpu.memory_space<vmem>>) attributes {dimension_semantics = [#tpu.dimension_semantics<parallel>], iteration_bounds = array<i64: 2>, scalar_prefetch = 0 : i64, scratch_operands = 2 : i64, tpu.core_type = #tpu.core_type<tc>, window_params = [{transform_indices = @transform_0, window_bounds = array<i64: 1, 16, 16, 4>}, {pipeline_mode = #tpu.pipeline_mode<synchronous>, transform_indices = @transform_1, window_bounds = array<i64: 3, 3, 4, 8>}, {pipeline_mode = #tpu.pipeline_mode<synchronous>, transform_indices = @transform_2, window_bounds = array<i64: 1, 8>}, {pipeline_mode = #tpu.pipeline_mode<synchronous>, transform_indices = @transform_3, window_bounds = array<i64: 3, 3, 8, 8>}, {pipeline_mode = #tpu.pipeline_mode<synchronous>, transform_indices = @transform_4, window_bounds = array<i64: 1, 8>}, {transform_indices = @transform_5, window_bounds = array<i64: 1, 8, 256>}]} {
    %cst = arith.constant 0.000000e+00 : f32
    %0 = vector.broadcast %cst : f32 to vector<24x4xf32>
    %c0 = arith.constant 0 : index
    %c0_0 = arith.constant 0 : index
    %c0_1 = arith.constant 0 : index
    %1 = vector.load %arg7[%c0, %c0_0, %c0_1] : memref<18x24x4xf32, #tpu.memory_space<vmem>>, vector<1x24x4xf32>
    %2 = vector.shape_cast %1 : vector<1x24x4xf32> to vector<24x4xf32>
    %3 = vector.shape_cast %0 : vector<24x4xf32> to vector<1x24x4xf32>
    tpu.vector_store %arg7[%c0, %c0_0, %c0_1], %3 {strides = array<i32>} : memref<18x24x4xf32, #tpu.memory_space<vmem>>, vector<1x24x4xf32>,
    %cst_2 = arith.constant 0.000000e+00 : f32
    %4 = vector.broadcast %cst_2 : f32 to vector<24x4xf32>
    %c17 = arith.constant 17 : index
    %c0_3 = arith.constant 0 : index
    %c0_4 = arith.constant 0 : index
    %5 = vector.load %arg7[%c17, %c0_3, %c0_4] : memref<18x24x4xf32, #tpu.memory_space<vmem>>, vector<1x24x4xf32>
    %6 = vector.shape_cast %5 : vector<1x24x4xf32> to vector<24x4xf32>
    %7 = vector.shape_cast %4 : vector<24x4xf32> to vector<1x24x4xf32>
    tpu.vector_store %arg7[%c17, %c0_3, %c0_4], %7 {strides = array<i32>} : memref<18x24x4xf32, #tpu.memory_space<vmem>>, vector<1x24x4xf32>,
    %cst_5 = arith.constant 0.000000e+00 : f32
    %8 = vector.broadcast %cst_5 : f32 to vector<18x8x4xf32>
    %c0_6 = arith.constant 0 : index
    %c16 = arith.constant 16 : index
    %c0_7 = arith.constant 0 : index
    %9 = vector.load %arg7[%c0_6, %c16, %c0_7] : memref<18x24x4xf32, #tpu.memory_space<vmem>>, vector<18x8x4xf32>
    tpu.vector_store %arg7[%c0_6, %c16, %c0_7], %8 {strides = array<i32>} : memref<18x24x4xf32, #tpu.memory_space<vmem>>, vector<18x8x4xf32>,
    %cst_8 = arith.constant 0.000000e+00 : f32
    %10 = vector.broadcast %cst_8 : f32 to vector<24x8xf32>
    %c0_9 = arith.constant 0 : index
    %c0_10 = arith.constant 0 : index
    %c0_11 = arith.constant 0 : index
    %11 = vector.load %arg8[%c0_9, %c0_10, %c0_11] : memref<18x24x8xf32, #tpu.memory_space<vmem>>, vector<1x24x8xf32>
    %12 = vector.shape_cast %11 : vector<1x24x8xf32> to vector<24x8xf32>
    %13 = vector.shape_cast %10 : vector<24x8xf32> to vector<1x24x8xf32>
    tpu.vector_store %arg8[%c0_9, %c0_10, %c0_11], %13 {strides = array<i32>} : memref<18x24x8xf32, #tpu.memory_space<vmem>>, vector<1x24x8xf32>,
    %cst_12 = arith.constant 0.000000e+00 : f32
    %14 = vector.broadcast %cst_12 : f32 to vector<24x8xf32>
    %c17_13 = arith.constant 17 : index
    %c0_14 = arith.constant 0 : index
    %c0_15 = arith.constant 0 : index
    %15 = vector.load %arg8[%c17_13, %c0_14, %c0_15] : memref<18x24x8xf32, #tpu.memory_space<vmem>>, vector<1x24x8xf32>
    %16 = vector.shape_cast %15 : vector<1x24x8xf32> to vector<24x8xf32>
    %17 = vector.shape_cast %14 : vector<24x8xf32> to vector<1x24x8xf32>
    tpu.vector_store %arg8[%c17_13, %c0_14, %c0_15], %17 {strides = array<i32>} : memref<18x24x8xf32, #tpu.memory_space<vmem>>, vector<1x24x8xf32>,
    %cst_16 = arith.constant 0.000000e+00 : f32
    %18 = vector.broadcast %cst_16 : f32 to vector<18x8x8xf32>
    %c0_17 = arith.constant 0 : index
    %c16_18 = arith.constant 16 : index
    %c0_19 = arith.constant 0 : index
    %19 = vector.load %arg8[%c0_17, %c16_18, %c0_19] : memref<18x24x8xf32, #tpu.memory_space<vmem>>, vector<18x8x8xf32>
    tpu.vector_store %arg8[%c0_17, %c16_18, %c0_19], %18 {strides = array<i32>} : memref<18x24x8xf32, #tpu.memory_space<vmem>>, vector<18x8x8xf32>,
    %c0_20 = arith.constant 0 : index
    %c0_21 = arith.constant 0 : index
    %c0_22 = arith.constant 0 : index
    %c0_23 = arith.constant 0 : index
    %20 = vector.load %arg1[%c0_20, %c0_21, %c0_22, %c0_23] : memref<1x16x16x4xf32, #tpu.memory_space<vmem>>, vector<1x16x16x4xf32>
    %21 = vector.shape_cast %20 : vector<1x16x16x4xf32> to vector<16x16x4xf32>
    %c1 = arith.constant 1 : index
    %c0_24 = arith.constant 0 : index
    %c0_25 = arith.constant 0 : index
    %22 = vector.load %arg7[%c1, %c0_24, %c0_25] : memref<18x24x4xf32, #tpu.memory_space<vmem>>, vector<16x16x4xf32>
    tpu.vector_store %arg7[%c1, %c0_24, %c0_25], %21 {strides = array<i32>} : memref<18x24x4xf32, #tpu.memory_space<vmem>>, vector<16x16x4xf32>,
    %c0_26 = arith.constant 0 : index
    %c0_27 = arith.constant 0 : index
    %c0_28 = arith.constant 0 : index
    %23 = vector.load %arg7[%c0_26, %c0_27, %c0_28] : memref<18x24x4xf32, #tpu.memory_space<vmem>>, vector<18x24x4xf32>
    %cst_29 = arith.constant 0.000000e+00 : f32
    %24 = vector.broadcast %cst_29 : f32 to vector<256x8xf32>
    %c1_i32 = arith.constant 1 : i32
    %25 = tpu.dynamic_rotate %23 by %c1_i32 dim 1 : vector<18x24x4xf32>, i32 -> vector<18x24x4xf32>
    %26 = vector.extract_strided_slice %25 {offsets = [0, 0, 0], sizes = [18, 16, 4], strides = [1, 1, 1]} : vector<18x24x4xf32> to vector<18x16x4xf32>
    %27 = vector.extract_strided_slice %26 {offsets = [0, 0, 0], sizes = [16, 16, 4], strides = [1, 1, 1]} : vector<18x16x4xf32> to vector<16x16x4xf32>
    %28 = vector.shape_cast %27 : vector<16x16x4xf32> to vector<256x4xf32>
    %c0_30 = arith.constant 0 : index
    %c0_31 = arith.constant 0 : index
    %c0_32 = arith.constant 0 : index
    %c0_33 = arith.constant 0 : index
    %29 = vector.load %arg2[%c0_30, %c0_31, %c0_32, %c0_33] : memref<3x3x4x8xf32, #tpu.memory_space<vmem>>, vector<1x1x4x8xf32>
    %30 = vector.shape_cast %29 : vector<1x1x4x8xf32> to vector<4x8xf32>
    %cst_34 = arith.constant dense<0.000000e+00> : vector<256x8xf32>
    %31 = tpu.matmul %28, %30, %cst_34 {dimension_numbers = #tpu.dot_dimension_numbers<[1], [0], [0], [1], [0, 0, 1, 1], [], []>} : vector<256x4xf32>, vector<4x8xf32>, vector<256x8xf32> -> vector<256x8xf32>
    %32 = arith.addf %24, %31 : vector<256x8xf32>
    %33 = vector.extract_strided_slice %26 {offsets = [1, 0, 0], sizes = [16, 16, 4], strides = [1, 1, 1]} : vector<18x16x4xf32> to vector<16x16x4xf32>
    %34 = vector.shape_cast %33 : vector<16x16x4xf32> to vector<256x4xf32>
    %c1_35 = arith.constant 1 : index
    %c0_36 = arith.constant 0 : index
    %c0_37 = arith.constant 0 : index
    %c0_38 = arith.constant 0 : index
    %35 = vector.load %arg2[%c1_35, %c0_36, %c0_37, %c0_38] : memref<3x3x4x8xf32, #tpu.memory_space<vmem>>, vector<1x1x4x8xf32>
    %36 = vector.shape_cast %35 : vector<1x1x4x8xf32> to vector<4x8xf32>
    %cst_39 = arith.constant dense<0.000000e+00> : vector<256x8xf32>
    %37 = tpu.matmul %34, %36, %cst_39 {dimension_numbers = #tpu.dot_dimension_numbers<[1], [0], [0], [1], [0, 0, 1, 1], [], []>} : vector<256x4xf32>, vector<4x8xf32>, vector<256x8xf32> -> vector<256x8xf32>
    %38 = arith.addf %32, %37 : vector<256x8xf32>
    %39 = vector.extract_strided_slice %26 {offsets = [2, 0, 0], sizes = [16, 16, 4], strides = [1, 1, 1]} : vector<18x16x4xf32> to vector<16x16x4xf32>
    %40 = vector.shape_cast %39 : vector<16x16x4xf32> to vector<256x4xf32>
    %c2 = arith.constant 2 : index
    %c0_40 = arith.constant 0 : index
    %c0_41 = arith.constant 0 : index
    %c0_42 = arith.constant 0 : index
    %41 = vector.load %arg2[%c2, %c0_40, %c0_41, %c0_42] : memref<3x3x4x8xf32, #tpu.memory_space<vmem>>, vector<1x1x4x8xf32>
    %42 = vector.shape_cast %41 : vector<1x1x4x8xf32> to vector<4x8xf32>
    %cst_43 = arith.constant dense<0.000000e+00> : vector<256x8xf32>
    %43 = tpu.matmul %40, %42, %cst_43 {dimension_numbers = #tpu.dot_dimension_numbers<[1], [0], [0], [1], [0, 0, 1, 1], [], []>} : vector<256x4xf32>, vector<4x8xf32>, vector<256x8xf32> -> vector<256x8xf32>
    %44 = arith.addf %38, %43 : vector<256x8xf32>
    %45 = vector.extract_strided_slice %23 {offsets = [0, 0, 0], sizes = [18, 16, 4], strides = [1, 1, 1]} : vector<18x24x4xf32> to vector<18x16x4xf32>
    %46 = vector.extract_strided_slice %45 {offsets = [0, 0, 0], sizes = [16, 16, 4], strides = [1, 1, 1]} : vector<18x16x4xf32> to vector<16x16x4xf32>
    %47 = vector.shape_cast %46 : vector<16x16x4xf32> to vector<256x4xf32>
    %c0_44 = arith.constant 0 : index
    %c1_45 = arith.constant 1 : index
    %c0_46 = arith.constant 0 : index
    %c0_47 = arith.constant 0 : index
    %48 = vector.load %arg2[%c0_44, %c1_45, %c0_46, %c0_47] : memref<3x3x4x8xf32, #tpu.memory_space<vmem>>, vector<1x1x4x8xf32>
    %49 = vector.shape_cast %48 : vector<1x1x4x8xf32> to vector<4x8xf32>
    %cst_48 = arith.constant dense<0.000000e+00> : vector<256x8xf32>
    %50 = tpu.matmul %47, %49, %cst_48 {dimension_numbers = #tpu.dot_dimension_numbers<[1], [0], [0], [1], [0, 0, 1, 1], [], []>} : vector<256x4xf32>, vector<4x8xf32>, vector<256x8xf32> -> vector<256x8xf32>
    %51 = arith.addf %44, %50 : vector<256x8xf32>
    %52 = vector.extract_strided_slice %45 {offsets = [1, 0, 0], sizes = [16, 16, 4], strides = [1, 1, 1]} : vector<18x16x4xf32> to vector<16x16x4xf32>
    %53 = vector.shape_cast %52 : vector<16x16x4xf32> to vector<256x4xf32>
    %c1_49 = arith.constant 1 : index
    %c1_50 = arith.constant 1 : index
    %c0_51 = arith.constant 0 : index
    %c0_52 = arith.constant 0 : index
    %54 = vector.load %arg2[%c1_49, %c1_50, %c0_51, %c0_52] : memref<3x3x4x8xf32, #tpu.memory_space<vmem>>, vector<1x1x4x8xf32>
    %55 = vector.shape_cast %54 : vector<1x1x4x8xf32> to vector<4x8xf32>
    %cst_53 = arith.constant dense<0.000000e+00> : vector<256x8xf32>
    %56 = tpu.matmul %53, %55, %cst_53 {dimension_numbers = #tpu.dot_dimension_numbers<[1], [0], [0], [1], [0, 0, 1, 1], [], []>} : vector<256x4xf32>, vector<4x8xf32>, vector<256x8xf32> -> vector<256x8xf32>
    %57 = arith.addf %51, %56 : vector<256x8xf32>
    %58 = vector.extract_strided_slice %45 {offsets = [2, 0, 0], sizes = [16, 16, 4], strides = [1, 1, 1]} : vector<18x16x4xf32> to vector<16x16x4xf32>
    %59 = vector.shape_cast %58 : vector<16x16x4xf32> to vector<256x4xf32>
    %c2_54 = arith.constant 2 : index
    %c1_55 = arith.constant 1 : index
    %c0_56 = arith.constant 0 : index
    %c0_57 = arith.constant 0 : index
    %60 = vector.load %arg2[%c2_54, %c1_55, %c0_56, %c0_57] : memref<3x3x4x8xf32, #tpu.memory_space<vmem>>, vector<1x1x4x8xf32>
    %61 = vector.shape_cast %60 : vector<1x1x4x8xf32> to vector<4x8xf32>
    %cst_58 = arith.constant dense<0.000000e+00> : vector<256x8xf32>
    %62 = tpu.matmul %59, %61, %cst_58 {dimension_numbers = #tpu.dot_dimension_numbers<[1], [0], [0], [1], [0, 0, 1, 1], [], []>} : vector<256x4xf32>, vector<4x8xf32>, vector<256x8xf32> -> vector<256x8xf32>
    %63 = arith.addf %57, %62 : vector<256x8xf32>
    %c23_i32 = arith.constant 23 : i32
    %64 = tpu.dynamic_rotate %23 by %c23_i32 dim 1 : vector<18x24x4xf32>, i32 -> vector<18x24x4xf32>
    %65 = vector.extract_strided_slice %64 {offsets = [0, 0, 0], sizes = [18, 16, 4], strides = [1, 1, 1]} : vector<18x24x4xf32> to vector<18x16x4xf32>
    %66 = vector.extract_strided_slice %65 {offsets = [0, 0, 0], sizes = [16, 16, 4], strides = [1, 1, 1]} : vector<18x16x4xf32> to vector<16x16x4xf32>
    %67 = vector.shape_cast %66 : vector<16x16x4xf32> to vector<256x4xf32>
    %c0_59 = arith.constant 0 : index
    %c2_60 = arith.constant 2 : index
    %c0_61 = arith.constant 0 : index
    %c0_62 = arith.constant 0 : index
    %68 = vector.load %arg2[%c0_59, %c2_60, %c0_61, %c0_62] : memref<3x3x4x8xf32, #tpu.memory_space<vmem>>, vector<1x1x4x8xf32>
    %69 = vector.shape_cast %68 : vector<1x1x4x8xf32> to vector<4x8xf32>
    %cst_63 = arith.constant dense<0.000000e+00> : vector<256x8xf32>
    %70 = tpu.matmul %67, %69, %cst_63 {dimension_numbers = #tpu.dot_dimension_numbers<[1], [0], [0], [1], [0, 0, 1, 1], [], []>} : vector<256x4xf32>, vector<4x8xf32>, vector<256x8xf32> -> vector<256x8xf32>
    %71 = arith.addf %63, %70 : vector<256x8xf32>
    %72 = vector.extract_strided_slice %65 {offsets = [1, 0, 0], sizes = [16, 16, 4], strides = [1, 1, 1]} : vector<18x16x4xf32> to vector<16x16x4xf32>
    %73 = vector.shape_cast %72 : vector<16x16x4xf32> to vector<256x4xf32>
    %c1_64 = arith.constant 1 : index
    %c2_65 = arith.constant 2 : index
    %c0_66 = arith.constant 0 : index
    %c0_67 = arith.constant 0 : index
    %74 = vector.load %arg2[%c1_64, %c2_65, %c0_66, %c0_67] : memref<3x3x4x8xf32, #tpu.memory_space<vmem>>, vector<1x1x4x8xf32>
    %75 = vector.shape_cast %74 : vector<1x1x4x8xf32> to vector<4x8xf32>
    %cst_68 = arith.constant dense<0.000000e+00> : vector<256x8xf32>
    %76 = tpu.matmul %73, %75, %cst_68 {dimension_numbers = #tpu.dot_dimension_numbers<[1], [0], [0], [1], [0, 0, 1, 1], [], []>} : vector<256x4xf32>, vector<4x8xf32>, vector<256x8xf32> -> vector<256x8xf32>
    %77 = arith.addf %71, %76 : vector<256x8xf32>
    %78 = vector.extract_strided_slice %65 {offsets = [2, 0, 0], sizes = [16, 16, 4], strides = [1, 1, 1]} : vector<18x16x4xf32> to vector<16x16x4xf32>
    %79 = vector.shape_cast %78 : vector<16x16x4xf32> to vector<256x4xf32>
    %c2_69 = arith.constant 2 : index
    %c2_70 = arith.constant 2 : index
    %c0_71 = arith.constant 0 : index
    %c0_72 = arith.constant 0 : index
    %80 = vector.load %arg2[%c2_69, %c2_70, %c0_71, %c0_72] : memref<3x3x4x8xf32, #tpu.memory_space<vmem>>, vector<1x1x4x8xf32>
    %81 = vector.shape_cast %80 : vector<1x1x4x8xf32> to vector<4x8xf32>
    %cst_73 = arith.constant dense<0.000000e+00> : vector<256x8xf32>
    %82 = tpu.matmul %79, %81, %cst_73 {dimension_numbers = #tpu.dot_dimension_numbers<[1], [0], [0], [1], [0, 0, 1, 1], [], []>} : vector<256x4xf32>, vector<4x8xf32>, vector<256x8xf32> -> vector<256x8xf32>
    %83 = arith.addf %77, %82 : vector<256x8xf32>
    %c0_74 = arith.constant 0 : index
    %c0_75 = arith.constant 0 : index
    %84 = vector.load %arg3[%c0_74, %c0_75] : memref<1x8xf32, #tpu.memory_space<vmem>>, vector<1x8xf32>
    %85 = vector.broadcast %84 : vector<1x8xf32> to vector<256x8xf32>
    %86 = arith.addf %83, %85 : vector<256x8xf32>
    %cst_76 = arith.constant 0.000000e+00 : f32
    %87 = vector.broadcast %cst_76 : f32 to vector<256x8xf32>
    %88 = arith.maximumf %86, %87 : vector<256x8xf32>
    %89 = vector.shape_cast %88 : vector<256x8xf32> to vector<16x16x8xf32>
    %c1_77 = arith.constant 1 : index
    %c0_78 = arith.constant 0 : index
    %c0_79 = arith.constant 0 : index
    %90 = vector.load %arg8[%c1_77, %c0_78, %c0_79] : memref<18x24x8xf32, #tpu.memory_space<vmem>>, vector<16x16x8xf32>
    tpu.vector_store %arg8[%c1_77, %c0_78, %c0_79], %89 {strides = array<i32>} : memref<18x24x8xf32, #tpu.memory_space<vmem>>, vector<16x16x8xf32>,
    %c0_80 = arith.constant 0 : index
    %c0_81 = arith.constant 0 : index
    %c0_82 = arith.constant 0 : index
    %91 = vector.load %arg8[%c0_80, %c0_81, %c0_82] : memref<18x24x8xf32, #tpu.memory_space<vmem>>, vector<18x24x8xf32>
    %cst_83 = arith.constant 0.000000e+00 : f32
    %92 = vector.broadcast %cst_83 : f32 to vector<256x8xf32>
    %c1_i32_84 = arith.constant 1 : i32
    %93 = tpu.dynamic_rotate %91 by %c1_i32_84 dim 1 : vector<18x24x8xf32>, i32 -> vector<18x24x8xf32>
    %94 = vector.extract_strided_slice %93 {offsets = [0, 0, 0], sizes = [18, 16, 8], strides = [1, 1, 1]} : vector<18x24x8xf32> to vector<18x16x8xf32>
    %95 = vector.extract_strided_slice %94 {offsets = [0, 0, 0], sizes = [16, 16, 8], strides = [1, 1, 1]} : vector<18x16x8xf32> to vector<16x16x8xf32>
    %96 = vector.shape_cast %95 : vector<16x16x8xf32> to vector<256x8xf32>
    %c0_85 = arith.constant 0 : index
    %c0_86 = arith.constant 0 : index
    %c0_87 = arith.constant 0 : index
    %c0_88 = arith.constant 0 : index
    %97 = vector.load %arg4[%c0_85, %c0_86, %c0_87, %c0_88] : memref<3x3x8x8xf32, #tpu.memory_space<vmem>>, vector<1x1x8x8xf32>
    %98 = vector.shape_cast %97 : vector<1x1x8x8xf32> to vector<8x8xf32>
    %cst_89 = arith.constant dense<0.000000e+00> : vector<256x8xf32>
    %99 = tpu.matmul %96, %98, %cst_89 {dimension_numbers = #tpu.dot_dimension_numbers<[1], [0], [0], [1], [0, 0, 1, 1], [], []>} : vector<256x8xf32>, vector<8x8xf32>, vector<256x8xf32> -> vector<256x8xf32>
    %100 = arith.addf %92, %99 : vector<256x8xf32>
    %101 = vector.extract_strided_slice %94 {offsets = [1, 0, 0], sizes = [16, 16, 8], strides = [1, 1, 1]} : vector<18x16x8xf32> to vector<16x16x8xf32>
    %102 = vector.shape_cast %101 : vector<16x16x8xf32> to vector<256x8xf32>
    %c1_90 = arith.constant 1 : index
    %c0_91 = arith.constant 0 : index
    %c0_92 = arith.constant 0 : index
    %c0_93 = arith.constant 0 : index
    %103 = vector.load %arg4[%c1_90, %c0_91, %c0_92, %c0_93] : memref<3x3x8x8xf32, #tpu.memory_space<vmem>>, vector<1x1x8x8xf32>
    %104 = vector.shape_cast %103 : vector<1x1x8x8xf32> to vector<8x8xf32>
    %cst_94 = arith.constant dense<0.000000e+00> : vector<256x8xf32>
    %105 = tpu.matmul %102, %104, %cst_94 {dimension_numbers = #tpu.dot_dimension_numbers<[1], [0], [0], [1], [0, 0, 1, 1], [], []>} : vector<256x8xf32>, vector<8x8xf32>, vector<256x8xf32> -> vector<256x8xf32>
    %106 = arith.addf %100, %105 : vector<256x8xf32>
    %107 = vector.extract_strided_slice %94 {offsets = [2, 0, 0], sizes = [16, 16, 8], strides = [1, 1, 1]} : vector<18x16x8xf32> to vector<16x16x8xf32>
    %108 = vector.shape_cast %107 : vector<16x16x8xf32> to vector<256x8xf32>
    %c2_95 = arith.constant 2 : index
    %c0_96 = arith.constant 0 : index
    %c0_97 = arith.constant 0 : index
    %c0_98 = arith.constant 0 : index
    %109 = vector.load %arg4[%c2_95, %c0_96, %c0_97, %c0_98] : memref<3x3x8x8xf32, #tpu.memory_space<vmem>>, vector<1x1x8x8xf32>
    %110 = vector.shape_cast %109 : vector<1x1x8x8xf32> to vector<8x8xf32>
    %cst_99 = arith.constant dense<0.000000e+00> : vector<256x8xf32>
    %111 = tpu.matmul %108, %110, %cst_99 {dimension_numbers = #tpu.dot_dimension_numbers<[1], [0], [0], [1], [0, 0, 1, 1], [], []>} : vector<256x8xf32>, vector<8x8xf32>, vector<256x8xf32> -> vector<256x8xf32>
    %112 = arith.addf %106, %111 : vector<256x8xf32>
    %113 = vector.extract_strided_slice %91 {offsets = [0, 0, 0], sizes = [18, 16, 8], strides = [1, 1, 1]} : vector<18x24x8xf32> to vector<18x16x8xf32>
    %114 = vector.extract_strided_slice %113 {offsets = [0, 0, 0], sizes = [16, 16, 8], strides = [1, 1, 1]} : vector<18x16x8xf32> to vector<16x16x8xf32>
    %115 = vector.shape_cast %114 : vector<16x16x8xf32> to vector<256x8xf32>
    %c0_100 = arith.constant 0 : index
    %c1_101 = arith.constant 1 : index
    %c0_102 = arith.constant 0 : index
    %c0_103 = arith.constant 0 : index
    %116 = vector.load %arg4[%c0_100, %c1_101, %c0_102, %c0_103] : memref<3x3x8x8xf32, #tpu.memory_space<vmem>>, vector<1x1x8x8xf32>
    %117 = vector.shape_cast %116 : vector<1x1x8x8xf32> to vector<8x8xf32>
    %cst_104 = arith.constant dense<0.000000e+00> : vector<256x8xf32>
    %118 = tpu.matmul %115, %117, %cst_104 {dimension_numbers = #tpu.dot_dimension_numbers<[1], [0], [0], [1], [0, 0, 1, 1], [], []>} : vector<256x8xf32>, vector<8x8xf32>, vector<256x8xf32> -> vector<256x8xf32>
    %119 = arith.addf %112, %118 : vector<256x8xf32>
    %120 = vector.extract_strided_slice %113 {offsets = [1, 0, 0], sizes = [16, 16, 8], strides = [1, 1, 1]} : vector<18x16x8xf32> to vector<16x16x8xf32>
    %121 = vector.shape_cast %120 : vector<16x16x8xf32> to vector<256x8xf32>
    %c1_105 = arith.constant 1 : index
    %c1_106 = arith.constant 1 : index
    %c0_107 = arith.constant 0 : index
    %c0_108 = arith.constant 0 : index
    %122 = vector.load %arg4[%c1_105, %c1_106, %c0_107, %c0_108] : memref<3x3x8x8xf32, #tpu.memory_space<vmem>>, vector<1x1x8x8xf32>
    %123 = vector.shape_cast %122 : vector<1x1x8x8xf32> to vector<8x8xf32>
    %cst_109 = arith.constant dense<0.000000e+00> : vector<256x8xf32>
    %124 = tpu.matmul %121, %123, %cst_109 {dimension_numbers = #tpu.dot_dimension_numbers<[1], [0], [0], [1], [0, 0, 1, 1], [], []>} : vector<256x8xf32>, vector<8x8xf32>, vector<256x8xf32> -> vector<256x8xf32>
    %125 = arith.addf %119, %124 : vector<256x8xf32>
    %126 = vector.extract_strided_slice %113 {offsets = [2, 0, 0], sizes = [16, 16, 8], strides = [1, 1, 1]} : vector<18x16x8xf32> to vector<16x16x8xf32>
    %127 = vector.shape_cast %126 : vector<16x16x8xf32> to vector<256x8xf32>
    %c2_110 = arith.constant 2 : index
    %c1_111 = arith.constant 1 : index
    %c0_112 = arith.constant 0 : index
    %c0_113 = arith.constant 0 : index
    %128 = vector.load %arg4[%c2_110, %c1_111, %c0_112, %c0_113] : memref<3x3x8x8xf32, #tpu.memory_space<vmem>>, vector<1x1x8x8xf32>
    %129 = vector.shape_cast %128 : vector<1x1x8x8xf32> to vector<8x8xf32>
    %cst_114 = arith.constant dense<0.000000e+00> : vector<256x8xf32>
    %130 = tpu.matmul %127, %129, %cst_114 {dimension_numbers = #tpu.dot_dimension_numbers<[1], [0], [0], [1], [0, 0, 1, 1], [], []>} : vector<256x8xf32>, vector<8x8xf32>, vector<256x8xf32> -> vector<256x8xf32>
    %131 = arith.addf %125, %130 : vector<256x8xf32>
    %c23_i32_115 = arith.constant 23 : i32
    %132 = tpu.dynamic_rotate %91 by %c23_i32_115 dim 1 : vector<18x24x8xf32>, i32 -> vector<18x24x8xf32>
    %133 = vector.extract_strided_slice %132 {offsets = [0, 0, 0], sizes = [18, 16, 8], strides = [1, 1, 1]} : vector<18x24x8xf32> to vector<18x16x8xf32>
    %134 = vector.extract_strided_slice %133 {offsets = [0, 0, 0], sizes = [16, 16, 8], strides = [1, 1, 1]} : vector<18x16x8xf32> to vector<16x16x8xf32>
    %135 = vector.shape_cast %134 : vector<16x16x8xf32> to vector<256x8xf32>
    %c0_116 = arith.constant 0 : index
    %c2_117 = arith.constant 2 : index
    %c0_118 = arith.constant 0 : index
    %c0_119 = arith.constant 0 : index
    %136 = vector.load %arg4[%c0_116, %c2_117, %c0_118, %c0_119] : memref<3x3x8x8xf32, #tpu.memory_space<vmem>>, vector<1x1x8x8xf32>
    %137 = vector.shape_cast %136 : vector<1x1x8x8xf32> to vector<8x8xf32>
    %cst_120 = arith.constant dense<0.000000e+00> : vector<256x8xf32>
    %138 = tpu.matmul %135, %137, %cst_120 {dimension_numbers = #tpu.dot_dimension_numbers<[1], [0], [0], [1], [0, 0, 1, 1], [], []>} : vector<256x8xf32>, vector<8x8xf32>, vector<256x8xf32> -> vector<256x8xf32>
    %139 = arith.addf %131, %138 : vector<256x8xf32>
    %140 = vector.extract_strided_slice %133 {offsets = [1, 0, 0], sizes = [16, 16, 8], strides = [1, 1, 1]} : vector<18x16x8xf32> to vector<16x16x8xf32>
    %141 = vector.shape_cast %140 : vector<16x16x8xf32> to vector<256x8xf32>
    %c1_121 = arith.constant 1 : index
    %c2_122 = arith.constant 2 : index
    %c0_123 = arith.constant 0 : index
    %c0_124 = arith.constant 0 : index
    %142 = vector.load %arg4[%c1_121, %c2_122, %c0_123, %c0_124] : memref<3x3x8x8xf32, #tpu.memory_space<vmem>>, vector<1x1x8x8xf32>
    %143 = vector.shape_cast %142 : vector<1x1x8x8xf32> to vector<8x8xf32>
    %cst_125 = arith.constant dense<0.000000e+00> : vector<256x8xf32>
    %144 = tpu.matmul %141, %143, %cst_125 {dimension_numbers = #tpu.dot_dimension_numbers<[1], [0], [0], [1], [0, 0, 1, 1], [], []>} : vector<256x8xf32>, vector<8x8xf32>, vector<256x8xf32> -> vector<256x8xf32>
    %145 = arith.addf %139, %144 : vector<256x8xf32>
    %146 = vector.extract_strided_slice %133 {offsets = [2, 0, 0], sizes = [16, 16, 8], strides = [1, 1, 1]} : vector<18x16x8xf32> to vector<16x16x8xf32>
    %147 = vector.shape_cast %146 : vector<16x16x8xf32> to vector<256x8xf32>
    %c2_126 = arith.constant 2 : index
    %c2_127 = arith.constant 2 : index
    %c0_128 = arith.constant 0 : index
    %c0_129 = arith.constant 0 : index
    %148 = vector.load %arg4[%c2_126, %c2_127, %c0_128, %c0_129] : memref<3x3x8x8xf32, #tpu.memory_space<vmem>>, vector<1x1x8x8xf32>
    %149 = vector.shape_cast %148 : vector<1x1x8x8xf32> to vector<8x8xf32>
    %cst_130 = arith.constant dense<0.000000e+00> : vector<256x8xf32>
    %150 = tpu.matmul %147, %149, %cst_130 {dimension_numbers = #tpu.dot_dimension_numbers<[1], [0], [0], [1], [0, 0, 1, 1], [], []>} : vector<256x8xf32>, vector<8x8xf32>, vector<256x8xf32> -> vector<256x8xf32>
    %151 = arith.addf %145, %150 : vector<256x8xf32>
    %c0_131 = arith.constant 0 : index
    %c0_132 = arith.constant 0 : index
    %152 = vector.load %arg5[%c0_131, %c0_132] : memref<1x8xf32, #tpu.memory_space<vmem>>, vector<1x8xf32>
    %153 = vector.broadcast %152 : vector<1x8xf32> to vector<256x8xf32>
    %154 = arith.addf %151, %153 : vector<256x8xf32>
    %cst_133 = arith.constant 0.000000e+00 : f32
    %155 = vector.broadcast %cst_133 : f32 to vector<256x8xf32>
    %156 = arith.maximumf %154, %155 : vector<256x8xf32>
    %157 = tpu.transpose %156, [1, 0] : vector<256x8xf32> -> vector<8x256xf32>
    %c0_134 = arith.constant 0 : index
    %c0_135 = arith.constant 0 : index
    %c0_136 = arith.constant 0 : index
    %158 = vector.load %arg6[%c0_134, %c0_135, %c0_136] : memref<1x8x256xf32, #tpu.memory_space<vmem>>, vector<1x8x256xf32>
    %159 = vector.shape_cast %158 : vector<1x8x256xf32> to vector<8x256xf32>
    %160 = vector.shape_cast %157 : vector<8x256xf32> to vector<1x8x256xf32>
    tpu.vector_store %arg6[%c0_134, %c0_135, %c0_136], %160 {strides = array<i32>} : memref<1x8x256xf32, #tpu.memory_space<vmem>>, vector<1x8x256xf32>,
    return
  }
  func.func @transform_0(%arg0: i32) -> (i32, i32, i32, i32) {
    %c0_i32 = arith.constant 0 : i32
    %c0_i32_0 = arith.constant 0 : i32
    %c0_i32_1 = arith.constant 0 : i32
    %c0_i32_2 = arith.constant 0 : i32
    return %arg0, %c0_i32, %c0_i32_0, %c0_i32_1 : i32, i32, i32, i32
  }
  func.func @transform_1(%arg0: i32) -> (i32, i32, i32, i32) {
    %c0_i32 = arith.constant 0 : i32
    %c0_i32_0 = arith.constant 0 : i32
    %c0_i32_1 = arith.constant 0 : i32
    %c0_i32_2 = arith.constant 0 : i32
    %c0_i32_3 = arith.constant 0 : i32
    return %c0_i32, %c0_i32_0, %c0_i32_1, %c0_i32_2 : i32, i32, i32, i32
  }
  func.func @transform_2(%arg0: i32) -> (i32, i32) {
    %c0_i32 = arith.constant 0 : i32
    %c0_i32_0 = arith.constant 0 : i32
    %c0_i32_1 = arith.constant 0 : i32
    return %c0_i32, %c0_i32_0 : i32, i32
  }
  func.func @transform_3(%arg0: i32) -> (i32, i32, i32, i32) {
    %c0_i32 = arith.constant 0 : i32
    %c0_i32_0 = arith.constant 0 : i32
    %c0_i32_1 = arith.constant 0 : i32
    %c0_i32_2 = arith.constant 0 : i32
    %c0_i32_3 = arith.constant 0 : i32
    return %c0_i32, %c0_i32_0, %c0_i32_1, %c0_i32_2 : i32, i32, i32, i32
  }
  func.func @transform_4(%arg0: i32) -> (i32, i32) {
    %c0_i32 = arith.constant 0 : i32
    %c0_i32_0 = arith.constant 0 : i32
    %c0_i32_1 = arith.constant 0 : i32
    return %c0_i32, %c0_i32_0 : i32, i32
  }
  func.func @transform_5(%arg0: i32) -> (i32, i32, i32) {
    %c0_i32 = arith.constant 0 : i32
    %c0_i32_0 = arith.constant 0 : i32
    %c0_i32_1 = arith.constant 0 : i32
    return %arg0, %c0_i32, %c0_i32_0 : i32, i32, i32
  }
}

</mosaic_0001>

<llo_original>
// kernel: tpu_custom_call.1
$region0: #{tpu_custom_call.1}
  #allocation0 [shape = 'u32[]', space=smem, size = 0x4, offset = 0x4, fixed_abs, tag = 'smem constant byte address 0x4 - core index']
  #allocation1 [shape = 'u32[72,128]{1,0:T(1,128)}', space=vmem, size = 0x9000, scoped, tag = 'internal scratch']
  #allocation2 [shape = 'f32[18,24,4]{2,1,0:T(8,128)}', space=vmem, size = 0x36000, scoped, tag = 'scratch operand']
  #allocation3 [shape = 'f32[18,24,8]{2,1,0:T(8,128)}', space=vmem, size = 0x36000, scoped, tag = 'scratch operand']
  %s0 = inlined_call_operand.vmem [shape: f32[2,16,16,4], index: 0, kind: input, shape index: {}]
  %s1 = inlined_call_operand.vmem [shape: f32[3,3,4,8], index: 1, kind: input, shape index: {}]
  %s2 = inlined_call_operand.vmem [shape: f32[1,8], index: 2, kind: input, shape index: {}]
  %s3 = inlined_call_operand.vmem [shape: f32[3,3,8,8], index: 3, kind: input, shape index: {}]
  %s4 = inlined_call_operand.vmem [shape: f32[1,8], index: 4, kind: input, shape index: {}]
  %s5 = inlined_call_operand.hbm [shape: f32[2,8,256], index: 5, kind: output, shape index: {}]
  %s6 = sld [smem:[#allocation0]]
  $region53: #{tpu_custom_call.1} parent=0
    _
  %s8 = ssub.s32 1, %s6
  %s9 = scalar_select 0, %s8, %s6
  $region1: #{tpu_custom_call.1} parent=0
    #allocation4 [shape = 'u8[16384]{0}', space=vmem, size = 0x4000, scoped, tag = 'output window, operand 0']
    #allocation5 [shape = 's32[2]{0}', space=sflag, size = 0x8, scoped, tag = 'scoped memory for tpu_custom_call.1']
    %10 = vsyncpa [#allocation5], 0
    %s11 = scalar_lea.sflag [#allocation5], 1
    %12 = vsyncpa %s11, 0
    loop: start=0, step=1, limit=4
    $region2: #{tpu_custom_call.1} parent=1 // loop_pre_header
      _
    $region3: #{tpu_custom_call.1} parent=1 // loop_header
      %s14 = sphi 0, %s18
      %p15 = scmp.ge.s32.totalorder %s14, 4
      %s24 = sphi 0, %s26
      %s27 = sphi 0, %s24
      %s28 = sphi 0, %s27
      %s44 = sphi 0, %s28
      %s48 = sphi 0, %s48
      %s50 = sphi 0, %s48
      %s51 = sphi 0, %s50
      %s65 = sphi 0, %s51
      %s69 = sphi 0, %s69
      %s71 = sphi 0, %s69
      %s72 = sphi 0, %s71
      %s86 = sphi 0, %s72
      %s90 = sphi 0, %s90
      %s92 = sphi 0, %s90
      %s93 = sphi 0, %s92
      %s107 = sphi 0, %s93
      %s111 = sphi 0, %s111
      %s113 = sphi 0, %s111
      %s114 = sphi 0, %s113
      %s128 = sphi 0, %s114
      %s134 = sphi 0, %s136
      %s137 = sphi 0, %s134
      %s138 = sphi 0, %s137
      %s154 = sphi 0, %s138
    $region4: #{tpu_custom_call.1} parent=1 // loop_header_branch
      %17 = sbr.rel (%p15) target = $region8
    $region5: #{tpu_custom_call.1} parent=1 // loop_body
      %s19 = ssub.s32 %s14, 1
      %s20 = ssub.s32 %s14, 2
      %s21 = sadd.s32 %s14, 1
      %s22 = ssub.s32 %s14, %s21
      %p23 = scmp.eq.s32.totalorder %s22, 0
      %s25 = sadd.s32 %s24, 1
      %s26 = scalar_select %p23, %s24, %s25
      %p29 = pneg %p23
      %p30 = scmp.eq.s32.totalorder %s14, 1
      %p31 = por %p29, %p30
      %p32 = scmp.ne.s32.totalorder %s24, %s27
      %p33 = scmp.eq.s32.totalorder %s14, 0
      %p34 = por %p32, %p33
      %p35 = scmp.ne.s32.totalorder %s24, %s27
      %p36 = scmp.eq.s32.totalorder %s19, 1
      %p37 = por %p35, %p36
      %p38 = scmp.ne.s32.totalorder %s27, %s28
      %p39 = scmp.eq.s32.totalorder %s19, 0
      %p40 = por %p38, %p39
      %p41 = scmp.ne.s32.totalorder %s27, %s28
      %p42 = scmp.eq.s32.totalorder %s20, 1
      %p43 = por %p41, %p42
      %p45 = scmp.ne.s32.totalorder %s28, %s44
      %p46 = scmp.eq.s32.totalorder %s20, 0
      %p47 = por %p45, %p46
      %s49 = sadd.s32 %s48, 1
      %p52 = scmp.eq.s32.totalorder %s14, 1
      %p53 = scmp.ne.s32.totalorder %s48, %s50
      %p54 = scmp.eq.s32.totalorder %s14, 0
      %p55 = por %p53, %p54
      %p56 = scmp.ne.s32.totalorder %s48, %s50
      %p57 = scmp.eq.s32.totalorder %s19, 1
      %p58 = por %p56, %p57
      %p59 = scmp.ne.s32.totalorder %s50, %s51
      %p60 = scmp.eq.s32.totalorder %s19, 0
      %p61 = por %p59, %p60
      %p62 = scmp.ne.s32.totalorder %s50, %s51
      %p63 = scmp.eq.s32.totalorder %s20, 1
      %p64 = por %p62, %p63
      %p66 = scmp.ne.s32.totalorder %s51, %s65
      %p67 = scmp.eq.s32.totalorder %s20, 0
      %p68 = por %p66, %p67
      %s70 = sadd.s32 %s69, 1
      %p73 = scmp.eq.s32.totalorder %s14, 1
      %p74 = scmp.ne.s32.totalorder %s69, %s71
      %p75 = scmp.eq.s32.totalorder %s14, 0
      %p76 = por %p74, %p75
      %p77 = scmp.ne.s32.totalorder %s69, %s71
      %p78 = scmp.eq.s32.totalorder %s19, 1
      %p79 = por %p77, %p78
      %p80 = scmp.ne.s32.totalorder %s71, %s72
      %p81 = scmp.eq.s32.totalorder %s19, 0
      %p82 = por %p80, %p81
      %p83 = scmp.ne.s32.totalorder %s71, %s72
      %p84 = scmp.eq.s32.totalorder %s20, 1
      %p85 = por %p83, %p84
      %p87 = scmp.ne.s32.totalorder %s72, %s86
      %p88 = scmp.eq.s32.totalorder %s20, 0
      %p89 = por %p87, %p88
      %s91 = sadd.s32 %s90, 1
      %p94 = scmp.eq.s32.totalorder %s14, 1
      %p95 = scmp.ne.s32.totalorder %s90, %s92
      %p96 = scmp.eq.s32.totalorder %s14, 0
      %p97 = por %p95, %p96
      %p98 = scmp.ne.s32.totalorder %s90, %s92
      %p99 = scmp.eq.s32.totalorder %s19, 1
      %p100 = por %p98, %p99
      %p101 = scmp.ne.s32.totalorder %s92, %s93
      %p102 = scmp.eq.s32.totalorder %s19, 0
      %p103 = por %p101, %p102
      %p104 = scmp.ne.s32.totalorder %s92, %s93
      %p105 = scmp.eq.s32.totalorder %s20, 1
      %p106 = por %p104, %p105
      %p108 = scmp.ne.s32.totalorder %s93, %s107
      %p109 = scmp.eq.s32.totalorder %s20, 0
      %p110 = por %p108, %p109
      %s112 = sadd.s32 %s111, 1
      %p115 = scmp.eq.s32.totalorder %s14, 1
      %p116 = scmp.ne.s32.totalorder %s111, %s113
      %p117 = scmp.eq.s32.totalorder %s14, 0
      %p118 = por %p116, %p117
      %p119 = scmp.ne.s32.totalorder %s111, %s113
      %p120 = scmp.eq.s32.totalorder %s19, 1
      %p121 = por %p119, %p120
      %p122 = scmp.ne.s32.totalorder %s113, %s114
      %p123 = scmp.eq.s32.totalorder %s19, 0
      %p124 = por %p122, %p123
      %p125 = scmp.ne.s32.totalorder %s113, %s114
      %p126 = scmp.eq.s32.totalorder %s20, 1
      %p127 = por %p125, %p126
      %p129 = scmp.ne.s32.totalorder %s114, %s128
      %p130 = scmp.eq.s32.totalorder %s20, 0
      %p131 = por %p129, %p130
      %s132 = ssub.s32 %s14, %s21
      %p133 = scmp.eq.s32.totalorder %s132, 0
      %s135 = sadd.s32 %s134, 1
      %s136 = scalar_select %p133, %s134, %s135
      %p139 = pneg %p133
      %p140 = scmp.eq.s32.totalorder %s14, 1
      %p141 = por %p139, %p140
      %p142 = scmp.ne.s32.totalorder %s134, %s137
      %p143 = scmp.eq.s32.totalorder %s14, 0
      %p144 = por %p142, %p143
      %p145 = scmp.ne.s32.totalorder %s134, %s137
      %p146 = scmp.eq.s32.totalorder %s19, 1
      %p147 = por %p145, %p146
      %p148 = scmp.ne.s32.totalorder %s137, %s138
      %p149 = scmp.eq.s32.totalorder %s19, 0
      %p150 = por %p148, %p149
      %p151 = scmp.ne.s32.totalorder %s137, %s138
      %p152 = scmp.eq.s32.totalorder %s20, 1
      %p153 = por %p151, %p152
      %p155 = scmp.ne.s32.totalorder %s138, %s154
      %p156 = scmp.eq.s32.totalorder %s20, 0
      %p157 = por %p155, %p156
      %p158 = scmp.le.s32.totalorder 1, %s14
      %p159 = scmp.lt.s32.totalorder %s14, 3
      %p160 = pnand %p158, %p159
      %p161 = pneg %p160
      // Predicated region
      $region9: #{tpu_custom_call.1} parent=5 // pred_check
        _
      $region10: #{tpu_custom_call.1} parent=5 // pred_check_branch
        %163 = sbr.rel (%p160) target = $region12
      $region11: #{tpu_custom_call.1} parent=5 // pred_region
        %s164 = ssub.s32 %s14, 1
        // Predicated region
        $region13: #{tpu_custom_call.1} parent=11 // pred_check
          %p165 = pneg %p61
        $region14: #{tpu_custom_call.1} parent=11 // pred_check_branch
          %167 = sbr.rel (%p165) target = $region16
        $region15: #{tpu_custom_call.1} parent=11 // pred_region
          _
        $region16: #{tpu_custom_call.1} parent=11 // pred_fallthru
          _
        // Predicated region
        $region17: #{tpu_custom_call.1} parent=11 // pred_check
          %p168 = pneg %p82
        $region18: #{tpu_custom_call.1} parent=11 // pred_check_branch
          %170 = sbr.rel (%p168) target = $region20
        $region19: #{tpu_custom_call.1} parent=11 // pred_region
          _
        $region20: #{tpu_custom_call.1} parent=11 // pred_fallthru
          _
        // Predicated region
        $region21: #{tpu_custom_call.1} parent=11 // pred_check
          %p171 = pneg %p103
        $region22: #{tpu_custom_call.1} parent=11 // pred_check_branch
          %173 = sbr.rel (%p171) target = $region24
        $region23: #{tpu_custom_call.1} parent=11 // pred_region
          _
        $region24: #{tpu_custom_call.1} parent=11 // pred_fallthru
          _
        // Predicated region
        $region25: #{tpu_custom_call.1} parent=11 // pred_check
          %p174 = pneg %p124
        $region26: #{tpu_custom_call.1} parent=11 // pred_check_branch
          %176 = sbr.rel (%p174) target = $region28
        $region27: #{tpu_custom_call.1} parent=11 // pred_region
          _
        $region28: #{tpu_custom_call.1} parent=11 // pred_fallthru
          _
      $region12: #{tpu_custom_call.1} parent=5 // pred_fallthru
        _
      %p177 = scmp.lt.s32.totalorder %s14, 2
      // Predicated region
      $region29: #{tpu_custom_call.1} parent=5 // pred_check
        %p178 = pneg %p177
      $region30: #{tpu_custom_call.1} parent=5 // pred_check_branch
        %180 = sbr.rel (%p178) target = $region32
      $region31: #{tpu_custom_call.1} parent=5 // pred_region
        // Predicated region
        $region33: #{tpu_custom_call.1} parent=31 // pred_check
          %p181 = pneg %p34
        $region34: #{tpu_custom_call.1} parent=31 // pred_check_branch
          %183 = sbr.rel (%p181) target = $region36
        $region35: #{tpu_custom_call.1} parent=31 // pred_region
          %p184 = scmp.lt.s32.totalorder %s14, 1
          %s185 = scalar_select %p184, %s14, 1
          %s186 = smul.addr %s185, 32
          %s187 = smul.addr %s186, 8
          %s188 = scalar_lea.vmem %s0, %s187
        $region36: #{tpu_custom_call.1} parent=31 // pred_fallthru
          _
      $region32: #{tpu_custom_call.1} parent=5 // pred_fallthru
        _
      %p189 = scmp.le.s32.totalorder 1, %s14
      %p190 = scmp.lt.s32.totalorder %s14, 3
      %p191 = pnand %p189, %p190
      %p192 = pneg %p191
      // Predicated region
      $region37: #{tpu_custom_call.1} parent=5 // pred_check
        _
      $region38: #{tpu_custom_call.1} parent=5 // pred_check_branch
        %194 = sbr.rel (%p191) target = $region40
      $region39: #{tpu_custom_call.1} parent=5 // pred_region
        %s195 = ssub.s32 %s14, 1
        %p196 = scmp.lt.s32.totalorder %s19, 1
        %s197 = scalar_select %p196, %s19, 1
        %s198 = smul.addr %s197, 32
        %s199 = smul.addr %s198, 8
        %s200 = scalar_lea.vmem %s0, %s199
        %p201 = pneg %p40
        %p202 = pneg %p37
        %p203 = pneg %p61
        %p204 = pneg %p58
        %p205 = pneg %p82
        %p206 = pneg %p79
        %p207 = pneg %p103
        %p208 = pneg %p100
        %p209 = pneg %p124
        %p210 = pneg %p121
        %p211 = pneg %p150
        %p212 = pneg %p147
        %s213 = sand.u32 %s137, 1
        %s214 = scalar_lea.sflag [#allocation5], %s213
        %s215 = sand.u32 %s137, 1
        %s216 = smul.addr %s215, 16
        %s217 = scalar_lea.vmem [#allocation4], %s216
        %p218 = scmp.lt.s32.totalorder %s19, 1
        %s219 = scalar_select %p218, %s19, 1
        %s220 = smul.addr %s219, 32
        %s221 = smul.addr %s220, 8
        %s222 = scalar_lea.vmem %s0, %s221
        %vm223 = vcmask 31744
        %224 = vst.msk [vmem:[#allocation2] sm:$0xff] %vm223, 0.0
        %225 = vst.msk [vmem:[#allocation2 + $0x8] sm:$0xff] %vm223, 0.0
        %226 = vst.msk [vmem:[#allocation2 + $0x10] sm:$0xff] %vm223, 0.0
        %s227 = scalar_lea.vmem [#allocation2], 408
        %228 = vst.msk [vmem:[%s227] sm:$0xff] %vm223, 0.0
        %229 = vst.msk [vmem:[%s227 + $0x8] sm:$0xff] %vm223, 0.0
        %230 = vst.msk [vmem:[%s227 + $0x10] sm:$0xff] %vm223, 0.0
        %231 = vst.msk [vmem:[#allocation2 + $0x10] sm:$0xff] %vm223, 0.0
        %232 = vst.msk [vmem:[#allocation2 + $0x28] sm:$0xff] %vm223, 0.0
        %233 = vst.msk [vmem:[#allocation2 + $0x40] sm:$0xff] %vm223, 0.0
        %234 = vst.msk [vmem:[#allocation2 + $0x58] sm:$0xff] %vm223, 0.0
        %235 = vst.msk [vmem:[#allocation2 + $0x70] sm:$0xff] %vm223, 0.0
        %236 = vst.msk [vmem:[#allocation2 + $0x88] sm:$0xff] %vm223, 0.0
        %237 = vst.msk [vmem:[#allocation2 + $0xa0] sm:$0xff] %vm223, 0.0
        %238 = vst.msk [vmem:[#allocation2 + $0xb8] sm:$0xff] %vm223, 0.0
        %239 = vst.msk [vmem:[#allocation2 + $0xd0] sm:$0xff] %vm223, 0.0
        %240 = vst.msk [vmem:[#allocation2 + $0xe8] sm:$0xff] %vm223, 0.0
        %241 = vst.msk [vmem:[#allocation2 + $0x100] sm:$0xff] %vm223, 0.0
        %242 = vst.msk [vmem:[#allocation2 + $0x118] sm:$0xff] %vm223, 0.0
        %243 = vst.msk [vmem:[#allocation2 + $0x130] sm:$0xff] %vm223, 0.0
        %244 = vst.msk [vmem:[#allocation2 + $0x148] sm:$0xff] %vm223, 0.0
        %245 = vst.msk [vmem:[#allocation2 + $0x160] sm:$0xff] %vm223, 0.0
        %246 = vst.msk [vmem:[#allocation2 + $0x178] sm:$0xff] %vm223, 0.0
        %247 = vst.msk [vmem:[#allocation2 + $0x190] sm:$0xff] %vm223, 0.0
        %248 = vst.msk [vmem:[#allocation2 + $0x1a8] sm:$0xff] %vm223, 0.0
        %vm249 = vcmask 64512
        %250 = vst.msk [vmem:[#allocation3] sm:$0xff] %vm249, 0.0
        %251 = vst.msk [vmem:[#allocation3 + $0x8] sm:$0xff] %vm249, 0.0
        %252 = vst.msk [vmem:[#allocation3 + $0x10] sm:$0xff] %vm249, 0.0
        %s253 = scalar_lea.vmem [#allocation3], 408
        %254 = vst.msk [vmem:[%s253] sm:$0xff] %vm249, 0.0
        %255 = vst.msk [vmem:[%s253 + $0x8] sm:$0xff] %vm249, 0.0
        %256 = vst.msk [vmem:[%s253 + $0x10] sm:$0xff] %vm249, 0.0
        %257 = vst.msk [vmem:[#allocation3 + $0x10] sm:$0xff] %vm249, 0.0
        %258 = vst.msk [vmem:[#allocation3 + $0x28] sm:$0xff] %vm249, 0.0
        %259 = vst.msk [vmem:[#allocation3 + $0x40] sm:$0xff] %vm249, 0.0
        %260 = vst.msk [vmem:[#allocation3 + $0x58] sm:$0xff] %vm249, 0.0
        %261 = vst.msk [vmem:[#allocation3 + $0x70] sm:$0xff] %vm249, 0.0
        %262 = vst.msk [vmem:[#allocation3 + $0x88] sm:$0xff] %vm249, 0.0
        %263 = vst.msk [vmem:[#allocation3 + $0xa0] sm:$0xff] %vm249, 0.0
        %264 = vst.msk [vmem:[#allocation3 + $0xb8] sm:$0xff] %vm249, 0.0
        %265 = vst.msk [vmem:[#allocation3 + $0xd0] sm:$0xff] %vm249, 0.0
        %266 = vst.msk [vmem:[#allocation3 + $0xe8] sm:$0xff] %vm249, 0.0
        %267 = vst.msk [vmem:[#allocation3 + $0x100] sm:$0xff] %vm249, 0.0
        %268 = vst.msk [vmem:[#allocation3 + $0x118] sm:$0xff] %vm249, 0.0
        %269 = vst.msk [vmem:[#allocation3 + $0x130] sm:$0xff] %vm249, 0.0
        %270 = vst.msk [vmem:[#allocation3 + $0x148] sm:$0xff] %vm249, 0.0
        %271 = vst.msk [vmem:[#allocation3 + $0x160] sm:$0xff] %vm249, 0.0
        %272 = vst.msk [vmem:[#allocation3 + $0x178] sm:$0xff] %vm249, 0.0
        %273 = vst.msk [vmem:[#allocation3 + $0x190] sm:$0xff] %vm249, 0.0
        %274 = vst.msk [vmem:[#allocation3 + $0x1a8] sm:$0xff] %vm249, 0.0
        %v275 = vld [vmem:[%s222] sm:$0xff]
        %v276 = vld [vmem:[%s222 + $0x8] sm:$0xff]
        %v277 = vld [vmem:[%s222 + $0x10] sm:$0xff]
        %v278 = vld [vmem:[%s222 + $0x18] sm:$0xff]
        %v279 = vld [vmem:[%s222 + $0x20] sm:$0xff]
        %v280 = vld [vmem:[%s222 + $0x28] sm:$0xff]
        %v281 = vld [vmem:[%s222 + $0x30] sm:$0xff]
        %v282 = vld [vmem:[%s222 + $0x38] sm:$0xff]
        %v283 = vld [vmem:[%s222 + $0x40] sm:$0xff]
        %v284 = vld [vmem:[%s222 + $0x48] sm:$0xff]
        %v285 = vld [vmem:[%s222 + $0x50] sm:$0xff]
        %v286 = vld [vmem:[%s222 + $0x58] sm:$0xff]
        %v287 = vld [vmem:[%s222 + $0x60] sm:$0xff]
        %v288 = vld [vmem:[%s222 + $0x68] sm:$0xff]
        %v289 = vld [vmem:[%s222 + $0x70] sm:$0xff]
        %v290 = vld [vmem:[%s222 + $0x78] sm:$0xff]
        %v291 = vld [vmem:[%s222 + $0x80] sm:$0xff]
        %v292 = vld [vmem:[%s222 + $0x88] sm:$0xff]
        %v293 = vld [vmem:[%s222 + $0x90] sm:$0xff]
        %v294 = vld [vmem:[%s222 + $0x98] sm:$0xff]
        %v295 = vld [vmem:[%s222 + $0xa0] sm:$0xff]
        %v296 = vld [vmem:[%s222 + $0xa8] sm:$0xff]
        %v297 = vld [vmem:[%s222 + $0xb0] sm:$0xff]
        %v298 = vld [vmem:[%s222 + $0xb8] sm:$0xff]
        %v299 = vld [vmem:[%s222 + $0xc0] sm:$0xff]
        %v300 = vld [vmem:[%s222 + $0xc8] sm:$0xff]
        %v301 = vld [vmem:[%s222 + $0xd0] sm:$0xff]
        %v302 = vld [vmem:[%s222 + $0xd8] sm:$0xff]
        %v303 = vld [vmem:[%s222 + $0xe0] sm:$0xff]
        %v304 = vld [vmem:[%s222 + $0xe8] sm:$0xff]
        %v305 = vld [vmem:[%s222 + $0xf0] sm:$0xff]
        %v306 = vld [vmem:[%s222 + $0xf8] sm:$0xff]
        %s307 = scalar_lea.vmem [#allocation2], 24
        %308 = vst.msk [vmem:[%s307] sm:$0xff] %vm223, %v275
        %309 = vst.msk [vmem:[%s307 + $0x8] sm:$0xff] %vm223, %v276
        %310 = vst.msk [vmem:[%s307 + $0x18] sm:$0xff] %vm223, %v277
        %311 = vst.msk [vmem:[%s307 + $0x20] sm:$0xff] %vm223, %v278
        %312 = vst.msk [vmem:[%s307 + $0x30] sm:$0xff] %vm223, %v279
        %313 = vst.msk [vmem:[%s307 + $0x38] sm:$0xff] %vm223, %v280
        %314 = vst.msk [vmem:[%s307 + $0x48] sm:$0xff] %vm223, %v281
        %315 = vst.msk [vmem:[%s307 + $0x50] sm:$0xff] %vm223, %v282
        %316 = vst.msk [vmem:[%s307 + $0x60] sm:$0xff] %vm223, %v283
        %317 = vst.msk [vmem:[%s307 + $0x68] sm:$0xff] %vm223, %v284
        %318 = vst.msk [vmem:[%s307 + $0x78] sm:$0xff] %vm223, %v285
        %319 = vst.msk [vmem:[%s307 + $0x80] sm:$0xff] %vm223, %v286
        %320 = vst.msk [vmem:[%s307 + $0x90] sm:$0xff] %vm223, %v287
        %321 = vst.msk [vmem:[%s307 + $0x98] sm:$0xff] %vm223, %v288
        %322 = vst.msk [vmem:[%s307 + $0xa8] sm:$0xff] %vm223, %v289
        %323 = vst.msk [vmem:[%s307 + $0xb0] sm:$0xff] %vm223, %v290
        %324 = vst.msk [vmem:[%s307 + $0xc0] sm:$0xff] %vm223, %v291
        %325 = vst.msk [vmem:[%s307 + $0xc8] sm:$0xff] %vm223, %v292
        %326 = vst.msk [vmem:[%s307 + $0xd8] sm:$0xff] %vm223, %v293
        %327 = vst.msk [vmem:[%s307 + $0xe0] sm:$0xff] %vm223, %v294
        %328 = vst.msk [vmem:[%s307 + $0xf0] sm:$0xff] %vm223, %v295
        %329 = vst.msk [vmem:[%s307 + $0xf8] sm:$0xff] %vm223, %v296
        %330 = vst.msk [vmem:[%s307 + $0x108] sm:$0xff] %vm223, %v297
        %331 = vst.msk [vmem:[%s307 + $0x110] sm:$0xff] %vm223, %v298
        %332 = vst.msk [vmem:[%s307 + $0x120] sm:$0xff] %vm223, %v299
        %333 = vst.msk [vmem:[%s307 + $0x128] sm:$0xff] %vm223, %v300
        %334 = vst.msk [vmem:[%s307 + $0x138] sm:$0xff] %vm223, %v301
        %335 = vst.msk [vmem:[%s307 + $0x140] sm:$0xff] %vm223, %v302
        %336 = vst.msk [vmem:[%s307 + $0x150] sm:$0xff] %vm223, %v303
        %337 = vst.msk [vmem:[%s307 + $0x158] sm:$0xff] %vm223, %v304
        %338 = vst.msk [vmem:[%s307 + $0x168] sm:$0xff] %vm223, %v305
        %339 = vst.msk [vmem:[%s307 + $0x170] sm:$0xff] %vm223, %v306
        %v340 = vld [vmem:[#allocation2] sm:$0xff]
        %v341 = vld [vmem:[#allocation2 + $0x8] sm:$0xff]
        %v342 = vld [vmem:[#allocation2 + $0x10] sm:$0xff]
        %v343 = vld [vmem:[#allocation2 + $0x18] sm:$0xff]
        %v344 = vld [vmem:[#allocation2 + $0x20] sm:$0xff]
        %v345 = vld [vmem:[#allocation2 + $0x28] sm:$0xff]
        %v346 = vld [vmem:[#allocation2 + $0x30] sm:$0xff]
        %v347 = vld [vmem:[#allocation2 + $0x38] sm:$0xff]
        %v348 = vld [vmem:[#allocation2 + $0x40] sm:$0xff]
        %v349 = vld [vmem:[#allocation2 + $0x48] sm:$0xff]
        %v350 = vld [vmem:[#allocation2 + $0x50] sm:$0xff]
        %v351 = vld [vmem:[#allocation2 + $0x58] sm:$0xff]
        %v352 = vld [vmem:[#allocation2 + $0x60] sm:$0xff]
        %v353 = vld [vmem:[#allocation2 + $0x68] sm:$0xff]
        %v354 = vld [vmem:[#allocation2 + $0x70] sm:$0xff]
        %v355 = vld [vmem:[#allocation2 + $0x78] sm:$0xff]
        %v356 = vld [vmem:[#allocation2 + $0x80] sm:$0xff]
        %v357 = vld [vmem:[#allocation2 + $0x88] sm:$0xff]
        %v358 = vld [vmem:[#allocation2 + $0x90] sm:$0xff]
        %v359 = vld [vmem:[#allocation2 + $0x98] sm:$0xff]
        %v360 = vld [vmem:[#allocation2 + $0xa0] sm:$0xff]
        %v361 = vld [vmem:[#allocation2 + $0xa8] sm:$0xff]
        %v362 = vld [vmem:[#allocation2 + $0xb0] sm:$0xff]
        %v363 = vld [vmem:[#allocation2 + $0xb8] sm:$0xff]
        %v364 = vld [vmem:[#allocation2 + $0xc0] sm:$0xff]
        %v365 = vld [vmem:[#allocation2 + $0xc8] sm:$0xff]
        %v366 = vld [vmem:[#allocation2 + $0xd0] sm:$0xff]
        %v367 = vld [vmem:[#allocation2 + $0xd8] sm:$0xff]
        %v368 = vld [vmem:[#allocation2 + $0xe0] sm:$0xff]
        %v369 = vld [vmem:[#allocation2 + $0xe8] sm:$0xff]
        %v370 = vld [vmem:[#allocation2 + $0xf0] sm:$0xff]
        %v371 = vld [vmem:[#allocation2 + $0xf8] sm:$0xff]
        %v372 = vld [vmem:[#allocation2 + $0x100] sm:$0xff]
        %v373 = vld [vmem:[#allocation2 + $0x108] sm:$0xff]
        %v374 = vld [vmem:[#allocation2 + $0x110] sm:$0xff]
        %v375 = vld [vmem:[#allocation2 + $0x118] sm:$0xff]
        %v376 = vld [vmem:[#allocation2 + $0x120] sm:$0xff]
        %v377 = vld [vmem:[#allocation2 + $0x128] sm:$0xff]
        %v378 = vld [vmem:[#allocation2 + $0x130] sm:$0xff]
        %v379 = vld [vmem:[#allocation2 + $0x138] sm:$0xff]
        %v380 = vld [vmem:[#allocation2 + $0x140] sm:$0xff]
        %v381 = vld [vmem:[#allocation2 + $0x148] sm:$0xff]
        %v382 = vld [vmem:[#allocation2 + $0x150] sm:$0xff]
        %v383 = vld [vmem:[#allocation2 + $0x158] sm:$0xff]
        %v384 = vld [vmem:[#allocation2 + $0x160] sm:$0xff]
        %v385 = vld [vmem:[#allocation2 + $0x168] sm:$0xff]
        %v386 = vld [vmem:[#allocation2 + $0x170] sm:$0xff]
        %v387 = vld [vmem:[#allocation2 + $0x178] sm:$0xff]
        %v388 = vld [vmem:[#allocation2 + $0x180] sm:$0xff]
        %v389 = vld [vmem:[#allocation2 + $0x188] sm:$0xff]
        %v390 = vld [vmem:[#allocation2 + $0x190] sm:$0xff]
        %v391 = vld [vmem:[#allocation2 + $0x198] sm:$0xff]
        %v392 = vld [vmem:[#allocation2 + $0x1a0] sm:$0xff]
        %v393 = vld [vmem:[#allocation2 + $0x1a8] sm:$0xff]
        %v394 = vrot.slane %v340, 7
        %v395 = vrot.slane %v343, 7
        %v396 = vrot.slane %v346, 7
        %v397 = vrot.slane %v349, 7
        %v398 = vrot.slane %v352, 7
        %v399 = vrot.slane %v355, 7
        %v400 = vrot.slane %v358, 7
        %v401 = vrot.slane %v361, 7
        %v402 = vrot.slane %v364, 7
        %v403 = vrot.slane %v367, 7
        %v404 = vrot.slane %v370, 7
        %v405 = vrot.slane %v373, 7
        %v406 = vrot.slane %v376, 7
        %v407 = vrot.slane %v379, 7
        %v408 = vrot.slane %v382, 7
        %v409 = vrot.slane %v385, 7
        %v410 = vrot.slane %v388, 7
        %v411 = vrot.slane %v391, 7
        %v412 = vrot.slane %v341, 7
        %v413 = vrot.slane %v344, 7
        %v414 = vrot.slane %v347, 7
        %v415 = vrot.slane %v350, 7
        %v416 = vrot.slane %v353, 7
        %v417 = vrot.slane %v356, 7
        %v418 = vrot.slane %v359, 7
        %v419 = vrot.slane %v362, 7
        %v420 = vrot.slane %v365, 7
        %v421 = vrot.slane %v368, 7
        %v422 = vrot.slane %v371, 7
        %v423 = vrot.slane %v374, 7
        %v424 = vrot.slane %v377, 7
        %v425 = vrot.slane %v380, 7
        %v426 = vrot.slane %v383, 7
        %v427 = vrot.slane %v386, 7
        %v428 = vrot.slane %v389, 7
        %v429 = vrot.slane %v392, 7
        %v430 = vrot.slane %v342, 7
        %v431 = vrot.slane %v345, 7
        %v432 = vrot.slane %v348, 7
        %v433 = vrot.slane %v351, 7
        %v434 = vrot.slane %v354, 7
        %v435 = vrot.slane %v357, 7
        %v436 = vrot.slane %v360, 7
        %v437 = vrot.slane %v363, 7
        %v438 = vrot.slane %v366, 7
        %v439 = vrot.slane %v369, 7
        %v440 = vrot.slane %v372, 7
        %v441 = vrot.slane %v375, 7
        %v442 = vrot.slane %v378, 7
        %v443 = vrot.slane %v381, 7
        %v444 = vrot.slane %v384, 7
        %v445 = vrot.slane %v387, 7
        %v446 = vrot.slane %v390, 7
        %v447 = vrot.slane %v393, 7
        %v448 = vlaneseq
        %v449 = vshrl.u32 %v448, 7
        %vm450 = vcmp.lt.s32.totalorder %v449, 1
        %v451 = vsel %vm450, %v394, %v412
        %v452 = vsel %vm450, %v395, %v413
        %v453 = vsel %vm450, %v396, %v414
        %v454 = vsel %vm450, %v397, %v415
        %v455 = vsel %vm450, %v398, %v416
        %v456 = vsel %vm450, %v399, %v417
        %v457 = vsel %vm450, %v400, %v418
        %v458 = vsel %vm450, %v401, %v419
        %v459 = vsel %vm450, %v402, %v420
        %v460 = vsel %vm450, %v403, %v421
        %v461 = vsel %vm450, %v404, %v422
        %v462 = vsel %vm450, %v405, %v423
        %v463 = vsel %vm450, %v406, %v424
        %v464 = vsel %vm450, %v407, %v425
        %v465 = vsel %vm450, %v408, %v426
        %v466 = vsel %vm450, %v409, %v427
        %v467 = vsel %vm450, %v410, %v428
        %v468 = vsel %vm450, %v411, %v429
        %v469 = vsel %vm450, %v430, %v394
        %v470 = vsel %vm450, %v431, %v395
        %v471 = vsel %vm450, %v432, %v396
        %v472 = vsel %vm450, %v433, %v397
        %v473 = vsel %vm450, %v434, %v398
        %v474 = vsel %vm450, %v435, %v399
        %v475 = vsel %vm450, %v436, %v400
        %v476 = vsel %vm450, %v437, %v401
        %v477 = vsel %vm450, %v438, %v402
        %v478 = vsel %vm450, %v439, %v403
        %v479 = vsel %vm450, %v440, %v404
        %v480 = vsel %vm450, %v441, %v405
        %v481 = vsel %vm450, %v442, %v406
        %v482 = vsel %vm450, %v443, %v407
        %v483 = vsel %vm450, %v444, %v408
        %v484 = vsel %vm450, %v445, %v409
        %v485 = vsel %vm450, %v446, %v410
        %v486 = vsel %vm450, %v447, %v411
        %v487 = vld [vmem:[%s1] sm:$0xf]
        %s488 = scalar_lea.vmem %s1, 12
        %v489 = vld [vmem:[%s488] sm:$0xf]
        %v491 = vsel %vm223, %v470, 0
        %v494 = vsel %vm223, %v452, 0
        %v497 = vsel %vm223, %v471, 0
        %v500 = vsel %vm223, %v453, 0
        %v503 = vsel %vm223, %v472, 0
        %v506 = vsel %vm223, %v454, 0
        %v509 = vsel %vm223, %v473, 0
        %v512 = vsel %vm223, %v455, 0
        %v515 = vsel %vm223, %v474, 0
        %v518 = vsel %vm223, %v456, 0
        %v521 = vsel %vm223, %v475, 0
        %v524 = vsel %vm223, %v457, 0
        %v527 = vsel %vm223, %v476, 0
        %v530 = vsel %vm223, %v458, 0
        %v533 = vsel %vm223, %v477, 0
        %v536 = vsel %vm223, %v459, 0
        %v539 = vsel %vm223, %v478, 0
        %v542 = vsel %vm223, %v460, 0
        %v545 = vsel %vm223, %v479, 0
        %v548 = vsel %vm223, %v461, 0
        %v551 = vsel %vm223, %v480, 0
        %v554 = vsel %vm223, %v462, 0
        %v557 = vsel %vm223, %v481, 0
        %v560 = vsel %vm223, %v463, 0
        %v563 = vsel %vm223, %v482, 0
        %v566 = vsel %vm223, %v464, 0
        %v569 = vsel %vm223, %v483, 0
        %v572 = vsel %vm223, %v465, 0
        %v575 = vsel %vm223, %v484, 0
        %v578 = vsel %vm223, %v466, 0
        %v581 = vsel %vm223, %v485, 0
        %v584 = vsel %vm223, %v467, 0
        %vm586 = vcmask 1043456
        %v588 = vsel %vm586, %v489, 0
        %590 = vmatpush.msra.mxu0 0.0
        %591 = vmatpush.msra.mxu0 0.0
        %592 = vmatpush.msra.mxu0 0.0
        %593 = vmatpush.msra.mxu0 0.0
        %594 = vmatpush.msra.mxu0 0.0
        %595 = vmatpush.msra.mxu0 0.0
        %596 = vmatpush.msra.mxu0 0.0
        %597 = vmatpush.msra.mxu0 0.0
        %598 = vmatpush.msra.mxu0 0.0
        %599 = vmatpush.msra.mxu0 0.0
        %600 = vmatpush.msra.mxu0 0.0
        %601 = vmatpush.msra.mxu0 0.0
        %602 = vmatpush.msra.mxu0 0.0
        %603 = vmatpush.msra.mxu0 0.0
        %604 = vmatpush.msra.mxu0 0.0
        %605 = vmatpush.msra.mxu0 %v588
        %606 = vmatmul.f32.gmra.mxu0 %v491
        %v607 = vpop.f32.mrf.mxu0
        %v608 = vadd.f32 0.0, %v607
        %609 = vmatmul.f32.gmra.mxu0 %v494
        %v610 = vpop.f32.mrf.mxu0
        %v611 = vadd.f32 0.0, %v610
        %612 = vmatmul.f32.gmra.mxu0 %v497
        %v613 = vpop.f32.mrf.mxu0
        %v614 = vadd.f32 0.0, %v613
        %615 = vmatmul.f32.gmra.mxu0 %v500
        %v616 = vpop.f32.mrf.mxu0
        %v617 = vadd.f32 0.0, %v616
        %618 = vmatmul.f32.gmra.mxu0 %v503
        %v619 = vpop.f32.mrf.mxu0
        %v620 = vadd.f32 0.0, %v619
        %621 = vmatmul.f32.gmra.mxu0 %v506
        %v622 = vpop.f32.mrf.mxu0
        %v623 = vadd.f32 0.0, %v622
        %624 = vmatmul.f32.gmra.mxu0 %v509
        %v625 = vpop.f32.mrf.mxu0
        %v626 = vadd.f32 0.0, %v625
        %627 = vmatmul.f32.gmra.mxu0 %v512
        %v628 = vpop.f32.mrf.mxu0
        %v629 = vadd.f32 0.0, %v628
        %630 = vmatmul.f32.gmra.mxu0 %v515
        %v631 = vpop.f32.mrf.mxu0
        %v632 = vadd.f32 0.0, %v631
        %633 = vmatmul.f32.gmra.mxu0 %v518
        %v634 = vpop.f32.mrf.mxu0
        %v635 = vadd.f32 0.0, %v634
        %636 = vmatmul.f32.gmra.mxu0 %v521
        %v637 = vpop.f32.mrf.mxu0
        %v638 = vadd.f32 0.0, %v637
        %639 = vmatmul.f32.gmra.mxu0 %v524
        %v640 = vpop.f32.mrf.mxu0
        %v641 = vadd.f32 0.0, %v640
        %642 = vmatmul.f32.gmra.mxu0 %v527
        %v643 = vpop.f32.mrf.mxu0
        %v644 = vadd.f32 0.0, %v643
        %645 = vmatmul.f32.gmra.mxu0 %v530
        %v646 = vpop.f32.mrf.mxu0
        %v647 = vadd.f32 0.0, %v646
        %648 = vmatmul.f32.gmra.mxu0 %v533
        %v649 = vpop.f32.mrf.mxu0
        %v650 = vadd.f32 0.0, %v649
        %651 = vmatmul.f32.gmra.mxu0 %v536
        %v652 = vpop.f32.mrf.mxu0
        %v653 = vadd.f32 0.0, %v652
        %654 = vmatmul.f32.gmra.mxu0 %v539
        %v655 = vpop.f32.mrf.mxu0
        %v656 = vadd.f32 0.0, %v655
        %657 = vmatmul.f32.gmra.mxu0 %v542
        %v658 = vpop.f32.mrf.mxu0
        %v659 = vadd.f32 0.0, %v658
        %660 = vmatmul.f32.gmra.mxu0 %v545
        %v661 = vpop.f32.mrf.mxu0
        %v662 = vadd.f32 0.0, %v661
        %663 = vmatmul.f32.gmra.mxu0 %v548
        %v664 = vpop.f32.mrf.mxu0
        %v665 = vadd.f32 0.0, %v664
        %666 = vmatmul.f32.gmra.mxu0 %v551
        %v667 = vpop.f32.mrf.mxu0
        %v668 = vadd.f32 0.0, %v667
        %669 = vmatmul.f32.gmra.mxu0 %v554
        %v670 = vpop.f32.mrf.mxu0
        %v671 = vadd.f32 0.0, %v670
        %672 = vmatmul.f32.gmra.mxu0 %v557
        %v673 = vpop.f32.mrf.mxu0
        %v674 = vadd.f32 0.0, %v673
        %675 = vmatmul.f32.gmra.mxu0 %v560
        %v676 = vpop.f32.mrf.mxu0
        %v677 = vadd.f32 0.0, %v676
        %678 = vmatmul.f32.gmra.mxu0 %v563
        %v679 = vpop.f32.mrf.mxu0
        %v680 = vadd.f32 0.0, %v679
        %681 = vmatmul.f32.gmra.mxu0 %v566
        %v682 = vpop.f32.mrf.mxu0
        %v683 = vadd.f32 0.0, %v682
        %684 = vmatmul.f32.gmra.mxu0 %v569
        %v685 = vpop.f32.mrf.mxu0
        %v686 = vadd.f32 0.0, %v685
        %687 = vmatmul.f32.gmra.mxu0 %v572
        %v688 = vpop.f32.mrf.mxu0
        %v689 = vadd.f32 0.0, %v688
        %690 = vmatmul.f32.gmra.mxu0 %v575
        %v691 = vpop.f32.mrf.mxu0
        %v692 = vadd.f32 0.0, %v691
        %693 = vmatmul.f32.gmra.mxu0 %v578
        %v694 = vpop.f32.mrf.mxu0
        %v695 = vadd.f32 0.0, %v694
        %696 = vmatmul.f32.gmra.mxu0 %v581
        %v697 = vpop.f32.mrf.mxu0
        %v698 = vadd.f32 0.0, %v697
        %699 = vmatmul.f32.gmra.mxu0 %v584
        %v700 = vpop.f32.mrf.mxu0
        %v701 = vadd.f32 0.0, %v700
        %702 = vdwg.mxu0
        %v704 = vsel %vm223, %v469, 0
        %v707 = vsel %vm223, %v451, 0
        %v710 = vsel %vm586, %v487, 0
        %712 = vmatpush.msra.mxu0 0.0
        %713 = vmatpush.msra.mxu0 0.0
        %714 = vmatpush.msra.mxu0 0.0
        %715 = vmatpush.msra.mxu0 0.0
        %716 = vmatpush.msra.mxu0 0.0
        %717 = vmatpush.msra.mxu0 0.0
        %718 = vmatpush.msra.mxu0 0.0
        %719 = vmatpush.msra.mxu0 0.0
        %720 = vmatpush.msra.mxu0 0.0
        %721 = vmatpush.msra.mxu0 0.0
        %722 = vmatpush.msra.mxu0 0.0
        %723 = vmatpush.msra.mxu0 0.0
        %724 = vmatpush.msra.mxu0 0.0
        %725 = vmatpush.msra.mxu0 0.0
        %726 = vmatpush.msra.mxu0 0.0
        %727 = vmatpush.msra.mxu0 %v710
        %728 = vmatmul.f32.gmra.mxu0 %v704
        %v729 = vpop.f32.mrf.mxu0
        %v730 = vadd.f32 %v608, %v729
        %731 = vmatmul.f32.gmra.mxu0 %v707
        %v732 = vpop.f32.mrf.mxu0
        %v733 = vadd.f32 %v611, %v732
        %734 = vmatmul.f32.gmra.mxu0 %v491
        %v735 = vpop.f32.mrf.mxu0
        %v736 = vadd.f32 %v614, %v735
        %737 = vmatmul.f32.gmra.mxu0 %v494
        %v738 = vpop.f32.mrf.mxu0
        %v739 = vadd.f32 %v617, %v738
        %740 = vmatmul.f32.gmra.mxu0 %v497
        %v741 = vpop.f32.mrf.mxu0
        %v742 = vadd.f32 %v620, %v741
        %743 = vmatmul.f32.gmra.mxu0 %v500
        %v744 = vpop.f32.mrf.mxu0
        %v745 = vadd.f32 %v623, %v744
        %746 = vmatmul.f32.gmra.mxu0 %v503
        %v747 = vpop.f32.mrf.mxu0
        %v748 = vadd.f32 %v626, %v747
        %749 = vmatmul.f32.gmra.mxu0 %v506
        %v750 = vpop.f32.mrf.mxu0
        %v751 = vadd.f32 %v629, %v750
        %752 = vmatmul.f32.gmra.mxu0 %v509
        %v753 = vpop.f32.mrf.mxu0
        %v754 = vadd.f32 %v632, %v753
        %755 = vmatmul.f32.gmra.mxu0 %v512
        %v756 = vpop.f32.mrf.mxu0
        %v757 = vadd.f32 %v635, %v756
        %758 = vmatmul.f32.gmra.mxu0 %v515
        %v759 = vpop.f32.mrf.mxu0
        %v760 = vadd.f32 %v638, %v759
        %761 = vmatmul.f32.gmra.mxu0 %v518
        %v762 = vpop.f32.mrf.mxu0
        %v763 = vadd.f32 %v641, %v762
        %764 = vmatmul.f32.gmra.mxu0 %v521
        %v765 = vpop.f32.mrf.mxu0
        %v766 = vadd.f32 %v644, %v765
        %767 = vmatmul.f32.gmra.mxu0 %v524
        %v768 = vpop.f32.mrf.mxu0
        %v769 = vadd.f32 %v647, %v768
        %770 = vmatmul.f32.gmra.mxu0 %v527
        %v771 = vpop.f32.mrf.mxu0
        %v772 = vadd.f32 %v650, %v771
        %773 = vmatmul.f32.gmra.mxu0 %v530
        %v774 = vpop.f32.mrf.mxu0
        %v775 = vadd.f32 %v653, %v774
        %776 = vmatmul.f32.gmra.mxu0 %v533
        %v777 = vpop.f32.mrf.mxu0
        %v778 = vadd.f32 %v656, %v777
        %779 = vmatmul.f32.gmra.mxu0 %v536
        %v780 = vpop.f32.mrf.mxu0
        %v781 = vadd.f32 %v659, %v780
        %782 = vmatmul.f32.gmra.mxu0 %v539
        %v783 = vpop.f32.mrf.mxu0
        %v784 = vadd.f32 %v662, %v783
        %785 = vmatmul.f32.gmra.mxu0 %v542
        %v786 = vpop.f32.mrf.mxu0
        %v787 = vadd.f32 %v665, %v786
        %788 = vmatmul.f32.gmra.mxu0 %v545
        %v789 = vpop.f32.mrf.mxu0
        %v790 = vadd.f32 %v668, %v789
        %791 = vmatmul.f32.gmra.mxu0 %v548
        %v792 = vpop.f32.mrf.mxu0
        %v793 = vadd.f32 %v671, %v792
        %794 = vmatmul.f32.gmra.mxu0 %v551
        %v795 = vpop.f32.mrf.mxu0
        %v796 = vadd.f32 %v674, %v795
        %797 = vmatmul.f32.gmra.mxu0 %v554
        %v798 = vpop.f32.mrf.mxu0
        %v799 = vadd.f32 %v677, %v798
        %800 = vmatmul.f32.gmra.mxu0 %v557
        %v801 = vpop.f32.mrf.mxu0
        %v802 = vadd.f32 %v680, %v801
        %803 = vmatmul.f32.gmra.mxu0 %v560
        %v804 = vpop.f32.mrf.mxu0
        %v805 = vadd.f32 %v683, %v804
        %806 = vmatmul.f32.gmra.mxu0 %v563
        %v807 = vpop.f32.mrf.mxu0
        %v808 = vadd.f32 %v686, %v807
        %809 = vmatmul.f32.gmra.mxu0 %v566
        %v810 = vpop.f32.mrf.mxu0
        %v811 = vadd.f32 %v689, %v810
        %812 = vmatmul.f32.gmra.mxu0 %v569
        %v813 = vpop.f32.mrf.mxu0
        %v814 = vadd.f32 %v692, %v813
        %815 = vmatmul.f32.gmra.mxu0 %v572
        %v816 = vpop.f32.mrf.mxu0
        %v817 = vadd.f32 %v695, %v816
        %818 = vmatmul.f32.gmra.mxu0 %v575
        %v819 = vpop.f32.mrf.mxu0
        %v820 = vadd.f32 %v698, %v819
        %821 = vmatmul.f32.gmra.mxu0 %v578
        %v822 = vpop.f32.mrf.mxu0
        %v823 = vadd.f32 %v701, %v822
        %824 = vdwg.mxu0
        %s825 = scalar_lea.vmem %s1, 24
        %v826 = vld [vmem:[%s825] sm:$0xf]
        %v828 = vsel %vm223, %v486, 0
        %v831 = vsel %vm223, %v468, 0
        %v834 = vsel %vm586, %v826, 0
        %836 = vmatpush.msra.mxu0 0.0
        %837 = vmatpush.msra.mxu0 0.0
        %838 = vmatpush.msra.mxu0 0.0
        %839 = vmatpush.msra.mxu0 0.0
        %840 = vmatpush.msra.mxu0 0.0
        %841 = vmatpush.msra.mxu0 0.0
        %842 = vmatpush.msra.mxu0 0.0
        %843 = vmatpush.msra.mxu0 0.0
        %844 = vmatpush.msra.mxu0 0.0
        %845 = vmatpush.msra.mxu0 0.0
        %846 = vmatpush.msra.mxu0 0.0
        %847 = vmatpush.msra.mxu0 0.0
        %848 = vmatpush.msra.mxu0 0.0
        %849 = vmatpush.msra.mxu0 0.0
        %850 = vmatpush.msra.mxu0 0.0
        %851 = vmatpush.msra.mxu0 %v834
        %852 = vmatmul.f32.gmra.mxu0 %v497
        %v853 = vpop.f32.mrf.mxu0
        %v854 = vadd.f32 0.0, %v853
        %855 = vmatmul.f32.gmra.mxu0 %v500
        %v856 = vpop.f32.mrf.mxu0
        %v857 = vadd.f32 0.0, %v856
        %858 = vmatmul.f32.gmra.mxu0 %v503
        %v859 = vpop.f32.mrf.mxu0
        %v860 = vadd.f32 0.0, %v859
        %861 = vmatmul.f32.gmra.mxu0 %v506
        %v862 = vpop.f32.mrf.mxu0
        %v863 = vadd.f32 0.0, %v862
        %864 = vmatmul.f32.gmra.mxu0 %v509
        %v865 = vpop.f32.mrf.mxu0
        %v866 = vadd.f32 0.0, %v865
        %867 = vmatmul.f32.gmra.mxu0 %v512
        %v868 = vpop.f32.mrf.mxu0
        %v869 = vadd.f32 0.0, %v868
        %870 = vmatmul.f32.gmra.mxu0 %v515
        %v871 = vpop.f32.mrf.mxu0
        %v872 = vadd.f32 0.0, %v871
        %873 = vmatmul.f32.gmra.mxu0 %v518
        %v874 = vpop.f32.mrf.mxu0
        %v875 = vadd.f32 0.0, %v874
        %876 = vmatmul.f32.gmra.mxu0 %v521
        %v877 = vpop.f32.mrf.mxu0
        %v878 = vadd.f32 0.0, %v877
        %879 = vmatmul.f32.gmra.mxu0 %v524
        %v880 = vpop.f32.mrf.mxu0
        %v881 = vadd.f32 0.0, %v880
        %882 = vmatmul.f32.gmra.mxu0 %v527
        %v883 = vpop.f32.mrf.mxu0
        %v884 = vadd.f32 0.0, %v883
        %885 = vmatmul.f32.gmra.mxu0 %v530
        %v886 = vpop.f32.mrf.mxu0
        %v887 = vadd.f32 0.0, %v886
        %888 = vmatmul.f32.gmra.mxu0 %v533
        %v889 = vpop.f32.mrf.mxu0
        %v890 = vadd.f32 0.0, %v889
        %891 = vmatmul.f32.gmra.mxu0 %v536
        %v892 = vpop.f32.mrf.mxu0
        %v893 = vadd.f32 0.0, %v892
        %894 = vmatmul.f32.gmra.mxu0 %v539
        %v895 = vpop.f32.mrf.mxu0
        %v896 = vadd.f32 0.0, %v895
        %897 = vmatmul.f32.gmra.mxu0 %v542
        %v898 = vpop.f32.mrf.mxu0
        %v899 = vadd.f32 0.0, %v898
        %900 = vmatmul.f32.gmra.mxu0 %v545
        %v901 = vpop.f32.mrf.mxu0
        %v902 = vadd.f32 0.0, %v901
        %903 = vmatmul.f32.gmra.mxu0 %v548
        %v904 = vpop.f32.mrf.mxu0
        %v905 = vadd.f32 0.0, %v904
        %906 = vmatmul.f32.gmra.mxu0 %v551
        %v907 = vpop.f32.mrf.mxu0
        %v908 = vadd.f32 0.0, %v907
        %909 = vmatmul.f32.gmra.mxu0 %v554
        %v910 = vpop.f32.mrf.mxu0
        %v911 = vadd.f32 0.0, %v910
        %912 = vmatmul.f32.gmra.mxu0 %v557
        %v913 = vpop.f32.mrf.mxu0
        %v914 = vadd.f32 0.0, %v913
        %915 = vmatmul.f32.gmra.mxu0 %v560
        %v916 = vpop.f32.mrf.mxu0
        %v917 = vadd.f32 0.0, %v916
        %918 = vmatmul.f32.gmra.mxu0 %v563
        %v919 = vpop.f32.mrf.mxu0
        %v920 = vadd.f32 0.0, %v919
        %921 = vmatmul.f32.gmra.mxu0 %v566
        %v922 = vpop.f32.mrf.mxu0
        %v923 = vadd.f32 0.0, %v922
        %924 = vmatmul.f32.gmra.mxu0 %v569
        %v925 = vpop.f32.mrf.mxu0
        %v926 = vadd.f32 0.0, %v925
        %927 = vmatmul.f32.gmra.mxu0 %v572
        %v928 = vpop.f32.mrf.mxu0
        %v929 = vadd.f32 0.0, %v928
        %930 = vmatmul.f32.gmra.mxu0 %v575
        %v931 = vpop.f32.mrf.mxu0
        %v932 = vadd.f32 0.0, %v931
        %933 = vmatmul.f32.gmra.mxu0 %v578
        %v934 = vpop.f32.mrf.mxu0
        %v935 = vadd.f32 0.0, %v934
        %936 = vmatmul.f32.gmra.mxu0 %v581
        %v937 = vpop.f32.mrf.mxu0
        %v938 = vadd.f32 0.0, %v937
        %939 = vmatmul.f32.gmra.mxu0 %v584
        %v940 = vpop.f32.mrf.mxu0
        %v941 = vadd.f32 0.0, %v940
        %942 = vmatmul.f32.gmra.mxu0 %v828
        %v943 = vpop.f32.mrf.mxu0
        %v944 = vadd.f32 0.0, %v943
        %945 = vmatmul.f32.gmra.mxu0 %v831
        %v946 = vpop.f32.mrf.mxu0
        %v947 = vadd.f32 0.0, %v946
        %948 = vdwg.mxu0
        %v949 = vadd.f32 %v730, %v854
        %v950 = vadd.f32 %v733, %v857
        %v951 = vadd.f32 %v736, %v860
        %v952 = vadd.f32 %v739, %v863
        %v953 = vadd.f32 %v742, %v866
        %v954 = vadd.f32 %v745, %v869
        %v955 = vadd.f32 %v748, %v872
        %v956 = vadd.f32 %v751, %v875
        %v957 = vadd.f32 %v754, %v878
        %v958 = vadd.f32 %v757, %v881
        %v959 = vadd.f32 %v760, %v884
        %v960 = vadd.f32 %v763, %v887
        %v961 = vadd.f32 %v766, %v890
        %v962 = vadd.f32 %v769, %v893
        %v963 = vadd.f32 %v772, %v896
        %v964 = vadd.f32 %v775, %v899
        %v965 = vadd.f32 %v778, %v902
        %v966 = vadd.f32 %v781, %v905
        %v967 = vadd.f32 %v784, %v908
        %v968 = vadd.f32 %v787, %v911
        %v969 = vadd.f32 %v790, %v914
        %v970 = vadd.f32 %v793, %v917
        %v971 = vadd.f32 %v796, %v920
        %v972 = vadd.f32 %v799, %v923
        %v973 = vadd.f32 %v802, %v926
        %v974 = vadd.f32 %v805, %v929
        %v975 = vadd.f32 %v808, %v932
        %v976 = vadd.f32 %v811, %v935
        %v977 = vadd.f32 %v814, %v938
        %v978 = vadd.f32 %v817, %v941
        %v979 = vadd.f32 %v820, %v944
        %v980 = vadd.f32 %v823, %v947
        %s981 = scalar_lea.vmem %s1, 4
        %v982 = vld [vmem:[%s981] sm:$0xf]
        %v984 = vsel %vm223, %v340, 0
        %v987 = vsel %vm223, %v341, 0
        %v990 = vsel %vm223, %v343, 0
        %v993 = vsel %vm223, %v344, 0
        %v996 = vsel %vm223, %v346, 0
        %v999 = vsel %vm223, %v347, 0
        %v1002 = vsel %vm223, %v349, 0
        %v1005 = vsel %vm223, %v350, 0
        %v1008 = vsel %vm223, %v352, 0
        %v1011 = vsel %vm223, %v353, 0
        %v1014 = vsel %vm223, %v355, 0
        %v1017 = vsel %vm223, %v356, 0
        %v1020 = vsel %vm223, %v358, 0
        %v1023 = vsel %vm223, %v359, 0
        %v1026 = vsel %vm223, %v361, 0
        %v1029 = vsel %vm223, %v362, 0
        %v1032 = vsel %vm223, %v364, 0
        %v1035 = vsel %vm223, %v365, 0
        %v1038 = vsel %vm223, %v367, 0
        %v1041 = vsel %vm223, %v368, 0
        %v1044 = vsel %vm223, %v370, 0
        %v1047 = vsel %vm223, %v371, 0
        %v1050 = vsel %vm223, %v373, 0
        %v1053 = vsel %vm223, %v374, 0
        %v1056 = vsel %vm223, %v376, 0
        %v1059 = vsel %vm223, %v377, 0
        %v1062 = vsel %vm223, %v379, 0
        %v1065 = vsel %vm223, %v380, 0
        %v1068 = vsel %vm223, %v382, 0
        %v1071 = vsel %vm223, %v383, 0
        %v1074 = vsel %vm223, %v385, 0
        %v1077 = vsel %vm223, %v386, 0
        %v1080 = vsel %vm586, %v982, 0
        %1082 = vmatpush.msra.mxu0 0.0
        %1083 = vmatpush.msra.mxu0 0.0
        %1084 = vmatpush.msra.mxu0 0.0
        %1085 = vmatpush.msra.mxu0 0.0
        %1086 = vmatpush.msra.mxu0 0.0
        %1087 = vmatpush.msra.mxu0 0.0
        %1088 = vmatpush.msra.mxu0 0.0
        %1089 = vmatpush.msra.mxu0 0.0
        %1090 = vmatpush.msra.mxu0 0.0
        %1091 = vmatpush.msra.mxu0 0.0
        %1092 = vmatpush.msra.mxu0 0.0
        %1093 = vmatpush.msra.mxu0 0.0
        %1094 = vmatpush.msra.mxu0 0.0
        %1095 = vmatpush.msra.mxu0 0.0
        %1096 = vmatpush.msra.mxu0 0.0
        %1097 = vmatpush.msra.mxu0 %v1080
        %1098 = vmatmul.f32.gmra.mxu0 %v984
        %v1099 = vpop.f32.mrf.mxu0
        %v1100 = vadd.f32 0.0, %v1099
        %1101 = vmatmul.f32.gmra.mxu0 %v987
        %v1102 = vpop.f32.mrf.mxu0
        %v1103 = vadd.f32 0.0, %v1102
        %1104 = vmatmul.f32.gmra.mxu0 %v990
        %v1105 = vpop.f32.mrf.mxu0
        %v1106 = vadd.f32 0.0, %v1105
        %1107 = vmatmul.f32.gmra.mxu0 %v993
        %v1108 = vpop.f32.mrf.mxu0
        %v1109 = vadd.f32 0.0, %v1108
        %1110 = vmatmul.f32.gmra.mxu0 %v996
        %v1111 = vpop.f32.mrf.mxu0
        %v1112 = vadd.f32 0.0, %v1111
        %1113 = vmatmul.f32.gmra.mxu0 %v999
        %v1114 = vpop.f32.mrf.mxu0
        %v1115 = vadd.f32 0.0, %v1114
        %1116 = vmatmul.f32.gmra.mxu0 %v1002
        %v1117 = vpop.f32.mrf.mxu0
        %v1118 = vadd.f32 0.0, %v1117
        %1119 = vmatmul.f32.gmra.mxu0 %v1005
        %v1120 = vpop.f32.mrf.mxu0
        %v1121 = vadd.f32 0.0, %v1120
        %1122 = vmatmul.f32.gmra.mxu0 %v1008
        %v1123 = vpop.f32.mrf.mxu0
        %v1124 = vadd.f32 0.0, %v1123
        %1125 = vmatmul.f32.gmra.mxu0 %v1011
        %v1126 = vpop.f32.mrf.mxu0
        %v1127 = vadd.f32 0.0, %v1126
        %1128 = vmatmul.f32.gmra.mxu0 %v1014
        %v1129 = vpop.f32.mrf.mxu0
        %v1130 = vadd.f32 0.0, %v1129
        %1131 = vmatmul.f32.gmra.mxu0 %v1017
        %v1132 = vpop.f32.mrf.mxu0
        %v1133 = vadd.f32 0.0, %v1132
        %1134 = vmatmul.f32.gmra.mxu0 %v1020
        %v1135 = vpop.f32.mrf.mxu0
        %v1136 = vadd.f32 0.0, %v1135
        %1137 = vmatmul.f32.gmra.mxu0 %v1023
        %v1138 = vpop.f32.mrf.mxu0
        %v1139 = vadd.f32 0.0, %v1138
        %1140 = vmatmul.f32.gmra.mxu0 %v1026
        %v1141 = vpop.f32.mrf.mxu0
        %v1142 = vadd.f32 0.0, %v1141
        %1143 = vmatmul.f32.gmra.mxu0 %v1029
        %v1144 = vpop.f32.mrf.mxu0
        %v1145 = vadd.f32 0.0, %v1144
        %1146 = vmatmul.f32.gmra.mxu0 %v1032
        %v1147 = vpop.f32.mrf.mxu0
        %v1148 = vadd.f32 0.0, %v1147
        %1149 = vmatmul.f32.gmra.mxu0 %v1035
        %v1150 = vpop.f32.mrf.mxu0
        %v1151 = vadd.f32 0.0, %v1150
        %1152 = vmatmul.f32.gmra.mxu0 %v1038
        %v1153 = vpop.f32.mrf.mxu0
        %v1154 = vadd.f32 0.0, %v1153
        %1155 = vmatmul.f32.gmra.mxu0 %v1041
        %v1156 = vpop.f32.mrf.mxu0
        %v1157 = vadd.f32 0.0, %v1156
        %1158 = vmatmul.f32.gmra.mxu0 %v1044
        %v1159 = vpop.f32.mrf.mxu0
        %v1160 = vadd.f32 0.0, %v1159
        %1161 = vmatmul.f32.gmra.mxu0 %v1047
        %v1162 = vpop.f32.mrf.mxu0
        %v1163 = vadd.f32 0.0, %v1162
        %1164 = vmatmul.f32.gmra.mxu0 %v1050
        %v1165 = vpop.f32.mrf.mxu0
        %v1166 = vadd.f32 0.0, %v1165
        %1167 = vmatmul.f32.gmra.mxu0 %v1053
        %v1168 = vpop.f32.mrf.mxu0
        %v1169 = vadd.f32 0.0, %v1168
        %1170 = vmatmul.f32.gmra.mxu0 %v1056
        %v1171 = vpop.f32.mrf.mxu0
        %v1172 = vadd.f32 0.0, %v1171
        %1173 = vmatmul.f32.gmra.mxu0 %v1059
        %v1174 = vpop.f32.mrf.mxu0
        %v1175 = vadd.f32 0.0, %v1174
        %1176 = vmatmul.f32.gmra.mxu0 %v1062
        %v1177 = vpop.f32.mrf.mxu0
        %v1178 = vadd.f32 0.0, %v1177
        %1179 = vmatmul.f32.gmra.mxu0 %v1065
        %v1180 = vpop.f32.mrf.mxu0
        %v1181 = vadd.f32 0.0, %v1180
        %1182 = vmatmul.f32.gmra.mxu0 %v1068
        %v1183 = vpop.f32.mrf.mxu0
        %v1184 = vadd.f32 0.0, %v1183
        %1185 = vmatmul.f32.gmra.mxu0 %v1071
        %v1186 = vpop.f32.mrf.mxu0
        %v1187 = vadd.f32 0.0, %v1186
        %1188 = vmatmul.f32.gmra.mxu0 %v1074
        %v1189 = vpop.f32.mrf.mxu0
        %v1190 = vadd.f32 0.0, %v1189
        %1191 = vmatmul.f32.gmra.mxu0 %v1077
        %v1192 = vpop.f32.mrf.mxu0
        %v1193 = vadd.f32 0.0, %v1192
        %1194 = vdwg.mxu0
        %v1195 = vadd.f32 %v949, %v1100
        %v1196 = vadd.f32 %v950, %v1103
        %v1197 = vadd.f32 %v951, %v1106
        %v1198 = vadd.f32 %v952, %v1109
        %v1199 = vadd.f32 %v953, %v1112
        %v1200 = vadd.f32 %v954, %v1115
        %v1201 = vadd.f32 %v955, %v1118
        %v1202 = vadd.f32 %v956, %v1121
        %v1203 = vadd.f32 %v957, %v1124
        %v1204 = vadd.f32 %v958, %v1127
        %v1205 = vadd.f32 %v959, %v1130
        %v1206 = vadd.f32 %v960, %v1133
        %v1207 = vadd.f32 %v961, %v1136
        %v1208 = vadd.f32 %v962, %v1139
        %v1209 = vadd.f32 %v963, %v1142
        %v1210 = vadd.f32 %v964, %v1145
        %v1211 = vadd.f32 %v965, %v1148
        %v1212 = vadd.f32 %v966, %v1151
        %v1213 = vadd.f32 %v967, %v1154
        %v1214 = vadd.f32 %v968, %v1157
        %v1215 = vadd.f32 %v969, %v1160
        %v1216 = vadd.f32 %v970, %v1163
        %v1217 = vadd.f32 %v971, %v1166
        %v1218 = vadd.f32 %v972, %v1169
        %v1219 = vadd.f32 %v973, %v1172
        %v1220 = vadd.f32 %v974, %v1175
        %v1221 = vadd.f32 %v975, %v1178
        %v1222 = vadd.f32 %v976, %v1181
        %v1223 = vadd.f32 %v977, %v1184
        %v1224 = vadd.f32 %v978, %v1187
        %v1225 = vadd.f32 %v979, %v1190
        %v1226 = vadd.f32 %v980, %v1193
        %s1227 = scalar_lea.vmem %s1, 16
        %v1228 = vld [vmem:[%s1227] sm:$0xf]
        %v1230 = vsel %vm223, %v388, 0
        %v1233 = vsel %vm223, %v389, 0
        %v1236 = vsel %vm586, %v1228, 0
        %1238 = vmatpush.msra.mxu0 0.0
        %1239 = vmatpush.msra.mxu0 0.0
        %1240 = vmatpush.msra.mxu0 0.0
        %1241 = vmatpush.msra.mxu0 0.0
        %1242 = vmatpush.msra.mxu0 0.0
        %1243 = vmatpush.msra.mxu0 0.0
        %1244 = vmatpush.msra.mxu0 0.0
        %1245 = vmatpush.msra.mxu0 0.0
        %1246 = vmatpush.msra.mxu0 0.0
        %1247 = vmatpush.msra.mxu0 0.0
        %1248 = vmatpush.msra.mxu0 0.0
        %1249 = vmatpush.msra.mxu0 0.0
        %1250 = vmatpush.msra.mxu0 0.0
        %1251 = vmatpush.msra.mxu0 0.0
        %1252 = vmatpush.msra.mxu0 0.0
        %1253 = vmatpush.msra.mxu0 %v1236
        %1254 = vmatmul.f32.gmra.mxu0 %v990
        %v1255 = vpop.f32.mrf.mxu0
        %v1256 = vadd.f32 0.0, %v1255
        %1257 = vmatmul.f32.gmra.mxu0 %v993
        %v1258 = vpop.f32.mrf.mxu0
        %v1259 = vadd.f32 0.0, %v1258
        %1260 = vmatmul.f32.gmra.mxu0 %v996
        %v1261 = vpop.f32.mrf.mxu0
        %v1262 = vadd.f32 0.0, %v1261
        %1263 = vmatmul.f32.gmra.mxu0 %v999
        %v1264 = vpop.f32.mrf.mxu0
        %v1265 = vadd.f32 0.0, %v1264
        %1266 = vmatmul.f32.gmra.mxu0 %v1002
        %v1267 = vpop.f32.mrf.mxu0
        %v1268 = vadd.f32 0.0, %v1267
        %1269 = vmatmul.f32.gmra.mxu0 %v1005
        %v1270 = vpop.f32.mrf.mxu0
        %v1271 = vadd.f32 0.0, %v1270
        %1272 = vmatmul.f32.gmra.mxu0 %v1008
        %v1273 = vpop.f32.mrf.mxu0
        %v1274 = vadd.f32 0.0, %v1273
        %1275 = vmatmul.f32.gmra.mxu0 %v1011
        %v1276 = vpop.f32.mrf.mxu0
        %v1277 = vadd.f32 0.0, %v1276
        %1278 = vmatmul.f32.gmra.mxu0 %v1014
        %v1279 = vpop.f32.mrf.mxu0
        %v1280 = vadd.f32 0.0, %v1279
        %1281 = vmatmul.f32.gmra.mxu0 %v1017
        %v1282 = vpop.f32.mrf.mxu0
        %v1283 = vadd.f32 0.0, %v1282
        %1284 = vmatmul.f32.gmra.mxu0 %v1020
        %v1285 = vpop.f32.mrf.mxu0
        %v1286 = vadd.f32 0.0, %v1285
        %1287 = vmatmul.f32.gmra.mxu0 %v1023
        %v1288 = vpop.f32.mrf.mxu0
        %v1289 = vadd.f32 0.0, %v1288
        %1290 = vmatmul.f32.gmra.mxu0 %v1026
        %v1291 = vpop.f32.mrf.mxu0
        %v1292 = vadd.f32 0.0, %v1291
        %1293 = vmatmul.f32.gmra.mxu0 %v1029
        %v1294 = vpop.f32.mrf.mxu0
        %v1295 = vadd.f32 0.0, %v1294
        %1296 = vmatmul.f32.gmra.mxu0 %v1032
        %v1297 = vpop.f32.mrf.mxu0
        %v1298 = vadd.f32 0.0, %v1297
        %1299 = vmatmul.f32.gmra.mxu0 %v1035
        %v1300 = vpop.f32.mrf.mxu0
        %v1301 = vadd.f32 0.0, %v1300
        %1302 = vmatmul.f32.gmra.mxu0 %v1038
        %v1303 = vpop.f32.mrf.mxu0
        %v1304 = vadd.f32 0.0, %v1303
        %1305 = vmatmul.f32.gmra.mxu0 %v1041
        %v1306 = vpop.f32.mrf.mxu0
        %v1307 = vadd.f32 0.0, %v1306
        %1308 = vmatmul.f32.gmra.mxu0 %v1044
        %v1309 = vpop.f32.mrf.mxu0
        %v1310 = vadd.f32 0.0, %v1309
        %1311 = vmatmul.f32.gmra.mxu0 %v1047
        %v1312 = vpop.f32.mrf.mxu0
        %v1313 = vadd.f32 0.0, %v1312
        %1314 = vmatmul.f32.gmra.mxu0 %v1050
        %v1315 = vpop.f32.mrf.mxu0
        %v1316 = vadd.f32 0.0, %v1315
        %1317 = vmatmul.f32.gmra.mxu0 %v1053
        %v1318 = vpop.f32.mrf.mxu0
        %v1319 = vadd.f32 0.0, %v1318
        %1320 = vmatmul.f32.gmra.mxu0 %v1056
        %v1321 = vpop.f32.mrf.mxu0
        %v1322 = vadd.f32 0.0, %v1321
        %1323 = vmatmul.f32.gmra.mxu0 %v1059
        %v1324 = vpop.f32.mrf.mxu0
        %v1325 = vadd.f32 0.0, %v1324
        %1326 = vmatmul.f32.gmra.mxu0 %v1062
        %v1327 = vpop.f32.mrf.mxu0
        %v1328 = vadd.f32 0.0, %v1327
        %1329 = vmatmul.f32.gmra.mxu0 %v1065
        %v1330 = vpop.f32.mrf.mxu0
        %v1331 = vadd.f32 0.0, %v1330
        %1332 = vmatmul.f32.gmra.mxu0 %v1068
        %v1333 = vpop.f32.mrf.mxu0
        %v1334 = vadd.f32 0.0, %v1333
        %1335 = vmatmul.f32.gmra.mxu0 %v1071
        %v1336 = vpop.f32.mrf.mxu0
        %v1337 = vadd.f32 0.0, %v1336
        %1338 = vmatmul.f32.gmra.mxu0 %v1074
        %v1339 = vpop.f32.mrf.mxu0
        %v1340 = vadd.f32 0.0, %v1339
        %1341 = vmatmul.f32.gmra.mxu0 %v1077
        %v1342 = vpop.f32.mrf.mxu0
        %v1343 = vadd.f32 0.0, %v1342
        %1344 = vmatmul.f32.gmra.mxu0 %v1230
        %v1345 = vpop.f32.mrf.mxu0
        %v1346 = vadd.f32 0.0, %v1345
        %1347 = vmatmul.f32.gmra.mxu0 %v1233
        %v1348 = vpop.f32.mrf.mxu0
        %v1349 = vadd.f32 0.0, %v1348
        %1350 = vdwg.mxu0
        %v1351 = vadd.f32 %v1195, %v1256
        %v1352 = vadd.f32 %v1196, %v1259
        %v1353 = vadd.f32 %v1197, %v1262
        %v1354 = vadd.f32 %v1198, %v1265
        %v1355 = vadd.f32 %v1199, %v1268
        %v1356 = vadd.f32 %v1200, %v1271
        %v1357 = vadd.f32 %v1201, %v1274
        %v1358 = vadd.f32 %v1202, %v1277
        %v1359 = vadd.f32 %v1203, %v1280
        %v1360 = vadd.f32 %v1204, %v1283
        %v1361 = vadd.f32 %v1205, %v1286
        %v1362 = vadd.f32 %v1206, %v1289
        %v1363 = vadd.f32 %v1207, %v1292
        %v1364 = vadd.f32 %v1208, %v1295
        %v1365 = vadd.f32 %v1209, %v1298
        %v1366 = vadd.f32 %v1210, %v1301
        %v1367 = vadd.f32 %v1211, %v1304
        %v1368 = vadd.f32 %v1212, %v1307
        %v1369 = vadd.f32 %v1213, %v1310
        %v1370 = vadd.f32 %v1214, %v1313
        %v1371 = vadd.f32 %v1215, %v1316
        %v1372 = vadd.f32 %v1216, %v1319
        %v1373 = vadd.f32 %v1217, %v1322
        %v1374 = vadd.f32 %v1218, %v1325
        %v1375 = vadd.f32 %v1219, %v1328
        %v1376 = vadd.f32 %v1220, %v1331
        %v1377 = vadd.f32 %v1221, %v1334
        %v1378 = vadd.f32 %v1222, %v1337
        %v1379 = vadd.f32 %v1223, %v1340
        %v1380 = vadd.f32 %v1224, %v1343
        %v1381 = vadd.f32 %v1225, %v1346
        %v1382 = vadd.f32 %v1226, %v1349
        %s1383 = scalar_lea.vmem %s1, 28
        %v1384 = vld [vmem:[%s1383] sm:$0xf]
        %v1386 = vsel %vm223, %v391, 0
        %v1389 = vsel %vm223, %v392, 0
        %v1392 = vsel %vm586, %v1384, 0
        %1394 = vmatpush.msra.mxu0 0.0
        %1395 = vmatpush.msra.mxu0 0.0
        %1396 = vmatpush.msra.mxu0 0.0
        %1397 = vmatpush.msra.mxu0 0.0
        %1398 = vmatpush.msra.mxu0 0.0
        %1399 = vmatpush.msra.mxu0 0.0
        %1400 = vmatpush.msra.mxu0 0.0
        %1401 = vmatpush.msra.mxu0 0.0
        %1402 = vmatpush.msra.mxu0 0.0
        %1403 = vmatpush.msra.mxu0 0.0
        %1404 = vmatpush.msra.mxu0 0.0
        %1405 = vmatpush.msra.mxu0 0.0
        %1406 = vmatpush.msra.mxu0 0.0
        %1407 = vmatpush.msra.mxu0 0.0
        %1408 = vmatpush.msra.mxu0 0.0
        %1409 = vmatpush.msra.mxu0 %v1392
        %1410 = vmatmul.f32.gmra.mxu0 %v996
        %v1411 = vpop.f32.mrf.mxu0
        %v1412 = vadd.f32 0.0, %v1411
        %1413 = vmatmul.f32.gmra.mxu0 %v999
        %v1414 = vpop.f32.mrf.mxu0
        %v1415 = vadd.f32 0.0, %v1414
        %1416 = vmatmul.f32.gmra.mxu0 %v1002
        %v1417 = vpop.f32.mrf.mxu0
        %v1418 = vadd.f32 0.0, %v1417
        %1419 = vmatmul.f32.gmra.mxu0 %v1005
        %v1420 = vpop.f32.mrf.mxu0
        %v1421 = vadd.f32 0.0, %v1420
        %1422 = vmatmul.f32.gmra.mxu0 %v1008
        %v1423 = vpop.f32.mrf.mxu0
        %v1424 = vadd.f32 0.0, %v1423
        %1425 = vmatmul.f32.gmra.mxu0 %v1011
        %v1426 = vpop.f32.mrf.mxu0
        %v1427 = vadd.f32 0.0, %v1426
        %1428 = vmatmul.f32.gmra.mxu0 %v1014
        %v1429 = vpop.f32.mrf.mxu0
        %v1430 = vadd.f32 0.0, %v1429
        %1431 = vmatmul.f32.gmra.mxu0 %v1017
        %v1432 = vpop.f32.mrf.mxu0
        %v1433 = vadd.f32 0.0, %v1432
        %1434 = vmatmul.f32.gmra.mxu0 %v1020
        %v1435 = vpop.f32.mrf.mxu0
        %v1436 = vadd.f32 0.0, %v1435
        %1437 = vmatmul.f32.gmra.mxu0 %v1023
        %v1438 = vpop.f32.mrf.mxu0
        %v1439 = vadd.f32 0.0, %v1438
        %1440 = vmatmul.f32.gmra.mxu0 %v1026
        %v1441 = vpop.f32.mrf.mxu0
        %v1442 = vadd.f32 0.0, %v1441
        %1443 = vmatmul.f32.gmra.mxu0 %v1029
        %v1444 = vpop.f32.mrf.mxu0
        %v1445 = vadd.f32 0.0, %v1444
        %1446 = vmatmul.f32.gmra.mxu0 %v1032
        %v1447 = vpop.f32.mrf.mxu0
        %v1448 = vadd.f32 0.0, %v1447
        %1449 = vmatmul.f32.gmra.mxu0 %v1035
        %v1450 = vpop.f32.mrf.mxu0
        %v1451 = vadd.f32 0.0, %v1450
        %1452 = vmatmul.f32.gmra.mxu0 %v1038
        %v1453 = vpop.f32.mrf.mxu0
        %v1454 = vadd.f32 0.0, %v1453
        %1455 = vmatmul.f32.gmra.mxu0 %v1041
        %v1456 = vpop.f32.mrf.mxu0
        %v1457 = vadd.f32 0.0, %v1456
        %1458 = vmatmul.f32.gmra.mxu0 %v1044
        %v1459 = vpop.f32.mrf.mxu0
        %v1460 = vadd.f32 0.0, %v1459
        %1461 = vmatmul.f32.gmra.mxu0 %v1047
        %v1462 = vpop.f32.mrf.mxu0
        %v1463 = vadd.f32 0.0, %v1462
        %1464 = vmatmul.f32.gmra.mxu0 %v1050
        %v1465 = vpop.f32.mrf.mxu0
        %v1466 = vadd.f32 0.0, %v1465
        %1467 = vmatmul.f32.gmra.mxu0 %v1053
        %v1468 = vpop.f32.mrf.mxu0
        %v1469 = vadd.f32 0.0, %v1468
        %1470 = vmatmul.f32.gmra.mxu0 %v1056
        %v1471 = vpop.f32.mrf.mxu0
        %v1472 = vadd.f32 0.0, %v1471
        %1473 = vmatmul.f32.gmra.mxu0 %v1059
        %v1474 = vpop.f32.mrf.mxu0
        %v1475 = vadd.f32 0.0, %v1474
        %1476 = vmatmul.f32.gmra.mxu0 %v1062
        %v1477 = vpop.f32.mrf.mxu0
        %v1478 = vadd.f32 0.0, %v1477
        %1479 = vmatmul.f32.gmra.mxu0 %v1065
        %v1480 = vpop.f32.mrf.mxu0
        %v1481 = vadd.f32 0.0, %v1480
        %1482 = vmatmul.f32.gmra.mxu0 %v1068
        %v1483 = vpop.f32.mrf.mxu0
        %v1484 = vadd.f32 0.0, %v1483
        %1485 = vmatmul.f32.gmra.mxu0 %v1071
        %v1486 = vpop.f32.mrf.mxu0
        %v1487 = vadd.f32 0.0, %v1486
        %1488 = vmatmul.f32.gmra.mxu0 %v1074
        %v1489 = vpop.f32.mrf.mxu0
        %v1490 = vadd.f32 0.0, %v1489
        %1491 = vmatmul.f32.gmra.mxu0 %v1077
        %v1492 = vpop.f32.mrf.mxu0
        %v1493 = vadd.f32 0.0, %v1492
        %1494 = vmatmul.f32.gmra.mxu0 %v1230
        %v1495 = vpop.f32.mrf.mxu0
        %v1496 = vadd.f32 0.0, %v1495
        %1497 = vmatmul.f32.gmra.mxu0 %v1233
        %v1498 = vpop.f32.mrf.mxu0
        %v1499 = vadd.f32 0.0, %v1498
        %1500 = vmatmul.f32.gmra.mxu0 %v1386
        %v1501 = vpop.f32.mrf.mxu0
        %v1502 = vadd.f32 0.0, %v1501
        %1503 = vmatmul.f32.gmra.mxu0 %v1389
        %v1504 = vpop.f32.mrf.mxu0
        %v1505 = vadd.f32 0.0, %v1504
        %1506 = vdwg.mxu0
        %v1507 = vadd.f32 %v1351, %v1412
        %v1508 = vadd.f32 %v1352, %v1415
        %v1509 = vadd.f32 %v1353, %v1418
        %v1510 = vadd.f32 %v1354, %v1421
        %v1511 = vadd.f32 %v1355, %v1424
        %v1512 = vadd.f32 %v1356, %v1427
        %v1513 = vadd.f32 %v1357, %v1430
        %v1514 = vadd.f32 %v1358, %v1433
        %v1515 = vadd.f32 %v1359, %v1436
        %v1516 = vadd.f32 %v1360, %v1439
        %v1517 = vadd.f32 %v1361, %v1442
        %v1518 = vadd.f32 %v1362, %v1445
        %v1519 = vadd.f32 %v1363, %v1448
        %v1520 = vadd.f32 %v1364, %v1451
        %v1521 = vadd.f32 %v1365, %v1454
        %v1522 = vadd.f32 %v1366, %v1457
        %v1523 = vadd.f32 %v1367, %v1460
        %v1524 = vadd.f32 %v1368, %v1463
        %v1525 = vadd.f32 %v1369, %v1466
        %v1526 = vadd.f32 %v1370, %v1469
        %v1527 = vadd.f32 %v1371, %v1472
        %v1528 = vadd.f32 %v1372, %v1475
        %v1529 = vadd.f32 %v1373, %v1478
        %v1530 = vadd.f32 %v1374, %v1481
        %v1531 = vadd.f32 %v1375, %v1484
        %v1532 = vadd.f32 %v1376, %v1487
        %v1533 = vadd.f32 %v1377, %v1490
        %v1534 = vadd.f32 %v1378, %v1493
        %v1535 = vadd.f32 %v1379, %v1496
        %v1536 = vadd.f32 %v1380, %v1499
        %v1537 = vadd.f32 %v1381, %v1502
        %v1538 = vadd.f32 %v1382, %v1505
        %v1539 = vrot.slane %v340, 1
        %v1540 = vrot.slane %v343, 1
        %v1541 = vrot.slane %v346, 1
        %v1542 = vrot.slane %v349, 1
        %v1543 = vrot.slane %v352, 1
        %v1544 = vrot.slane %v355, 1
        %v1545 = vrot.slane %v358, 1
        %v1546 = vrot.slane %v361, 1
        %v1547 = vrot.slane %v364, 1
        %v1548 = vrot.slane %v367, 1
        %v1549 = vrot.slane %v370, 1
        %v1550 = vrot.slane %v373, 1
        %v1551 = vrot.slane %v376, 1
        %v1552 = vrot.slane %v379, 1
        %v1553 = vrot.slane %v382, 1
        %v1554 = vrot.slane %v385, 1
        %v1555 = vrot.slane %v388, 1
        %v1556 = vrot.slane %v391, 1
        %v1557 = vrot.slane %v341, 1
        %v1558 = vrot.slane %v344, 1
        %v1559 = vrot.slane %v347, 1
        %v1560 = vrot.slane %v350, 1
        %v1561 = vrot.slane %v353, 1
        %v1562 = vrot.slane %v356, 1
        %v1563 = vrot.slane %v359, 1
        %v1564 = vrot.slane %v362, 1
        %v1565 = vrot.slane %v365, 1
        %v1566 = vrot.slane %v368, 1
        %v1567 = vrot.slane %v371, 1
        %v1568 = vrot.slane %v374, 1
        %v1569 = vrot.slane %v377, 1
        %v1570 = vrot.slane %v380, 1
        %v1571 = vrot.slane %v383, 1
        %v1572 = vrot.slane %v386, 1
        %v1573 = vrot.slane %v389, 1
        %v1574 = vrot.slane %v392, 1
        %v1575 = vrot.slane %v342, 1
        %v1576 = vrot.slane %v345, 1
        %v1577 = vrot.slane %v348, 1
        %v1578 = vrot.slane %v351, 1
        %v1579 = vrot.slane %v354, 1
        %v1580 = vrot.slane %v357, 1
        %v1581 = vrot.slane %v360, 1
        %v1582 = vrot.slane %v363, 1
        %v1583 = vrot.slane %v366, 1
        %v1584 = vrot.slane %v369, 1
        %v1585 = vrot.slane %v372, 1
        %v1586 = vrot.slane %v375, 1
        %v1587 = vrot.slane %v378, 1
        %v1588 = vrot.slane %v381, 1
        %v1589 = vrot.slane %v384, 1
        %v1590 = vrot.slane %v387, 1
        %v1591 = vrot.slane %v390, 1
        %v1592 = vrot.slane %v393, 1
        %vm1593 = vcmp.lt.s32.totalorder %v449, 7
        %v1594 = vsel %vm1593, %v1557, %v1575
        %v1595 = vsel %vm1593, %v1558, %v1576
        %v1596 = vsel %vm1593, %v1559, %v1577
        %v1597 = vsel %vm1593, %v1560, %v1578
        %v1598 = vsel %vm1593, %v1561, %v1579
        %v1599 = vsel %vm1593, %v1562, %v1580
        %v1600 = vsel %vm1593, %v1563, %v1581
        %v1601 = vsel %vm1593, %v1564, %v1582
        %v1602 = vsel %vm1593, %v1565, %v1583
        %v1603 = vsel %vm1593, %v1566, %v1584
        %v1604 = vsel %vm1593, %v1567, %v1585
        %v1605 = vsel %vm1593, %v1568, %v1586
        %v1606 = vsel %vm1593, %v1569, %v1587
        %v1607 = vsel %vm1593, %v1570, %v1588
        %v1608 = vsel %vm1593, %v1571, %v1589
        %v1609 = vsel %vm1593, %v1572, %v1590
        %v1610 = vsel %vm1593, %v1573, %v1591
        %v1611 = vsel %vm1593, %v1574, %v1592
        %v1612 = vsel %vm1593, %v1539, %v1557
        %v1613 = vsel %vm1593, %v1540, %v1558
        %v1614 = vsel %vm1593, %v1541, %v1559
        %v1615 = vsel %vm1593, %v1542, %v1560
        %v1616 = vsel %vm1593, %v1543, %v1561
        %v1617 = vsel %vm1593, %v1544, %v1562
        %v1618 = vsel %vm1593, %v1545, %v1563
        %v1619 = vsel %vm1593, %v1546, %v1564
        %v1620 = vsel %vm1593, %v1547, %v1565
        %v1621 = vsel %vm1593, %v1548, %v1566
        %v1622 = vsel %vm1593, %v1549, %v1567
        %v1623 = vsel %vm1593, %v1550, %v1568
        %v1624 = vsel %vm1593, %v1551, %v1569
        %v1625 = vsel %vm1593, %v1552, %v1570
        %v1626 = vsel %vm1593, %v1553, %v1571
        %v1627 = vsel %vm1593, %v1554, %v1572
        %v1628 = vsel %vm1593, %v1555, %v1573
        %v1629 = vsel %vm1593, %v1556, %v1574
        %s1630 = scalar_lea.vmem %s1, 8
        %v1631 = vld [vmem:[%s1630] sm:$0xf]
        %v1633 = vsel %vm223, %v1612, 0
        %v1636 = vsel %vm223, %v1594, 0
        %v1639 = vsel %vm223, %v1613, 0
        %v1642 = vsel %vm223, %v1595, 0
        %v1645 = vsel %vm223, %v1614, 0
        %v1648 = vsel %vm223, %v1596, 0
        %v1651 = vsel %vm223, %v1615, 0
        %v1654 = vsel %vm223, %v1597, 0
        %v1657 = vsel %vm223, %v1616, 0
        %v1660 = vsel %vm223, %v1598, 0
        %v1663 = vsel %vm223, %v1617, 0
        %v1666 = vsel %vm223, %v1599, 0
        %v1669 = vsel %vm223, %v1618, 0
        %v1672 = vsel %vm223, %v1600, 0
        %v1675 = vsel %vm223, %v1619, 0
        %v1678 = vsel %vm223, %v1601, 0
        %v1681 = vsel %vm223, %v1620, 0
        %v1684 = vsel %vm223, %v1602, 0
        %v1687 = vsel %vm223, %v1621, 0
        %v1690 = vsel %vm223, %v1603, 0
        %v1693 = vsel %vm223, %v1622, 0
        %v1696 = vsel %vm223, %v1604, 0
        %v1699 = vsel %vm223, %v1623, 0
        %v1702 = vsel %vm223, %v1605, 0
        %v1705 = vsel %vm223, %v1624, 0
        %v1708 = vsel %vm223, %v1606, 0
        %v1711 = vsel %vm223, %v1625, 0
        %v1714 = vsel %vm223, %v1607, 0
        %v1717 = vsel %vm223, %v1626, 0
        %v1720 = vsel %vm223, %v1608, 0
        %v1723 = vsel %vm223, %v1627, 0
        %v1726 = vsel %vm223, %v1609, 0
        %v1729 = vsel %vm586, %v1631, 0
        %1731 = vmatpush.msra.mxu0 0.0
        %1732 = vmatpush.msra.mxu0 0.0
        %1733 = vmatpush.msra.mxu0 0.0
        %1734 = vmatpush.msra.mxu0 0.0
        %1735 = vmatpush.msra.mxu0 0.0
        %1736 = vmatpush.msra.mxu0 0.0
        %1737 = vmatpush.msra.mxu0 0.0
        %1738 = vmatpush.msra.mxu0 0.0
        %1739 = vmatpush.msra.mxu0 0.0
        %1740 = vmatpush.msra.mxu0 0.0
        %1741 = vmatpush.msra.mxu0 0.0
        %1742 = vmatpush.msra.mxu0 0.0
        %1743 = vmatpush.msra.mxu0 0.0
        %1744 = vmatpush.msra.mxu0 0.0
        %1745 = vmatpush.msra.mxu0 0.0
        %1746 = vmatpush.msra.mxu0 %v1729
        %1747 = vmatmul.f32.gmra.mxu0 %v1633
        %v1748 = vpop.f32.mrf.mxu0
        %v1749 = vadd.f32 0.0, %v1748
        %1750 = vmatmul.f32.gmra.mxu0 %v1636
        %v1751 = vpop.f32.mrf.mxu0
        %v1752 = vadd.f32 0.0, %v1751
        %1753 = vmatmul.f32.gmra.mxu0 %v1639
        %v1754 = vpop.f32.mrf.mxu0
        %v1755 = vadd.f32 0.0, %v1754
        %1756 = vmatmul.f32.gmra.mxu0 %v1642
        %v1757 = vpop.f32.mrf.mxu0
        %v1758 = vadd.f32 0.0, %v1757
        %1759 = vmatmul.f32.gmra.mxu0 %v1645
        %v1760 = vpop.f32.mrf.mxu0
        %v1761 = vadd.f32 0.0, %v1760
        %1762 = vmatmul.f32.gmra.mxu0 %v1648
        %v1763 = vpop.f32.mrf.mxu0
        %v1764 = vadd.f32 0.0, %v1763
        %1765 = vmatmul.f32.gmra.mxu0 %v1651
        %v1766 = vpop.f32.mrf.mxu0
        %v1767 = vadd.f32 0.0, %v1766
        %1768 = vmatmul.f32.gmra.mxu0 %v1654
        %v1769 = vpop.f32.mrf.mxu0
        %v1770 = vadd.f32 0.0, %v1769
        %1771 = vmatmul.f32.gmra.mxu0 %v1657
        %v1772 = vpop.f32.mrf.mxu0
        %v1773 = vadd.f32 0.0, %v1772
        %1774 = vmatmul.f32.gmra.mxu0 %v1660
        %v1775 = vpop.f32.mrf.mxu0
        %v1776 = vadd.f32 0.0, %v1775
        %1777 = vmatmul.f32.gmra.mxu0 %v1663
        %v1778 = vpop.f32.mrf.mxu0
        %v1779 = vadd.f32 0.0, %v1778
        %1780 = vmatmul.f32.gmra.mxu0 %v1666
        %v1781 = vpop.f32.mrf.mxu0
        %v1782 = vadd.f32 0.0, %v1781
        %1783 = vmatmul.f32.gmra.mxu0 %v1669
        %v1784 = vpop.f32.mrf.mxu0
        %v1785 = vadd.f32 0.0, %v1784
        %1786 = vmatmul.f32.gmra.mxu0 %v1672
        %v1787 = vpop.f32.mrf.mxu0
        %v1788 = vadd.f32 0.0, %v1787
        %1789 = vmatmul.f32.gmra.mxu0 %v1675
        %v1790 = vpop.f32.mrf.mxu0
        %v1791 = vadd.f32 0.0, %v1790
        %1792 = vmatmul.f32.gmra.mxu0 %v1678
        %v1793 = vpop.f32.mrf.mxu0
        %v1794 = vadd.f32 0.0, %v1793
        %1795 = vmatmul.f32.gmra.mxu0 %v1681
        %v1796 = vpop.f32.mrf.mxu0
        %v1797 = vadd.f32 0.0, %v1796
        %1798 = vmatmul.f32.gmra.mxu0 %v1684
        %v1799 = vpop.f32.mrf.mxu0
        %v1800 = vadd.f32 0.0, %v1799
        %1801 = vmatmul.f32.gmra.mxu0 %v1687
        %v1802 = vpop.f32.mrf.mxu0
        %v1803 = vadd.f32 0.0, %v1802
        %1804 = vmatmul.f32.gmra.mxu0 %v1690
        %v1805 = vpop.f32.mrf.mxu0
        %v1806 = vadd.f32 0.0, %v1805
        %1807 = vmatmul.f32.gmra.mxu0 %v1693
        %v1808 = vpop.f32.mrf.mxu0
        %v1809 = vadd.f32 0.0, %v1808
        %1810 = vmatmul.f32.gmra.mxu0 %v1696
        %v1811 = vpop.f32.mrf.mxu0
        %v1812 = vadd.f32 0.0, %v1811
        %1813 = vmatmul.f32.gmra.mxu0 %v1699
        %v1814 = vpop.f32.mrf.mxu0
        %v1815 = vadd.f32 0.0, %v1814
        %1816 = vmatmul.f32.gmra.mxu0 %v1702
        %v1817 = vpop.f32.mrf.mxu0
        %v1818 = vadd.f32 0.0, %v1817
        %1819 = vmatmul.f32.gmra.mxu0 %v1705
        %v1820 = vpop.f32.mrf.mxu0
        %v1821 = vadd.f32 0.0, %v1820
        %1822 = vmatmul.f32.gmra.mxu0 %v1708
        %v1823 = vpop.f32.mrf.mxu0
        %v1824 = vadd.f32 0.0, %v1823
        %1825 = vmatmul.f32.gmra.mxu0 %v1711
        %v1826 = vpop.f32.mrf.mxu0
        %v1827 = vadd.f32 0.0, %v1826
        %1828 = vmatmul.f32.gmra.mxu0 %v1714
        %v1829 = vpop.f32.mrf.mxu0
        %v1830 = vadd.f32 0.0, %v1829
        %1831 = vmatmul.f32.gmra.mxu0 %v1717
        %v1832 = vpop.f32.mrf.mxu0
        %v1833 = vadd.f32 0.0, %v1832
        %1834 = vmatmul.f32.gmra.mxu0 %v1720
        %v1835 = vpop.f32.mrf.mxu0
        %v1836 = vadd.f32 0.0, %v1835
        %1837 = vmatmul.f32.gmra.mxu0 %v1723
        %v1838 = vpop.f32.mrf.mxu0
        %v1839 = vadd.f32 0.0, %v1838
        %1840 = vmatmul.f32.gmra.mxu0 %v1726
        %v1841 = vpop.f32.mrf.mxu0
        %v1842 = vadd.f32 0.0, %v1841
        %1843 = vdwg.mxu0
        %v1844 = vadd.f32 %v1507, %v1749
        %v1845 = vadd.f32 %v1508, %v1752
        %v1846 = vadd.f32 %v1509, %v1755
        %v1847 = vadd.f32 %v1510, %v1758
        %v1848 = vadd.f32 %v1511, %v1761
        %v1849 = vadd.f32 %v1512, %v1764
        %v1850 = vadd.f32 %v1513, %v1767
        %v1851 = vadd.f32 %v1514, %v1770
        %v1852 = vadd.f32 %v1515, %v1773
        %v1853 = vadd.f32 %v1516, %v1776
        %v1854 = vadd.f32 %v1517, %v1779
        %v1855 = vadd.f32 %v1518, %v1782
        %v1856 = vadd.f32 %v1519, %v1785
        %v1857 = vadd.f32 %v1520, %v1788
        %v1858 = vadd.f32 %v1521, %v1791
        %v1859 = vadd.f32 %v1522, %v1794
        %v1860 = vadd.f32 %v1523, %v1797
        %v1861 = vadd.f32 %v1524, %v1800
        %v1862 = vadd.f32 %v1525, %v1803
        %v1863 = vadd.f32 %v1526, %v1806
        %v1864 = vadd.f32 %v1527, %v1809
        %v1865 = vadd.f32 %v1528, %v1812
        %v1866 = vadd.f32 %v1529, %v1815
        %v1867 = vadd.f32 %v1530, %v1818
        %v1868 = vadd.f32 %v1531, %v1821
        %v1869 = vadd.f32 %v1532, %v1824
        %v1870 = vadd.f32 %v1533, %v1827
        %v1871 = vadd.f32 %v1534, %v1830
        %v1872 = vadd.f32 %v1535, %v1833
        %v1873 = vadd.f32 %v1536, %v1836
        %v1874 = vadd.f32 %v1537, %v1839
        %v1875 = vadd.f32 %v1538, %v1842
        %s1876 = scalar_lea.vmem %s1, 20
        %v1877 = vld [vmem:[%s1876] sm:$0xf]
        %v1879 = vsel %vm223, %v1628, 0
        %v1882 = vsel %vm223, %v1610, 0
        %v1885 = vsel %vm586, %v1877, 0
        %1887 = vmatpush.msra.mxu0 0.0
        %1888 = vmatpush.msra.mxu0 0.0
        %1889 = vmatpush.msra.mxu0 0.0
        %1890 = vmatpush.msra.mxu0 0.0
        %1891 = vmatpush.msra.mxu0 0.0
        %1892 = vmatpush.msra.mxu0 0.0
        %1893 = vmatpush.msra.mxu0 0.0
        %1894 = vmatpush.msra.mxu0 0.0
        %1895 = vmatpush.msra.mxu0 0.0
        %1896 = vmatpush.msra.mxu0 0.0
        %1897 = vmatpush.msra.mxu0 0.0
        %1898 = vmatpush.msra.mxu0 0.0
        %1899 = vmatpush.msra.mxu0 0.0
        %1900 = vmatpush.msra.mxu0 0.0
        %1901 = vmatpush.msra.mxu0 0.0
        %1902 = vmatpush.msra.mxu0 %v1885
        %1903 = vmatmul.f32.gmra.mxu0 %v1639
        %v1904 = vpop.f32.mrf.mxu0
        %v1905 = vadd.f32 0.0, %v1904
        %1906 = vmatmul.f32.gmra.mxu0 %v1642
        %v1907 = vpop.f32.mrf.mxu0
        %v1908 = vadd.f32 0.0, %v1907
        %1909 = vmatmul.f32.gmra.mxu0 %v1645
        %v1910 = vpop.f32.mrf.mxu0
        %v1911 = vadd.f32 0.0, %v1910
        %1912 = vmatmul.f32.gmra.mxu0 %v1648
        %v1913 = vpop.f32.mrf.mxu0
        %v1914 = vadd.f32 0.0, %v1913
        %1915 = vmatmul.f32.gmra.mxu0 %v1651
        %v1916 = vpop.f32.mrf.mxu0
        %v1917 = vadd.f32 0.0, %v1916
        %1918 = vmatmul.f32.gmra.mxu0 %v1654
        %v1919 = vpop.f32.mrf.mxu0
        %v1920 = vadd.f32 0.0, %v1919
        %1921 = vmatmul.f32.gmra.mxu0 %v1657
        %v1922 = vpop.f32.mrf.mxu0
        %v1923 = vadd.f32 0.0, %v1922
        %1924 = vmatmul.f32.gmra.mxu0 %v1660
        %v1925 = vpop.f32.mrf.mxu0
        %v1926 = vadd.f32 0.0, %v1925
        %1927 = vmatmul.f32.gmra.mxu0 %v1663
        %v1928 = vpop.f32.mrf.mxu0
        %v1929 = vadd.f32 0.0, %v1928
        %1930 = vmatmul.f32.gmra.mxu0 %v1666
        %v1931 = vpop.f32.mrf.mxu0
        %v1932 = vadd.f32 0.0, %v1931
        %1933 = vmatmul.f32.gmra.mxu0 %v1669
        %v1934 = vpop.f32.mrf.mxu0
        %v1935 = vadd.f32 0.0, %v1934
        %1936 = vmatmul.f32.gmra.mxu0 %v1672
        %v1937 = vpop.f32.mrf.mxu0
        %v1938 = vadd.f32 0.0, %v1937
        %1939 = vmatmul.f32.gmra.mxu0 %v1675
        %v1940 = vpop.f32.mrf.mxu0
        %v1941 = vadd.f32 0.0, %v1940
        %1942 = vmatmul.f32.gmra.mxu0 %v1678
        %v1943 = vpop.f32.mrf.mxu0
        %v1944 = vadd.f32 0.0, %v1943
        %1945 = vmatmul.f32.gmra.mxu0 %v1681
        %v1946 = vpop.f32.mrf.mxu0
        %v1947 = vadd.f32 0.0, %v1946
        %1948 = vmatmul.f32.gmra.mxu0 %v1684
        %v1949 = vpop.f32.mrf.mxu0
        %v1950 = vadd.f32 0.0, %v1949
        %1951 = vmatmul.f32.gmra.mxu0 %v1687
        %v1952 = vpop.f32.mrf.mxu0
        %v1953 = vadd.f32 0.0, %v1952
        %1954 = vmatmul.f32.gmra.mxu0 %v1690
        %v1955 = vpop.f32.mrf.mxu0
        %v1956 = vadd.f32 0.0, %v1955
        %1957 = vmatmul.f32.gmra.mxu0 %v1693
        %v1958 = vpop.f32.mrf.mxu0
        %v1959 = vadd.f32 0.0, %v1958
        %1960 = vmatmul.f32.gmra.mxu0 %v1696
        %v1961 = vpop.f32.mrf.mxu0
        %v1962 = vadd.f32 0.0, %v1961
        %1963 = vmatmul.f32.gmra.mxu0 %v1699
        %v1964 = vpop.f32.mrf.mxu0
        %v1965 = vadd.f32 0.0, %v1964
        %1966 = vmatmul.f32.gmra.mxu0 %v1702
        %v1967 = vpop.f32.mrf.mxu0
        %v1968 = vadd.f32 0.0, %v1967
        %1969 = vmatmul.f32.gmra.mxu0 %v1705
        %v1970 = vpop.f32.mrf.mxu0
        %v1971 = vadd.f32 0.0, %v1970
        %1972 = vmatmul.f32.gmra.mxu0 %v1708
        %v1973 = vpop.f32.mrf.mxu0
        %v1974 = vadd.f32 0.0, %v1973
        %1975 = vmatmul.f32.gmra.mxu0 %v1711
        %v1976 = vpop.f32.mrf.mxu0
        %v1977 = vadd.f32 0.0, %v1976
        %1978 = vmatmul.f32.gmra.mxu0 %v1714
        %v1979 = vpop.f32.mrf.mxu0
        %v1980 = vadd.f32 0.0, %v1979
        %1981 = vmatmul.f32.gmra.mxu0 %v1717
        %v1982 = vpop.f32.mrf.mxu0
        %v1983 = vadd.f32 0.0, %v1982
        %1984 = vmatmul.f32.gmra.mxu0 %v1720
        %v1985 = vpop.f32.mrf.mxu0
        %v1986 = vadd.f32 0.0, %v1985
        %1987 = vmatmul.f32.gmra.mxu0 %v1723
        %v1988 = vpop.f32.mrf.mxu0
        %v1989 = vadd.f32 0.0, %v1988
        %1990 = vmatmul.f32.gmra.mxu0 %v1726
        %v1991 = vpop.f32.mrf.mxu0
        %v1992 = vadd.f32 0.0, %v1991
        %1993 = vmatmul.f32.gmra.mxu0 %v1879
        %v1994 = vpop.f32.mrf.mxu0
        %v1995 = vadd.f32 0.0, %v1994
        %1996 = vmatmul.f32.gmra.mxu0 %v1882
        %v1997 = vpop.f32.mrf.mxu0
        %v1998 = vadd.f32 0.0, %v1997
        %1999 = vdwg.mxu0
        %v2000 = vadd.f32 %v1844, %v1905
        %v2001 = vadd.f32 %v1845, %v1908
        %v2002 = vadd.f32 %v1846, %v1911
        %v2003 = vadd.f32 %v1847, %v1914
        %v2004 = vadd.f32 %v1848, %v1917
        %v2005 = vadd.f32 %v1849, %v1920
        %v2006 = vadd.f32 %v1850, %v1923
        %v2007 = vadd.f32 %v1851, %v1926
        %v2008 = vadd.f32 %v1852, %v1929
        %v2009 = vadd.f32 %v1853, %v1932
        %v2010 = vadd.f32 %v1854, %v1935
        %v2011 = vadd.f32 %v1855, %v1938
        %v2012 = vadd.f32 %v1856, %v1941
        %v2013 = vadd.f32 %v1857, %v1944
        %v2014 = vadd.f32 %v1858, %v1947
        %v2015 = vadd.f32 %v1859, %v1950
        %v2016 = vadd.f32 %v1860, %v1953
        %v2017 = vadd.f32 %v1861, %v1956
        %v2018 = vadd.f32 %v1862, %v1959
        %v2019 = vadd.f32 %v1863, %v1962
        %v2020 = vadd.f32 %v1864, %v1965
        %v2021 = vadd.f32 %v1865, %v1968
        %v2022 = vadd.f32 %v1866, %v1971
        %v2023 = vadd.f32 %v1867, %v1974
        %v2024 = vadd.f32 %v1868, %v1977
        %v2025 = vadd.f32 %v1869, %v1980
        %v2026 = vadd.f32 %v1870, %v1983
        %v2027 = vadd.f32 %v1871, %v1986
        %v2028 = vadd.f32 %v1872, %v1989
        %v2029 = vadd.f32 %v1873, %v1992
        %v2030 = vadd.f32 %v1874, %v1995
        %v2031 = vadd.f32 %v1875, %v1998
        %s2032 = scalar_lea.vmem %s1, 32
        %v2033 = vld [vmem:[%s2032] sm:$0xf]
        %v2035 = vsel %vm223, %v1629, 0
        %v2038 = vsel %vm223, %v1611, 0
        %v2041 = vsel %vm586, %v2033, 0
        %2043 = vmatpush.msra.mxu0 0.0
        %2044 = vmatpush.msra.mxu0 0.0
        %2045 = vmatpush.msra.mxu0 0.0
        %2046 = vmatpush.msra.mxu0 0.0
        %2047 = vmatpush.msra.mxu0 0.0
        %2048 = vmatpush.msra.mxu0 0.0
        %2049 = vmatpush.msra.mxu0 0.0
        %2050 = vmatpush.msra.mxu0 0.0
        %2051 = vmatpush.msra.mxu0 0.0
        %2052 = vmatpush.msra.mxu0 0.0
        %2053 = vmatpush.msra.mxu0 0.0
        %2054 = vmatpush.msra.mxu0 0.0
        %2055 = vmatpush.msra.mxu0 0.0
        %2056 = vmatpush.msra.mxu0 0.0
        %2057 = vmatpush.msra.mxu0 0.0
        %2058 = vmatpush.msra.mxu0 %v2041
        %2059 = vmatmul.f32.gmra.mxu0 %v1645
        %v2060 = vpop.f32.mrf.mxu0
        %v2061 = vadd.f32 0.0, %v2060
        %2062 = vmatmul.f32.gmra.mxu0 %v1648
        %v2063 = vpop.f32.mrf.mxu0
        %v2064 = vadd.f32 0.0, %v2063
        %2065 = vmatmul.f32.gmra.mxu0 %v1651
        %v2066 = vpop.f32.mrf.mxu0
        %v2067 = vadd.f32 0.0, %v2066
        %2068 = vmatmul.f32.gmra.mxu0 %v1654
        %v2069 = vpop.f32.mrf.mxu0
        %v2070 = vadd.f32 0.0, %v2069
        %2071 = vmatmul.f32.gmra.mxu0 %v1657
        %v2072 = vpop.f32.mrf.mxu0
        %v2073 = vadd.f32 0.0, %v2072
        %2074 = vmatmul.f32.gmra.mxu0 %v1660
        %v2075 = vpop.f32.mrf.mxu0
        %v2076 = vadd.f32 0.0, %v2075
        %2077 = vmatmul.f32.gmra.mxu0 %v1663
        %v2078 = vpop.f32.mrf.mxu0
        %v2079 = vadd.f32 0.0, %v2078
        %2080 = vmatmul.f32.gmra.mxu0 %v1666
        %v2081 = vpop.f32.mrf.mxu0
        %v2082 = vadd.f32 0.0, %v2081
        %2083 = vmatmul.f32.gmra.mxu0 %v1669
        %v2084 = vpop.f32.mrf.mxu0
        %v2085 = vadd.f32 0.0, %v2084
        %2086 = vmatmul.f32.gmra.mxu0 %v1672
        %v2087 = vpop.f32.mrf.mxu0
        %v2088 = vadd.f32 0.0, %v2087
        %2089 = vmatmul.f32.gmra.mxu0 %v1675
        %v2090 = vpop.f32.mrf.mxu0
        %v2091 = vadd.f32 0.0, %v2090
        %2092 = vmatmul.f32.gmra.mxu0 %v1678
        %v2093 = vpop.f32.mrf.mxu0
        %v2094 = vadd.f32 0.0, %v2093
        %2095 = vmatmul.f32.gmra.mxu0 %v1681
        %v2096 = vpop.f32.mrf.mxu0
        %v2097 = vadd.f32 0.0, %v2096
        %2098 = vmatmul.f32.gmra.mxu0 %v1684
        %v2099 = vpop.f32.mrf.mxu0
        %v2100 = vadd.f32 0.0, %v2099
        %2101 = vmatmul.f32.gmra.mxu0 %v1687
        %v2102 = vpop.f32.mrf.mxu0
        %v2103 = vadd.f32 0.0, %v2102
        %2104 = vmatmul.f32.gmra.mxu0 %v1690
        %v2105 = vpop.f32.mrf.mxu0
        %v2106 = vadd.f32 0.0, %v2105
        %2107 = vmatmul.f32.gmra.mxu0 %v1693
        %v2108 = vpop.f32.mrf.mxu0
        %v2109 = vadd.f32 0.0, %v2108
        %2110 = vmatmul.f32.gmra.mxu0 %v1696
        %v2111 = vpop.f32.mrf.mxu0
        %v2112 = vadd.f32 0.0, %v2111
        %2113 = vmatmul.f32.gmra.mxu0 %v1699
        %v2114 = vpop.f32.mrf.mxu0
        %v2115 = vadd.f32 0.0, %v2114
        %2116 = vmatmul.f32.gmra.mxu0 %v1702
        %v2117 = vpop.f32.mrf.mxu0
        %v2118 = vadd.f32 0.0, %v2117
        %2119 = vmatmul.f32.gmra.mxu0 %v1705
        %v2120 = vpop.f32.mrf.mxu0
        %v2121 = vadd.f32 0.0, %v2120
        %2122 = vmatmul.f32.gmra.mxu0 %v1708
        %v2123 = vpop.f32.mrf.mxu0
        %v2124 = vadd.f32 0.0, %v2123
        %2125 = vmatmul.f32.gmra.mxu0 %v1711
        %v2126 = vpop.f32.mrf.mxu0
        %v2127 = vadd.f32 0.0, %v2126
        %2128 = vmatmul.f32.gmra.mxu0 %v1714
        %v2129 = vpop.f32.mrf.mxu0
        %v2130 = vadd.f32 0.0, %v2129
        %2131 = vmatmul.f32.gmra.mxu0 %v1717
        %v2132 = vpop.f32.mrf.mxu0
        %v2133 = vadd.f32 0.0, %v2132
        %2134 = vmatmul.f32.gmra.mxu0 %v1720
        %v2135 = vpop.f32.mrf.mxu0
        %v2136 = vadd.f32 0.0, %v2135
        %2137 = vmatmul.f32.gmra.mxu0 %v1723
        %v2138 = vpop.f32.mrf.mxu0
        %v2139 = vadd.f32 0.0, %v2138
        %2140 = vmatmul.f32.gmra.mxu0 %v1726
        %v2141 = vpop.f32.mrf.mxu0
        %v2142 = vadd.f32 0.0, %v2141
        %2143 = vmatmul.f32.gmra.mxu0 %v1879
        %v2144 = vpop.f32.mrf.mxu0
        %v2145 = vadd.f32 0.0, %v2144
        %2146 = vmatmul.f32.gmra.mxu0 %v1882
        %v2147 = vpop.f32.mrf.mxu0
        %v2148 = vadd.f32 0.0, %v2147
        %2149 = vmatmul.f32.gmra.mxu0 %v2035
        %v2150 = vpop.f32.mrf.mxu0
        %v2151 = vadd.f32 0.0, %v2150
        %2152 = vmatmul.f32.gmra.mxu0 %v2038
        %v2153 = vpop.f32.mrf.mxu0
        %v2154 = vadd.f32 0.0, %v2153
        %2155 = vdwg.mxu0
        %v2156 = vadd.f32 %v2000, %v2061
        %v2157 = vadd.f32 %v2001, %v2064
        %v2158 = vadd.f32 %v2002, %v2067
        %v2159 = vadd.f32 %v2003, %v2070
        %v2160 = vadd.f32 %v2004, %v2073
        %v2161 = vadd.f32 %v2005, %v2076
        %v2162 = vadd.f32 %v2006, %v2079
        %v2163 = vadd.f32 %v2007, %v2082
        %v2164 = vadd.f32 %v2008, %v2085
        %v2165 = vadd.f32 %v2009, %v2088
        %v2166 = vadd.f32 %v2010, %v2091
        %v2167 = vadd.f32 %v2011, %v2094
        %v2168 = vadd.f32 %v2012, %v2097
        %v2169 = vadd.f32 %v2013, %v2100
        %v2170 = vadd.f32 %v2014, %v2103
        %v2171 = vadd.f32 %v2015, %v2106
        %v2172 = vadd.f32 %v2016, %v2109
        %v2173 = vadd.f32 %v2017, %v2112
        %v2174 = vadd.f32 %v2018, %v2115
        %v2175 = vadd.f32 %v2019, %v2118
        %v2176 = vadd.f32 %v2020, %v2121
        %v2177 = vadd.f32 %v2021, %v2124
        %v2178 = vadd.f32 %v2022, %v2127
        %v2179 = vadd.f32 %v2023, %v2130
        %v2180 = vadd.f32 %v2024, %v2133
        %v2181 = vadd.f32 %v2025, %v2136
        %v2182 = vadd.f32 %v2026, %v2139
        %v2183 = vadd.f32 %v2027, %v2142
        %v2184 = vadd.f32 %v2028, %v2145
        %v2185 = vadd.f32 %v2029, %v2148
        %v2186 = vadd.f32 %v2030, %v2151
        %v2187 = vadd.f32 %v2031, %v2154
        %v2188 = vld [vmem:[%s2] sm:$0x1]
        %v2190 = vperm.slane %v2188, 0
        %v2192 = vadd.f32 %v2156, %v2190
        %v2193 = vadd.f32 %v2157, %v2190
        %v2194 = vadd.f32 %v2158, %v2190
        %v2195 = vadd.f32 %v2159, %v2190
        %v2196 = vadd.f32 %v2160, %v2190
        %v2197 = vadd.f32 %v2161, %v2190
        %v2198 = vadd.f32 %v2162, %v2190
        %v2199 = vadd.f32 %v2163, %v2190
        %v2200 = vadd.f32 %v2164, %v2190
        %v2201 = vadd.f32 %v2165, %v2190
        %v2202 = vadd.f32 %v2166, %v2190
        %v2203 = vadd.f32 %v2167, %v2190
        %v2204 = vadd.f32 %v2168, %v2190
        %v2205 = vadd.f32 %v2169, %v2190
        %v2206 = vadd.f32 %v2170, %v2190
        %v2207 = vadd.f32 %v2171, %v2190
        %v2208 = vadd.f32 %v2172, %v2190
        %v2209 = vadd.f32 %v2173, %v2190
        %v2210 = vadd.f32 %v2174, %v2190
        %v2211 = vadd.f32 %v2175, %v2190
        %v2212 = vadd.f32 %v2176, %v2190
        %v2213 = vadd.f32 %v2177, %v2190
        %v2214 = vadd.f32 %v2178, %v2190
        %v2215 = vadd.f32 %v2179, %v2190
        %v2216 = vadd.f32 %v2180, %v2190
        %v2217 = vadd.f32 %v2181, %v2190
        %v2218 = vadd.f32 %v2182, %v2190
        %v2219 = vadd.f32 %v2183, %v2190
        %v2220 = vadd.f32 %v2184, %v2190
        %v2221 = vadd.f32 %v2185, %v2190
        %v2222 = vadd.f32 %v2186, %v2190
        %v2223 = vadd.f32 %v2187, %v2190
        %v2224 = vmax.f32 %v2192, 0.0
        %v2225 = vmax.f32 %v2193, 0.0
        %v2226 = vmax.f32 %v2194, 0.0
        %v2227 = vmax.f32 %v2195, 0.0
        %v2228 = vmax.f32 %v2196, 0.0
        %v2229 = vmax.f32 %v2197, 0.0
        %v2230 = vmax.f32 %v2198, 0.0
        %v2231 = vmax.f32 %v2199, 0.0
        %v2232 = vmax.f32 %v2200, 0.0
        %v2233 = vmax.f32 %v2201, 0.0
        %v2234 = vmax.f32 %v2202, 0.0
        %v2235 = vmax.f32 %v2203, 0.0
        %v2236 = vmax.f32 %v2204, 0.0
        %v2237 = vmax.f32 %v2205, 0.0
        %v2238 = vmax.f32 %v2206, 0.0
        %v2239 = vmax.f32 %v2207, 0.0
        %v2240 = vmax.f32 %v2208, 0.0
        %v2241 = vmax.f32 %v2209, 0.0
        %v2242 = vmax.f32 %v2210, 0.0
        %v2243 = vmax.f32 %v2211, 0.0
        %v2244 = vmax.f32 %v2212, 0.0
        %v2245 = vmax.f32 %v2213, 0.0
        %v2246 = vmax.f32 %v2214, 0.0
        %v2247 = vmax.f32 %v2215, 0.0
        %v2248 = vmax.f32 %v2216, 0.0
        %v2249 = vmax.f32 %v2217, 0.0
        %v2250 = vmax.f32 %v2218, 0.0
        %v2251 = vmax.f32 %v2219, 0.0
        %v2252 = vmax.f32 %v2220, 0.0
        %v2253 = vmax.f32 %v2221, 0.0
        %v2254 = vmax.f32 %v2222, 0.0
        %v2255 = vmax.f32 %v2223, 0.0
        %s2256 = scalar_lea.vmem [#allocation3], 24
        %2257 = vst.msk [vmem:[%s2256] sm:$0xff] %vm249, %v2224
        %2258 = vst.msk [vmem:[%s2256 + $0x8] sm:$0xff] %vm249, %v2225
        %2259 = vst.msk [vmem:[%s2256 + $0x18] sm:$0xff] %vm249, %v2226
        %2260 = vst.msk [vmem:[%s2256 + $0x20] sm:$0xff] %vm249, %v2227
        %2261 = vst.msk [vmem:[%s2256 + $0x30] sm:$0xff] %vm249, %v2228
        %2262 = vst.msk [vmem:[%s2256 + $0x38] sm:$0xff] %vm249, %v2229
        %2263 = vst.msk [vmem:[%s2256 + $0x48] sm:$0xff] %vm249, %v2230
        %2264 = vst.msk [vmem:[%s2256 + $0x50] sm:$0xff] %vm249, %v2231
        %2265 = vst.msk [vmem:[%s2256 + $0x60] sm:$0xff] %vm249, %v2232
        %2266 = vst.msk [vmem:[%s2256 + $0x68] sm:$0xff] %vm249, %v2233
        %2267 = vst.msk [vmem:[%s2256 + $0x78] sm:$0xff] %vm249, %v2234
        %2268 = vst.msk [vmem:[%s2256 + $0x80] sm:$0xff] %vm249, %v2235
        %2269 = vst.msk [vmem:[%s2256 + $0x90] sm:$0xff] %vm249, %v2236
        %2270 = vst.msk [vmem:[%s2256 + $0x98] sm:$0xff] %vm249, %v2237
        %2271 = vst.msk [vmem:[%s2256 + $0xa8] sm:$0xff] %vm249, %v2238
        %2272 = vst.msk [vmem:[%s2256 + $0xb0] sm:$0xff] %vm249, %v2239
        %2273 = vst.msk [vmem:[%s2256 + $0xc0] sm:$0xff] %vm249, %v2240
        %2274 = vst.msk [vmem:[%s2256 + $0xc8] sm:$0xff] %vm249, %v2241
        %2275 = vst.msk [vmem:[%s2256 + $0xd8] sm:$0xff] %vm249, %v2242
        %2276 = vst.msk [vmem:[%s2256 + $0xe0] sm:$0xff] %vm249, %v2243
        %2277 = vst.msk [vmem:[%s2256 + $0xf0] sm:$0xff] %vm249, %v2244
        %2278 = vst.msk [vmem:[%s2256 + $0xf8] sm:$0xff] %vm249, %v2245
        %2279 = vst.msk [vmem:[%s2256 + $0x108] sm:$0xff] %vm249, %v2246
        %2280 = vst.msk [vmem:[%s2256 + $0x110] sm:$0xff] %vm249, %v2247
        %2281 = vst.msk [vmem:[%s2256 + $0x120] sm:$0xff] %vm249, %v2248
        %2282 = vst.msk [vmem:[%s2256 + $0x128] sm:$0xff] %vm249, %v2249
        %2283 = vst.msk [vmem:[%s2256 + $0x138] sm:$0xff] %vm249, %v2250
        %2284 = vst.msk [vmem:[%s2256 + $0x140] sm:$0xff] %vm249, %v2251
        %2285 = vst.msk [vmem:[%s2256 + $0x150] sm:$0xff] %vm249, %v2252
        %2286 = vst.msk [vmem:[%s2256 + $0x158] sm:$0xff] %vm249, %v2253
        %2287 = vst.msk [vmem:[%s2256 + $0x168] sm:$0xff] %vm249, %v2254
        %2288 = vst.msk [vmem:[%s2256 + $0x170] sm:$0xff] %vm249, %v2255
        %v2289 = vld [vmem:[#allocation3] sm:$0xff]
        %v2290 = vld [vmem:[#allocation3 + $0x8] sm:$0xff]
        %v2291 = vld [vmem:[#allocation3 + $0x10] sm:$0xff]
        %v2292 = vld [vmem:[#allocation3 + $0x18] sm:$0xff]
        %v2293 = vld [vmem:[#allocation3 + $0x20] sm:$0xff]
        %v2294 = vld [vmem:[#allocation3 + $0x28] sm:$0xff]
        %v2295 = vld [vmem:[#allocation3 + $0x30] sm:$0xff]
        %v2296 = vld [vmem:[#allocation3 + $0x38] sm:$0xff]
        %v2297 = vld [vmem:[#allocation3 + $0x40] sm:$0xff]
        %v2298 = vld [vmem:[#allocation3 + $0x48] sm:$0xff]
        %v2299 = vld [vmem:[#allocation3 + $0x50] sm:$0xff]
        %v2300 = vld [vmem:[#allocation3 + $0x58] sm:$0xff]
        %v2301 = vld [vmem:[#allocation3 + $0x60] sm:$0xff]
        %v2302 = vld [vmem:[#allocation3 + $0x68] sm:$0xff]
        %v2303 = vld [vmem:[#allocation3 + $0x70] sm:$0xff]
        %v2304 = vld [vmem:[#allocation3 + $0x78] sm:$0xff]
        %v2305 = vld [vmem:[#allocation3 + $0x80] sm:$0xff]
        %v2306 = vld [vmem:[#allocation3 + $0x88] sm:$0xff]
        %v2307 = vld [vmem:[#allocation3 + $0x90] sm:$0xff]
        %v2308 = vld [vmem:[#allocation3 + $0x98] sm:$0xff]
        %v2309 = vld [vmem:[#allocation3 + $0xa0] sm:$0xff]
        %v2310 = vld [vmem:[#allocation3 + $0xa8] sm:$0xff]
        %v2311 = vld [vmem:[#allocation3 + $0xb0] sm:$0xff]
        %v2312 = vld [vmem:[#allocation3 + $0xb8] sm:$0xff]
        %v2313 = vld [vmem:[#allocation3 + $0xc0] sm:$0xff]
        %v2314 = vld [vmem:[#allocation3 + $0xc8] sm:$0xff]
        %v2315 = vld [vmem:[#allocation3 + $0xd0] sm:$0xff]
        %v2316 = vld [vmem:[#allocation3 + $0xd8] sm:$0xff]
        %v2317 = vld [vmem:[#allocation3 + $0xe0] sm:$0xff]
        %v2318 = vld [vmem:[#allocation3 + $0xe8] sm:$0xff]
        %v2319 = vld [vmem:[#allocation3 + $0xf0] sm:$0xff]
        %v2320 = vld [vmem:[#allocation3 + $0xf8] sm:$0xff]
        %v2321 = vld [vmem:[#allocation3 + $0x100] sm:$0xff]
        %v2322 = vld [vmem:[#allocation3 + $0x108] sm:$0xff]
        %v2323 = vld [vmem:[#allocation3 + $0x110] sm:$0xff]
        %v2324 = vld [vmem:[#allocation3 + $0x118] sm:$0xff]
        %v2325 = vld [vmem:[#allocation3 + $0x120] sm:$0xff]
        %v2326 = vld [vmem:[#allocation3 + $0x128] sm:$0xff]
        %v2327 = vld [vmem:[#allocation3 + $0x130] sm:$0xff]
        %v2328 = vld [vmem:[#allocation3 + $0x138] sm:$0xff]
        %v2329 = vld [vmem:[#allocation3 + $0x140] sm:$0xff]
        %v2330 = vld [vmem:[#allocation3 + $0x148] sm:$0xff]
        %v2331 = vld [vmem:[#allocation3 + $0x150] sm:$0xff]
        %v2332 = vld [vmem:[#allocation3 + $0x158] sm:$0xff]
        %v2333 = vld [vmem:[#allocation3 + $0x160] sm:$0xff]
        %v2334 = vld [vmem:[#allocation3 + $0x168] sm:$0xff]
        %v2335 = vld [vmem:[#allocation3 + $0x170] sm:$0xff]
        %v2336 = vld [vmem:[#allocation3 + $0x178] sm:$0xff]
        %v2337 = vld [vmem:[#allocation3 + $0x180] sm:$0xff]
        %v2338 = vld [vmem:[#allocation3 + $0x188] sm:$0xff]
        %v2339 = vld [vmem:[#allocation3 + $0x190] sm:$0xff]
        %v2340 = vld [vmem:[#allocation3 + $0x198] sm:$0xff]
        %v2341 = vld [vmem:[#allocation3 + $0x1a0] sm:$0xff]
        %v2342 = vld [vmem:[#allocation3 + $0x1a8] sm:$0xff]
        %v2343 = vrot.slane %v2289, 7
        %v2344 = vrot.slane %v2292, 7
        %v2345 = vrot.slane %v2295, 7
        %v2346 = vrot.slane %v2298, 7
        %v2347 = vrot.slane %v2301, 7
        %v2348 = vrot.slane %v2304, 7
        %v2349 = vrot.slane %v2307, 7
        %v2350 = vrot.slane %v2310, 7
        %v2351 = vrot.slane %v2313, 7
        %v2352 = vrot.slane %v2316, 7
        %v2353 = vrot.slane %v2319, 7
        %v2354 = vrot.slane %v2322, 7
        %v2355 = vrot.slane %v2325, 7
        %v2356 = vrot.slane %v2328, 7
        %v2357 = vrot.slane %v2331, 7
        %v2358 = vrot.slane %v2334, 7
        %v2359 = vrot.slane %v2337, 7
        %v2360 = vrot.slane %v2340, 7
        %v2361 = vrot.slane %v2290, 7
        %v2362 = vrot.slane %v2293, 7
        %v2363 = vrot.slane %v2296, 7
        %v2364 = vrot.slane %v2299, 7
        %v2365 = vrot.slane %v2302, 7
        %v2366 = vrot.slane %v2305, 7
        %v2367 = vrot.slane %v2308, 7
        %v2368 = vrot.slane %v2311, 7
        %v2369 = vrot.slane %v2314, 7
        %v2370 = vrot.slane %v2317, 7
        %v2371 = vrot.slane %v2320, 7
        %v2372 = vrot.slane %v2323, 7
        %v2373 = vrot.slane %v2326, 7
        %v2374 = vrot.slane %v2329, 7
        %v2375 = vrot.slane %v2332, 7
        %v2376 = vrot.slane %v2335, 7
        %v2377 = vrot.slane %v2338, 7
        %v2378 = vrot.slane %v2341, 7
        %v2379 = vrot.slane %v2291, 7
        %v2380 = vrot.slane %v2294, 7
        %v2381 = vrot.slane %v2297, 7
        %v2382 = vrot.slane %v2300, 7
        %v2383 = vrot.slane %v2303, 7
        %v2384 = vrot.slane %v2306, 7
        %v2385 = vrot.slane %v2309, 7
        %v2386 = vrot.slane %v2312, 7
        %v2387 = vrot.slane %v2315, 7
        %v2388 = vrot.slane %v2318, 7
        %v2389 = vrot.slane %v2321, 7
        %v2390 = vrot.slane %v2324, 7
        %v2391 = vrot.slane %v2327, 7
        %v2392 = vrot.slane %v2330, 7
        %v2393 = vrot.slane %v2333, 7
        %v2394 = vrot.slane %v2336, 7
        %v2395 = vrot.slane %v2339, 7
        %v2396 = vrot.slane %v2342, 7
        %v2397 = vsel %vm450, %v2343, %v2361
        %v2398 = vsel %vm450, %v2344, %v2362
        %v2399 = vsel %vm450, %v2345, %v2363
        %v2400 = vsel %vm450, %v2346, %v2364
        %v2401 = vsel %vm450, %v2347, %v2365
        %v2402 = vsel %vm450, %v2348, %v2366
        %v2403 = vsel %vm450, %v2349, %v2367
        %v2404 = vsel %vm450, %v2350, %v2368
        %v2405 = vsel %vm450, %v2351, %v2369
        %v2406 = vsel %vm450, %v2352, %v2370
        %v2407 = vsel %vm450, %v2353, %v2371
        %v2408 = vsel %vm450, %v2354, %v2372
        %v2409 = vsel %vm450, %v2355, %v2373
        %v2410 = vsel %vm450, %v2356, %v2374
        %v2411 = vsel %vm450, %v2357, %v2375
        %v2412 = vsel %vm450, %v2358, %v2376
        %v2413 = vsel %vm450, %v2359, %v2377
        %v2414 = vsel %vm450, %v2360, %v2378
        %v2415 = vsel %vm450, %v2379, %v2343
        %v2416 = vsel %vm450, %v2380, %v2344
        %v2417 = vsel %vm450, %v2381, %v2345
        %v2418 = vsel %vm450, %v2382, %v2346
        %v2419 = vsel %vm450, %v2383, %v2347
        %v2420 = vsel %vm450, %v2384, %v2348
        %v2421 = vsel %vm450, %v2385, %v2349
        %v2422 = vsel %vm450, %v2386, %v2350
        %v2423 = vsel %vm450, %v2387, %v2351
        %v2424 = vsel %vm450, %v2388, %v2352
        %v2425 = vsel %vm450, %v2389, %v2353
        %v2426 = vsel %vm450, %v2390, %v2354
        %v2427 = vsel %vm450, %v2391, %v2355
        %v2428 = vsel %vm450, %v2392, %v2356
        %v2429 = vsel %vm450, %v2393, %v2357
        %v2430 = vsel %vm450, %v2394, %v2358
        %v2431 = vsel %vm450, %v2395, %v2359
        %v2432 = vsel %vm450, %v2396, %v2360
        %v2433 = vld [vmem:[%s3] sm:$0xff]
        %s2434 = scalar_lea.vmem %s3, 24
        %v2435 = vld [vmem:[%s2434] sm:$0xff]
        %v2437 = vsel %vm249, %v2416, 0
        %v2440 = vsel %vm249, %v2398, 0
        %v2443 = vsel %vm249, %v2417, 0
        %v2446 = vsel %vm249, %v2399, 0
        %v2449 = vsel %vm249, %v2418, 0
        %v2452 = vsel %vm249, %v2400, 0
        %v2455 = vsel %vm249, %v2419, 0
        %v2458 = vsel %vm249, %v2401, 0
        %v2461 = vsel %vm249, %v2420, 0
        %v2464 = vsel %vm249, %v2402, 0
        %v2467 = vsel %vm249, %v2421, 0
        %v2470 = vsel %vm249, %v2403, 0
        %v2473 = vsel %vm249, %v2422, 0
        %v2476 = vsel %vm249, %v2404, 0
        %v2479 = vsel %vm249, %v2423, 0
        %v2482 = vsel %vm249, %v2405, 0
        %v2485 = vsel %vm249, %v2424, 0
        %v2488 = vsel %vm249, %v2406, 0
        %v2491 = vsel %vm249, %v2425, 0
        %v2494 = vsel %vm249, %v2407, 0
        %v2497 = vsel %vm249, %v2426, 0
        %v2500 = vsel %vm249, %v2408, 0
        %v2503 = vsel %vm249, %v2427, 0
        %v2506 = vsel %vm249, %v2409, 0
        %v2509 = vsel %vm249, %v2428, 0
        %v2512 = vsel %vm249, %v2410, 0
        %v2515 = vsel %vm249, %v2429, 0
        %v2518 = vsel %vm249, %v2411, 0
        %v2521 = vsel %vm249, %v2430, 0
        %v2524 = vsel %vm249, %v2412, 0
        %v2527 = vsel %vm249, %v2431, 0
        %v2530 = vsel %vm249, %v2413, 0
        %2532 = vmatpush.msra.mxu0 0.0
        %2533 = vmatpush.msra.mxu0 0.0
        %2534 = vmatpush.msra.mxu0 0.0
        %2535 = vmatpush.msra.mxu0 0.0
        %2536 = vmatpush.msra.mxu0 0.0
        %2537 = vmatpush.msra.mxu0 0.0
        %2538 = vmatpush.msra.mxu0 0.0
        %2539 = vmatpush.msra.mxu0 0.0
        %2540 = vmatpush.msra.mxu0 0.0
        %2541 = vmatpush.msra.mxu0 0.0
        %2542 = vmatpush.msra.mxu0 0.0
        %2543 = vmatpush.msra.mxu0 0.0
        %2544 = vmatpush.msra.mxu0 0.0
        %2545 = vmatpush.msra.mxu0 0.0
        %2546 = vmatpush.msra.mxu0 0.0
        %2547 = vmatpush.msra.mxu0 %v2435
        %2548 = vmatmul.f32.gmra.mxu0 %v2437
        %v2549 = vpop.f32.mrf.mxu0
        %v2550 = vadd.f32 0.0, %v2549
        %2551 = vmatmul.f32.gmra.mxu0 %v2440
        %v2552 = vpop.f32.mrf.mxu0
        %v2553 = vadd.f32 0.0, %v2552
        %2554 = vmatmul.f32.gmra.mxu0 %v2443
        %v2555 = vpop.f32.mrf.mxu0
        %v2556 = vadd.f32 0.0, %v2555
        %2557 = vmatmul.f32.gmra.mxu0 %v2446
        %v2558 = vpop.f32.mrf.mxu0
        %v2559 = vadd.f32 0.0, %v2558
        %2560 = vmatmul.f32.gmra.mxu0 %v2449
        %v2561 = vpop.f32.mrf.mxu0
        %v2562 = vadd.f32 0.0, %v2561
        %2563 = vmatmul.f32.gmra.mxu0 %v2452
        %v2564 = vpop.f32.mrf.mxu0
        %v2565 = vadd.f32 0.0, %v2564
        %2566 = vmatmul.f32.gmra.mxu0 %v2455
        %v2567 = vpop.f32.mrf.mxu0
        %v2568 = vadd.f32 0.0, %v2567
        %2569 = vmatmul.f32.gmra.mxu0 %v2458
        %v2570 = vpop.f32.mrf.mxu0
        %v2571 = vadd.f32 0.0, %v2570
        %2572 = vmatmul.f32.gmra.mxu0 %v2461
        %v2573 = vpop.f32.mrf.mxu0
        %v2574 = vadd.f32 0.0, %v2573
        %2575 = vmatmul.f32.gmra.mxu0 %v2464
        %v2576 = vpop.f32.mrf.mxu0
        %v2577 = vadd.f32 0.0, %v2576
        %2578 = vmatmul.f32.gmra.mxu0 %v2467
        %v2579 = vpop.f32.mrf.mxu0
        %v2580 = vadd.f32 0.0, %v2579
        %2581 = vmatmul.f32.gmra.mxu0 %v2470
        %v2582 = vpop.f32.mrf.mxu0
        %v2583 = vadd.f32 0.0, %v2582
        %2584 = vmatmul.f32.gmra.mxu0 %v2473
        %v2585 = vpop.f32.mrf.mxu0
        %v2586 = vadd.f32 0.0, %v2585
        %2587 = vmatmul.f32.gmra.mxu0 %v2476
        %v2588 = vpop.f32.mrf.mxu0
        %v2589 = vadd.f32 0.0, %v2588
        %2590 = vmatmul.f32.gmra.mxu0 %v2479
        %v2591 = vpop.f32.mrf.mxu0
        %v2592 = vadd.f32 0.0, %v2591
        %2593 = vmatmul.f32.gmra.mxu0 %v2482
        %v2594 = vpop.f32.mrf.mxu0
        %v2595 = vadd.f32 0.0, %v2594
        %2596 = vmatmul.f32.gmra.mxu0 %v2485
        %v2597 = vpop.f32.mrf.mxu0
        %v2598 = vadd.f32 0.0, %v2597
        %2599 = vmatmul.f32.gmra.mxu0 %v2488
        %v2600 = vpop.f32.mrf.mxu0
        %v2601 = vadd.f32 0.0, %v2600
        %2602 = vmatmul.f32.gmra.mxu0 %v2491
        %v2603 = vpop.f32.mrf.mxu0
        %v2604 = vadd.f32 0.0, %v2603
        %2605 = vmatmul.f32.gmra.mxu0 %v2494
        %v2606 = vpop.f32.mrf.mxu0
        %v2607 = vadd.f32 0.0, %v2606
        %2608 = vmatmul.f32.gmra.mxu0 %v2497
        %v2609 = vpop.f32.mrf.mxu0
        %v2610 = vadd.f32 0.0, %v2609
        %2611 = vmatmul.f32.gmra.mxu0 %v2500
        %v2612 = vpop.f32.mrf.mxu0
        %v2613 = vadd.f32 0.0, %v2612
        %2614 = vmatmul.f32.gmra.mxu0 %v2503
        %v2615 = vpop.f32.mrf.mxu0
        %v2616 = vadd.f32 0.0, %v2615
        %2617 = vmatmul.f32.gmra.mxu0 %v2506
        %v2618 = vpop.f32.mrf.mxu0
        %v2619 = vadd.f32 0.0, %v2618
        %2620 = vmatmul.f32.gmra.mxu0 %v2509
        %v2621 = vpop.f32.mrf.mxu0
        %v2622 = vadd.f32 0.0, %v2621
        %2623 = vmatmul.f32.gmra.mxu0 %v2512
        %v2624 = vpop.f32.mrf.mxu0
        %v2625 = vadd.f32 0.0, %v2624
        %2626 = vmatmul.f32.gmra.mxu0 %v2515
        %v2627 = vpop.f32.mrf.mxu0
        %v2628 = vadd.f32 0.0, %v2627
        %2629 = vmatmul.f32.gmra.mxu0 %v2518
        %v2630 = vpop.f32.mrf.mxu0
        %v2631 = vadd.f32 0.0, %v2630
        %2632 = vmatmul.f32.gmra.mxu0 %v2521
        %v2633 = vpop.f32.mrf.mxu0
        %v2634 = vadd.f32 0.0, %v2633
        %2635 = vmatmul.f32.gmra.mxu0 %v2524
        %v2636 = vpop.f32.mrf.mxu0
        %v2637 = vadd.f32 0.0, %v2636
        %2638 = vmatmul.f32.gmra.mxu0 %v2527
        %v2639 = vpop.f32.mrf.mxu0
        %v2640 = vadd.f32 0.0, %v2639
        %2641 = vmatmul.f32.gmra.mxu0 %v2530
        %v2642 = vpop.f32.mrf.mxu0
        %v2643 = vadd.f32 0.0, %v2642
        %2644 = vdwg.mxu0
        %v2646 = vsel %vm249, %v2415, 0
        %v2649 = vsel %vm249, %v2397, 0
        %2651 = vmatpush.msra.mxu0 0.0
        %2652 = vmatpush.msra.mxu0 0.0
        %2653 = vmatpush.msra.mxu0 0.0
        %2654 = vmatpush.msra.mxu0 0.0
        %2655 = vmatpush.msra.mxu0 0.0
        %2656 = vmatpush.msra.mxu0 0.0
        %2657 = vmatpush.msra.mxu0 0.0
        %2658 = vmatpush.msra.mxu0 0.0
        %2659 = vmatpush.msra.mxu0 0.0
        %2660 = vmatpush.msra.mxu0 0.0
        %2661 = vmatpush.msra.mxu0 0.0
        %2662 = vmatpush.msra.mxu0 0.0
        %2663 = vmatpush.msra.mxu0 0.0
        %2664 = vmatpush.msra.mxu0 0.0
        %2665 = vmatpush.msra.mxu0 0.0
        %2666 = vmatpush.msra.mxu0 %v2433
        %2667 = vmatmul.f32.gmra.mxu0 %v2646
        %v2668 = vpop.f32.mrf.mxu0
        %v2669 = vadd.f32 %v2550, %v2668
        %2670 = vmatmul.f32.gmra.mxu0 %v2649
        %v2671 = vpop.f32.mrf.mxu0
        %v2672 = vadd.f32 %v2553, %v2671
        %2673 = vmatmul.f32.gmra.mxu0 %v2437
        %v2674 = vpop.f32.mrf.mxu0
        %v2675 = vadd.f32 %v2556, %v2674
        %2676 = vmatmul.f32.gmra.mxu0 %v2440
        %v2677 = vpop.f32.mrf.mxu0
        %v2678 = vadd.f32 %v2559, %v2677
        %2679 = vmatmul.f32.gmra.mxu0 %v2443
        %v2680 = vpop.f32.mrf.mxu0
        %v2681 = vadd.f32 %v2562, %v2680
        %2682 = vmatmul.f32.gmra.mxu0 %v2446
        %v2683 = vpop.f32.mrf.mxu0
        %v2684 = vadd.f32 %v2565, %v2683
        %2685 = vmatmul.f32.gmra.mxu0 %v2449
        %v2686 = vpop.f32.mrf.mxu0
        %v2687 = vadd.f32 %v2568, %v2686
        %2688 = vmatmul.f32.gmra.mxu0 %v2452
        %v2689 = vpop.f32.mrf.mxu0
        %v2690 = vadd.f32 %v2571, %v2689
        %2691 = vmatmul.f32.gmra.mxu0 %v2455
        %v2692 = vpop.f32.mrf.mxu0
        %v2693 = vadd.f32 %v2574, %v2692
        %2694 = vmatmul.f32.gmra.mxu0 %v2458
        %v2695 = vpop.f32.mrf.mxu0
        %v2696 = vadd.f32 %v2577, %v2695
        %2697 = vmatmul.f32.gmra.mxu0 %v2461
        %v2698 = vpop.f32.mrf.mxu0
        %v2699 = vadd.f32 %v2580, %v2698
        %2700 = vmatmul.f32.gmra.mxu0 %v2464
        %v2701 = vpop.f32.mrf.mxu0
        %v2702 = vadd.f32 %v2583, %v2701
        %2703 = vmatmul.f32.gmra.mxu0 %v2467
        %v2704 = vpop.f32.mrf.mxu0
        %v2705 = vadd.f32 %v2586, %v2704
        %2706 = vmatmul.f32.gmra.mxu0 %v2470
        %v2707 = vpop.f32.mrf.mxu0
        %v2708 = vadd.f32 %v2589, %v2707
        %2709 = vmatmul.f32.gmra.mxu0 %v2473
        %v2710 = vpop.f32.mrf.mxu0
        %v2711 = vadd.f32 %v2592, %v2710
        %2712 = vmatmul.f32.gmra.mxu0 %v2476
        %v2713 = vpop.f32.mrf.mxu0
        %v2714 = vadd.f32 %v2595, %v2713
        %2715 = vmatmul.f32.gmra.mxu0 %v2479
        %v2716 = vpop.f32.mrf.mxu0
        %v2717 = vadd.f32 %v2598, %v2716
        %2718 = vmatmul.f32.gmra.mxu0 %v2482
        %v2719 = vpop.f32.mrf.mxu0
        %v2720 = vadd.f32 %v2601, %v2719
        %2721 = vmatmul.f32.gmra.mxu0 %v2485
        %v2722 = vpop.f32.mrf.mxu0
        %v2723 = vadd.f32 %v2604, %v2722
        %2724 = vmatmul.f32.gmra.mxu0 %v2488
        %v2725 = vpop.f32.mrf.mxu0
        %v2726 = vadd.f32 %v2607, %v2725
        %2727 = vmatmul.f32.gmra.mxu0 %v2491
        %v2728 = vpop.f32.mrf.mxu0
        %v2729 = vadd.f32 %v2610, %v2728
        %2730 = vmatmul.f32.gmra.mxu0 %v2494
        %v2731 = vpop.f32.mrf.mxu0
        %v2732 = vadd.f32 %v2613, %v2731
        %2733 = vmatmul.f32.gmra.mxu0 %v2497
        %v2734 = vpop.f32.mrf.mxu0
        %v2735 = vadd.f32 %v2616, %v2734
        %2736 = vmatmul.f32.gmra.mxu0 %v2500
        %v2737 = vpop.f32.mrf.mxu0
        %v2738 = vadd.f32 %v2619, %v2737
        %2739 = vmatmul.f32.gmra.mxu0 %v2503
        %v2740 = vpop.f32.mrf.mxu0
        %v2741 = vadd.f32 %v2622, %v2740
        %2742 = vmatmul.f32.gmra.mxu0 %v2506
        %v2743 = vpop.f32.mrf.mxu0
        %v2744 = vadd.f32 %v2625, %v2743
        %2745 = vmatmul.f32.gmra.mxu0 %v2509
        %v2746 = vpop.f32.mrf.mxu0
        %v2747 = vadd.f32 %v2628, %v2746
        %2748 = vmatmul.f32.gmra.mxu0 %v2512
        %v2749 = vpop.f32.mrf.mxu0
        %v2750 = vadd.f32 %v2631, %v2749
        %2751 = vmatmul.f32.gmra.mxu0 %v2515
        %v2752 = vpop.f32.mrf.mxu0
        %v2753 = vadd.f32 %v2634, %v2752
        %2754 = vmatmul.f32.gmra.mxu0 %v2518
        %v2755 = vpop.f32.mrf.mxu0
        %v2756 = vadd.f32 %v2637, %v2755
        %2757 = vmatmul.f32.gmra.mxu0 %v2521
        %v2758 = vpop.f32.mrf.mxu0
        %v2759 = vadd.f32 %v2640, %v2758
        %2760 = vmatmul.f32.gmra.mxu0 %v2524
        %v2761 = vpop.f32.mrf.mxu0
        %v2762 = vadd.f32 %v2643, %v2761
        %2763 = vdwg.mxu0
        %s2764 = scalar_lea.vmem %s3, 48
        %v2765 = vld [vmem:[%s2764] sm:$0xff]
        %v2767 = vsel %vm249, %v2432, 0
        %v2770 = vsel %vm249, %v2414, 0
        %2772 = vmatpush.msra.mxu0 0.0
        %2773 = vmatpush.msra.mxu0 0.0
        %2774 = vmatpush.msra.mxu0 0.0
        %2775 = vmatpush.msra.mxu0 0.0
        %2776 = vmatpush.msra.mxu0 0.0
        %2777 = vmatpush.msra.mxu0 0.0
        %2778 = vmatpush.msra.mxu0 0.0
        %2779 = vmatpush.msra.mxu0 0.0
        %2780 = vmatpush.msra.mxu0 0.0
        %2781 = vmatpush.msra.mxu0 0.0
        %2782 = vmatpush.msra.mxu0 0.0
        %2783 = vmatpush.msra.mxu0 0.0
        %2784 = vmatpush.msra.mxu0 0.0
        %2785 = vmatpush.msra.mxu0 0.0
        %2786 = vmatpush.msra.mxu0 0.0
        %2787 = vmatpush.msra.mxu0 %v2765
        %2788 = vmatmul.f32.gmra.mxu0 %v2443
        %v2789 = vpop.f32.mrf.mxu0
        %v2790 = vadd.f32 0.0, %v2789
        %2791 = vmatmul.f32.gmra.mxu0 %v2446
        %v2792 = vpop.f32.mrf.mxu0
        %v2793 = vadd.f32 0.0, %v2792
        %2794 = vmatmul.f32.gmra.mxu0 %v2449
        %v2795 = vpop.f32.mrf.mxu0
        %v2796 = vadd.f32 0.0, %v2795
        %2797 = vmatmul.f32.gmra.mxu0 %v2452
        %v2798 = vpop.f32.mrf.mxu0
        %v2799 = vadd.f32 0.0, %v2798
        %2800 = vmatmul.f32.gmra.mxu0 %v2455
        %v2801 = vpop.f32.mrf.mxu0
        %v2802 = vadd.f32 0.0, %v2801
        %2803 = vmatmul.f32.gmra.mxu0 %v2458
        %v2804 = vpop.f32.mrf.mxu0
        %v2805 = vadd.f32 0.0, %v2804
        %2806 = vmatmul.f32.gmra.mxu0 %v2461
        %v2807 = vpop.f32.mrf.mxu0
        %v2808 = vadd.f32 0.0, %v2807
        %2809 = vmatmul.f32.gmra.mxu0 %v2464
        %v2810 = vpop.f32.mrf.mxu0
        %v2811 = vadd.f32 0.0, %v2810
        %2812 = vmatmul.f32.gmra.mxu0 %v2467
        %v2813 = vpop.f32.mrf.mxu0
        %v2814 = vadd.f32 0.0, %v2813
        %2815 = vmatmul.f32.gmra.mxu0 %v2470
        %v2816 = vpop.f32.mrf.mxu0
        %v2817 = vadd.f32 0.0, %v2816
        %2818 = vmatmul.f32.gmra.mxu0 %v2473
        %v2819 = vpop.f32.mrf.mxu0
        %v2820 = vadd.f32 0.0, %v2819
        %2821 = vmatmul.f32.gmra.mxu0 %v2476
        %v2822 = vpop.f32.mrf.mxu0
        %v2823 = vadd.f32 0.0, %v2822
        %2824 = vmatmul.f32.gmra.mxu0 %v2479
        %v2825 = vpop.f32.mrf.mxu0
        %v2826 = vadd.f32 0.0, %v2825
        %2827 = vmatmul.f32.gmra.mxu0 %v2482
        %v2828 = vpop.f32.mrf.mxu0
        %v2829 = vadd.f32 0.0, %v2828
        %2830 = vmatmul.f32.gmra.mxu0 %v2485
        %v2831 = vpop.f32.mrf.mxu0
        %v2832 = vadd.f32 0.0, %v2831
        %2833 = vmatmul.f32.gmra.mxu0 %v2488
        %v2834 = vpop.f32.mrf.mxu0
        %v2835 = vadd.f32 0.0, %v2834
        %2836 = vmatmul.f32.gmra.mxu0 %v2491
        %v2837 = vpop.f32.mrf.mxu0
        %v2838 = vadd.f32 0.0, %v2837
        %2839 = vmatmul.f32.gmra.mxu0 %v2494
        %v2840 = vpop.f32.mrf.mxu0
        %v2841 = vadd.f32 0.0, %v2840
        %2842 = vmatmul.f32.gmra.mxu0 %v2497
        %v2843 = vpop.f32.mrf.mxu0
        %v2844 = vadd.f32 0.0, %v2843
        %2845 = vmatmul.f32.gmra.mxu0 %v2500
        %v2846 = vpop.f32.mrf.mxu0
        %v2847 = vadd.f32 0.0, %v2846
        %2848 = vmatmul.f32.gmra.mxu0 %v2503
        %v2849 = vpop.f32.mrf.mxu0
        %v2850 = vadd.f32 0.0, %v2849
        %2851 = vmatmul.f32.gmra.mxu0 %v2506
        %v2852 = vpop.f32.mrf.mxu0
        %v2853 = vadd.f32 0.0, %v2852
        %2854 = vmatmul.f32.gmra.mxu0 %v2509
        %v2855 = vpop.f32.mrf.mxu0
        %v2856 = vadd.f32 0.0, %v2855
        %2857 = vmatmul.f32.gmra.mxu0 %v2512
        %v2858 = vpop.f32.mrf.mxu0
        %v2859 = vadd.f32 0.0, %v2858
        %2860 = vmatmul.f32.gmra.mxu0 %v2515
        %v2861 = vpop.f32.mrf.mxu0
        %v2862 = vadd.f32 0.0, %v2861
        %2863 = vmatmul.f32.gmra.mxu0 %v2518
        %v2864 = vpop.f32.mrf.mxu0
        %v2865 = vadd.f32 0.0, %v2864
        %2866 = vmatmul.f32.gmra.mxu0 %v2521
        %v2867 = vpop.f32.mrf.mxu0
        %v2868 = vadd.f32 0.0, %v2867
        %2869 = vmatmul.f32.gmra.mxu0 %v2524
        %v2870 = vpop.f32.mrf.mxu0
        %v2871 = vadd.f32 0.0, %v2870
        %2872 = vmatmul.f32.gmra.mxu0 %v2527
        %v2873 = vpop.f32.mrf.mxu0
        %v2874 = vadd.f32 0.0, %v2873
        %2875 = vmatmul.f32.gmra.mxu0 %v2530
        %v2876 = vpop.f32.mrf.mxu0
        %v2877 = vadd.f32 0.0, %v2876
        %2878 = vmatmul.f32.gmra.mxu0 %v2767
        %v2879 = vpop.f32.mrf.mxu0
        %v2880 = vadd.f32 0.0, %v2879
        %2881 = vmatmul.f32.gmra.mxu0 %v2770
        %v2882 = vpop.f32.mrf.mxu0
        %v2883 = vadd.f32 0.0, %v2882
        %2884 = vdwg.mxu0
        %v2885 = vadd.f32 %v2669, %v2790
        %v2886 = vadd.f32 %v2672, %v2793
        %v2887 = vadd.f32 %v2675, %v2796
        %v2888 = vadd.f32 %v2678, %v2799
        %v2889 = vadd.f32 %v2681, %v2802
        %v2890 = vadd.f32 %v2684, %v2805
        %v2891 = vadd.f32 %v2687, %v2808
        %v2892 = vadd.f32 %v2690, %v2811
        %v2893 = vadd.f32 %v2693, %v2814
        %v2894 = vadd.f32 %v2696, %v2817
        %v2895 = vadd.f32 %v2699, %v2820
        %v2896 = vadd.f32 %v2702, %v2823
        %v2897 = vadd.f32 %v2705, %v2826
        %v2898 = vadd.f32 %v2708, %v2829
        %v2899 = vadd.f32 %v2711, %v2832
        %v2900 = vadd.f32 %v2714, %v2835
        %v2901 = vadd.f32 %v2717, %v2838
        %v2902 = vadd.f32 %v2720, %v2841
        %v2903 = vadd.f32 %v2723, %v2844
        %v2904 = vadd.f32 %v2726, %v2847
        %v2905 = vadd.f32 %v2729, %v2850
        %v2906 = vadd.f32 %v2732, %v2853
        %v2907 = vadd.f32 %v2735, %v2856
        %v2908 = vadd.f32 %v2738, %v2859
        %v2909 = vadd.f32 %v2741, %v2862
        %v2910 = vadd.f32 %v2744, %v2865
        %v2911 = vadd.f32 %v2747, %v2868
        %v2912 = vadd.f32 %v2750, %v2871
        %v2913 = vadd.f32 %v2753, %v2874
        %v2914 = vadd.f32 %v2756, %v2877
        %v2915 = vadd.f32 %v2759, %v2880
        %v2916 = vadd.f32 %v2762, %v2883
        %s2917 = scalar_lea.vmem %s3, 8
        %v2918 = vld [vmem:[%s2917] sm:$0xff]
        %v2920 = vsel %vm249, %v2289, 0
        %v2923 = vsel %vm249, %v2290, 0
        %v2926 = vsel %vm249, %v2292, 0
        %v2929 = vsel %vm249, %v2293, 0
        %v2932 = vsel %vm249, %v2295, 0
        %v2935 = vsel %vm249, %v2296, 0
        %v2938 = vsel %vm249, %v2298, 0
        %v2941 = vsel %vm249, %v2299, 0
        %v2944 = vsel %vm249, %v2301, 0
        %v2947 = vsel %vm249, %v2302, 0
        %v2950 = vsel %vm249, %v2304, 0
        %v2953 = vsel %vm249, %v2305, 0
        %v2956 = vsel %vm249, %v2307, 0
        %v2959 = vsel %vm249, %v2308, 0
        %v2962 = vsel %vm249, %v2310, 0
        %v2965 = vsel %vm249, %v2311, 0
        %v2968 = vsel %vm249, %v2313, 0
        %v2971 = vsel %vm249, %v2314, 0
        %v2974 = vsel %vm249, %v2316, 0
        %v2977 = vsel %vm249, %v2317, 0
        %v2980 = vsel %vm249, %v2319, 0
        %v2983 = vsel %vm249, %v2320, 0
        %v2986 = vsel %vm249, %v2322, 0
        %v2989 = vsel %vm249, %v2323, 0
        %v2992 = vsel %vm249, %v2325, 0
        %v2995 = vsel %vm249, %v2326, 0
        %v2998 = vsel %vm249, %v2328, 0
        %v3001 = vsel %vm249, %v2329, 0
        %v3004 = vsel %vm249, %v2331, 0
        %v3007 = vsel %vm249, %v2332, 0
        %v3010 = vsel %vm249, %v2334, 0
        %v3013 = vsel %vm249, %v2335, 0
        %3015 = vmatpush.msra.mxu0 0.0
        %3016 = vmatpush.msra.mxu0 0.0
        %3017 = vmatpush.msra.mxu0 0.0
        %3018 = vmatpush.msra.mxu0 0.0
        %3019 = vmatpush.msra.mxu0 0.0
        %3020 = vmatpush.msra.mxu0 0.0
        %3021 = vmatpush.msra.mxu0 0.0
        %3022 = vmatpush.msra.mxu0 0.0
        %3023 = vmatpush.msra.mxu0 0.0
        %3024 = vmatpush.msra.mxu0 0.0
        %3025 = vmatpush.msra.mxu0 0.0
        %3026 = vmatpush.msra.mxu0 0.0
        %3027 = vmatpush.msra.mxu0 0.0
        %3028 = vmatpush.msra.mxu0 0.0
        %3029 = vmatpush.msra.mxu0 0.0
        %3030 = vmatpush.msra.mxu0 %v2918
        %3031 = vmatmul.f32.gmra.mxu0 %v2920
        %v3032 = vpop.f32.mrf.mxu0
        %v3033 = vadd.f32 0.0, %v3032
        %3034 = vmatmul.f32.gmra.mxu0 %v2923
        %v3035 = vpop.f32.mrf.mxu0
        %v3036 = vadd.f32 0.0, %v3035
        %3037 = vmatmul.f32.gmra.mxu0 %v2926
        %v3038 = vpop.f32.mrf.mxu0
        %v3039 = vadd.f32 0.0, %v3038
        %3040 = vmatmul.f32.gmra.mxu0 %v2929
        %v3041 = vpop.f32.mrf.mxu0
        %v3042 = vadd.f32 0.0, %v3041
        %3043 = vmatmul.f32.gmra.mxu0 %v2932
        %v3044 = vpop.f32.mrf.mxu0
        %v3045 = vadd.f32 0.0, %v3044
        %3046 = vmatmul.f32.gmra.mxu0 %v2935
        %v3047 = vpop.f32.mrf.mxu0
        %v3048 = vadd.f32 0.0, %v3047
        %3049 = vmatmul.f32.gmra.mxu0 %v2938
        %v3050 = vpop.f32.mrf.mxu0
        %v3051 = vadd.f32 0.0, %v3050
        %3052 = vmatmul.f32.gmra.mxu0 %v2941
        %v3053 = vpop.f32.mrf.mxu0
        %v3054 = vadd.f32 0.0, %v3053
        %3055 = vmatmul.f32.gmra.mxu0 %v2944
        %v3056 = vpop.f32.mrf.mxu0
        %v3057 = vadd.f32 0.0, %v3056
        %3058 = vmatmul.f32.gmra.mxu0 %v2947
        %v3059 = vpop.f32.mrf.mxu0
        %v3060 = vadd.f32 0.0, %v3059
        %3061 = vmatmul.f32.gmra.mxu0 %v2950
        %v3062 = vpop.f32.mrf.mxu0
        %v3063 = vadd.f32 0.0, %v3062
        %3064 = vmatmul.f32.gmra.mxu0 %v2953
        %v3065 = vpop.f32.mrf.mxu0
        %v3066 = vadd.f32 0.0, %v3065
        %3067 = vmatmul.f32.gmra.mxu0 %v2956
        %v3068 = vpop.f32.mrf.mxu0
        %v3069 = vadd.f32 0.0, %v3068
        %3070 = vmatmul.f32.gmra.mxu0 %v2959
        %v3071 = vpop.f32.mrf.mxu0
        %v3072 = vadd.f32 0.0, %v3071
        %3073 = vmatmul.f32.gmra.mxu0 %v2962
        %v3074 = vpop.f32.mrf.mxu0
        %v3075 = vadd.f32 0.0, %v3074
        %3076 = vmatmul.f32.gmra.mxu0 %v2965
        %v3077 = vpop.f32.mrf.mxu0
        %v3078 = vadd.f32 0.0, %v3077
        %3079 = vmatmul.f32.gmra.mxu0 %v2968
        %v3080 = vpop.f32.mrf.mxu0
        %v3081 = vadd.f32 0.0, %v3080
        %3082 = vmatmul.f32.gmra.mxu0 %v2971
        %v3083 = vpop.f32.mrf.mxu0
        %v3084 = vadd.f32 0.0, %v3083
        %3085 = vmatmul.f32.gmra.mxu0 %v2974
        %v3086 = vpop.f32.mrf.mxu0
        %v3087 = vadd.f32 0.0, %v3086
        %3088 = vmatmul.f32.gmra.mxu0 %v2977
        %v3089 = vpop.f32.mrf.mxu0
        %v3090 = vadd.f32 0.0, %v3089
        %3091 = vmatmul.f32.gmra.mxu0 %v2980
        %v3092 = vpop.f32.mrf.mxu0
        %v3093 = vadd.f32 0.0, %v3092
        %3094 = vmatmul.f32.gmra.mxu0 %v2983
        %v3095 = vpop.f32.mrf.mxu0
        %v3096 = vadd.f32 0.0, %v3095
        %3097 = vmatmul.f32.gmra.mxu0 %v2986
        %v3098 = vpop.f32.mrf.mxu0
        %v3099 = vadd.f32 0.0, %v3098
        %3100 = vmatmul.f32.gmra.mxu0 %v2989
        %v3101 = vpop.f32.mrf.mxu0
        %v3102 = vadd.f32 0.0, %v3101
        %3103 = vmatmul.f32.gmra.mxu0 %v2992
        %v3104 = vpop.f32.mrf.mxu0
        %v3105 = vadd.f32 0.0, %v3104
        %3106 = vmatmul.f32.gmra.mxu0 %v2995
        %v3107 = vpop.f32.mrf.mxu0
        %v3108 = vadd.f32 0.0, %v3107
        %3109 = vmatmul.f32.gmra.mxu0 %v2998
        %v3110 = vpop.f32.mrf.mxu0
        %v3111 = vadd.f32 0.0, %v3110
        %3112 = vmatmul.f32.gmra.mxu0 %v3001
        %v3113 = vpop.f32.mrf.mxu0
        %v3114 = vadd.f32 0.0, %v3113
        %3115 = vmatmul.f32.gmra.mxu0 %v3004
        %v3116 = vpop.f32.mrf.mxu0
        %v3117 = vadd.f32 0.0, %v3116
        %3118 = vmatmul.f32.gmra.mxu0 %v3007
        %v3119 = vpop.f32.mrf.mxu0
        %v3120 = vadd.f32 0.0, %v3119
        %3121 = vmatmul.f32.gmra.mxu0 %v3010
        %v3122 = vpop.f32.mrf.mxu0
        %v3123 = vadd.f32 0.0, %v3122
        %3124 = vmatmul.f32.gmra.mxu0 %v3013
        %v3125 = vpop.f32.mrf.mxu0
        %v3126 = vadd.f32 0.0, %v3125
        %3127 = vdwg.mxu0
        %v3128 = vadd.f32 %v2885, %v3033
        %v3129 = vadd.f32 %v2886, %v3036
        %v3130 = vadd.f32 %v2887, %v3039
        %v3131 = vadd.f32 %v2888, %v3042
        %v3132 = vadd.f32 %v2889, %v3045
        %v3133 = vadd.f32 %v2890, %v3048
        %v3134 = vadd.f32 %v2891, %v3051
        %v3135 = vadd.f32 %v2892, %v3054
        %v3136 = vadd.f32 %v2893, %v3057
        %v3137 = vadd.f32 %v2894, %v3060
        %v3138 = vadd.f32 %v2895, %v3063
        %v3139 = vadd.f32 %v2896, %v3066
        %v3140 = vadd.f32 %v2897, %v3069
        %v3141 = vadd.f32 %v2898, %v3072
        %v3142 = vadd.f32 %v2899, %v3075
        %v3143 = vadd.f32 %v2900, %v3078
        %v3144 = vadd.f32 %v2901, %v3081
        %v3145 = vadd.f32 %v2902, %v3084
        %v3146 = vadd.f32 %v2903, %v3087
        %v3147 = vadd.f32 %v2904, %v3090
        %v3148 = vadd.f32 %v2905, %v3093
        %v3149 = vadd.f32 %v2906, %v3096
        %v3150 = vadd.f32 %v2907, %v3099
        %v3151 = vadd.f32 %v2908, %v3102
        %v3152 = vadd.f32 %v2909, %v3105
        %v3153 = vadd.f32 %v2910, %v3108
        %v3154 = vadd.f32 %v2911, %v3111
        %v3155 = vadd.f32 %v2912, %v3114
        %v3156 = vadd.f32 %v2913, %v3117
        %v3157 = vadd.f32 %v2914, %v3120
        %v3158 = vadd.f32 %v2915, %v3123
        %v3159 = vadd.f32 %v2916, %v3126
        %s3160 = scalar_lea.vmem %s3, 32
        %v3161 = vld [vmem:[%s3160] sm:$0xff]
        %v3163 = vsel %vm249, %v2337, 0
        %v3166 = vsel %vm249, %v2338, 0
        %3168 = vmatpush.msra.mxu0 0.0
        %3169 = vmatpush.msra.mxu0 0.0
        %3170 = vmatpush.msra.mxu0 0.0
        %3171 = vmatpush.msra.mxu0 0.0
        %3172 = vmatpush.msra.mxu0 0.0
        %3173 = vmatpush.msra.mxu0 0.0
        %3174 = vmatpush.msra.mxu0 0.0
        %3175 = vmatpush.msra.mxu0 0.0
        %3176 = vmatpush.msra.mxu0 0.0
        %3177 = vmatpush.msra.mxu0 0.0
        %3178 = vmatpush.msra.mxu0 0.0
        %3179 = vmatpush.msra.mxu0 0.0
        %3180 = vmatpush.msra.mxu0 0.0
        %3181 = vmatpush.msra.mxu0 0.0
        %3182 = vmatpush.msra.mxu0 0.0
        %3183 = vmatpush.msra.mxu0 %v3161
        %3184 = vmatmul.f32.gmra.mxu0 %v2926
        %v3185 = vpop.f32.mrf.mxu0
        %v3186 = vadd.f32 0.0, %v3185
        %3187 = vmatmul.f32.gmra.mxu0 %v2929
        %v3188 = vpop.f32.mrf.mxu0
        %v3189 = vadd.f32 0.0, %v3188
        %3190 = vmatmul.f32.gmra.mxu0 %v2932
        %v3191 = vpop.f32.mrf.mxu0
        %v3192 = vadd.f32 0.0, %v3191
        %3193 = vmatmul.f32.gmra.mxu0 %v2935
        %v3194 = vpop.f32.mrf.mxu0
        %v3195 = vadd.f32 0.0, %v3194
        %3196 = vmatmul.f32.gmra.mxu0 %v2938
        %v3197 = vpop.f32.mrf.mxu0
        %v3198 = vadd.f32 0.0, %v3197
        %3199 = vmatmul.f32.gmra.mxu0 %v2941
        %v3200 = vpop.f32.mrf.mxu0
        %v3201 = vadd.f32 0.0, %v3200
        %3202 = vmatmul.f32.gmra.mxu0 %v2944
        %v3203 = vpop.f32.mrf.mxu0
        %v3204 = vadd.f32 0.0, %v3203
        %3205 = vmatmul.f32.gmra.mxu0 %v2947
        %v3206 = vpop.f32.mrf.mxu0
        %v3207 = vadd.f32 0.0, %v3206
        %3208 = vmatmul.f32.gmra.mxu0 %v2950
        %v3209 = vpop.f32.mrf.mxu0
        %v3210 = vadd.f32 0.0, %v3209
        %3211 = vmatmul.f32.gmra.mxu0 %v2953
        %v3212 = vpop.f32.mrf.mxu0
        %v3213 = vadd.f32 0.0, %v3212
        %3214 = vmatmul.f32.gmra.mxu0 %v2956
        %v3215 = vpop.f32.mrf.mxu0
        %v3216 = vadd.f32 0.0, %v3215
        %3217 = vmatmul.f32.gmra.mxu0 %v2959
        %v3218 = vpop.f32.mrf.mxu0
        %v3219 = vadd.f32 0.0, %v3218
        %3220 = vmatmul.f32.gmra.mxu0 %v2962
        %v3221 = vpop.f32.mrf.mxu0
        %v3222 = vadd.f32 0.0, %v3221
        %3223 = vmatmul.f32.gmra.mxu0 %v2965
        %v3224 = vpop.f32.mrf.mxu0
        %v3225 = vadd.f32 0.0, %v3224
        %3226 = vmatmul.f32.gmra.mxu0 %v2968
        %v3227 = vpop.f32.mrf.mxu0
        %v3228 = vadd.f32 0.0, %v3227
        %3229 = vmatmul.f32.gmra.mxu0 %v2971
        %v3230 = vpop.f32.mrf.mxu0
        %v3231 = vadd.f32 0.0, %v3230
        %3232 = vmatmul.f32.gmra.mxu0 %v2974
        %v3233 = vpop.f32.mrf.mxu0
        %v3234 = vadd.f32 0.0, %v3233
        %3235 = vmatmul.f32.gmra.mxu0 %v2977
        %v3236 = vpop.f32.mrf.mxu0
        %v3237 = vadd.f32 0.0, %v3236
        %3238 = vmatmul.f32.gmra.mxu0 %v2980
        %v3239 = vpop.f32.mrf.mxu0
        %v3240 = vadd.f32 0.0, %v3239
        %3241 = vmatmul.f32.gmra.mxu0 %v2983
        %v3242 = vpop.f32.mrf.mxu0
        %v3243 = vadd.f32 0.0, %v3242
        %3244 = vmatmul.f32.gmra.mxu0 %v2986
        %v3245 = vpop.f32.mrf.mxu0
        %v3246 = vadd.f32 0.0, %v3245
        %3247 = vmatmul.f32.gmra.mxu0 %v2989
        %v3248 = vpop.f32.mrf.mxu0
        %v3249 = vadd.f32 0.0, %v3248
        %3250 = vmatmul.f32.gmra.mxu0 %v2992
        %v3251 = vpop.f32.mrf.mxu0
        %v3252 = vadd.f32 0.0, %v3251
        %3253 = vmatmul.f32.gmra.mxu0 %v2995
        %v3254 = vpop.f32.mrf.mxu0
        %v3255 = vadd.f32 0.0, %v3254
        %3256 = vmatmul.f32.gmra.mxu0 %v2998
        %v3257 = vpop.f32.mrf.mxu0
        %v3258 = vadd.f32 0.0, %v3257
        %3259 = vmatmul.f32.gmra.mxu0 %v3001
        %v3260 = vpop.f32.mrf.mxu0
        %v3261 = vadd.f32 0.0, %v3260
        %3262 = vmatmul.f32.gmra.mxu0 %v3004
        %v3263 = vpop.f32.mrf.mxu0
        %v3264 = vadd.f32 0.0, %v3263
        %3265 = vmatmul.f32.gmra.mxu0 %v3007
        %v3266 = vpop.f32.mrf.mxu0
        %v3267 = vadd.f32 0.0, %v3266
        %3268 = vmatmul.f32.gmra.mxu0 %v3010
        %v3269 = vpop.f32.mrf.mxu0
        %v3270 = vadd.f32 0.0, %v3269
        %3271 = vmatmul.f32.gmra.mxu0 %v3013
        %v3272 = vpop.f32.mrf.mxu0
        %v3273 = vadd.f32 0.0, %v3272
        %3274 = vmatmul.f32.gmra.mxu0 %v3163
        %v3275 = vpop.f32.mrf.mxu0
        %v3276 = vadd.f32 0.0, %v3275
        %3277 = vmatmul.f32.gmra.mxu0 %v3166
        %v3278 = vpop.f32.mrf.mxu0
        %v3279 = vadd.f32 0.0, %v3278
        %3280 = vdwg.mxu0
        %v3281 = vadd.f32 %v3128, %v3186
        %v3282 = vadd.f32 %v3129, %v3189
        %v3283 = vadd.f32 %v3130, %v3192
        %v3284 = vadd.f32 %v3131, %v3195
        %v3285 = vadd.f32 %v3132, %v3198
        %v3286 = vadd.f32 %v3133, %v3201
        %v3287 = vadd.f32 %v3134, %v3204
        %v3288 = vadd.f32 %v3135, %v3207
        %v3289 = vadd.f32 %v3136, %v3210
        %v3290 = vadd.f32 %v3137, %v3213
        %v3291 = vadd.f32 %v3138, %v3216
        %v3292 = vadd.f32 %v3139, %v3219
        %v3293 = vadd.f32 %v3140, %v3222
        %v3294 = vadd.f32 %v3141, %v3225
        %v3295 = vadd.f32 %v3142, %v3228
        %v3296 = vadd.f32 %v3143, %v3231
        %v3297 = vadd.f32 %v3144, %v3234
        %v3298 = vadd.f32 %v3145, %v3237
        %v3299 = vadd.f32 %v3146, %v3240
        %v3300 = vadd.f32 %v3147, %v3243
        %v3301 = vadd.f32 %v3148, %v3246
        %v3302 = vadd.f32 %v3149, %v3249
        %v3303 = vadd.f32 %v3150, %v3252
        %v3304 = vadd.f32 %v3151, %v3255
        %v3305 = vadd.f32 %v3152, %v3258
        %v3306 = vadd.f32 %v3153, %v3261
        %v3307 = vadd.f32 %v3154, %v3264
        %v3308 = vadd.f32 %v3155, %v3267
        %v3309 = vadd.f32 %v3156, %v3270
        %v3310 = vadd.f32 %v3157, %v3273
        %v3311 = vadd.f32 %v3158, %v3276
        %v3312 = vadd.f32 %v3159, %v3279
        %s3313 = scalar_lea.vmem %s3, 56
        %v3314 = vld [vmem:[%s3313] sm:$0xff]
        %v3316 = vsel %vm249, %v2340, 0
        %v3319 = vsel %vm249, %v2341, 0
        %3321 = vmatpush.msra.mxu0 0.0
        %3322 = vmatpush.msra.mxu0 0.0
        %3323 = vmatpush.msra.mxu0 0.0
        %3324 = vmatpush.msra.mxu0 0.0
        %3325 = vmatpush.msra.mxu0 0.0
        %3326 = vmatpush.msra.mxu0 0.0
        %3327 = vmatpush.msra.mxu0 0.0
        %3328 = vmatpush.msra.mxu0 0.0
        %3329 = vmatpush.msra.mxu0 0.0
        %3330 = vmatpush.msra.mxu0 0.0
        %3331 = vmatpush.msra.mxu0 0.0
        %3332 = vmatpush.msra.mxu0 0.0
        %3333 = vmatpush.msra.mxu0 0.0
        %3334 = vmatpush.msra.mxu0 0.0
        %3335 = vmatpush.msra.mxu0 0.0
        %3336 = vmatpush.msra.mxu0 %v3314
        %3337 = vmatmul.f32.gmra.mxu0 %v2932
        %v3338 = vpop.f32.mrf.mxu0
        %v3339 = vadd.f32 0.0, %v3338
        %3340 = vmatmul.f32.gmra.mxu0 %v2935
        %v3341 = vpop.f32.mrf.mxu0
        %v3342 = vadd.f32 0.0, %v3341
        %3343 = vmatmul.f32.gmra.mxu0 %v2938
        %v3344 = vpop.f32.mrf.mxu0
        %v3345 = vadd.f32 0.0, %v3344
        %3346 = vmatmul.f32.gmra.mxu0 %v2941
        %v3347 = vpop.f32.mrf.mxu0
        %v3348 = vadd.f32 0.0, %v3347
        %3349 = vmatmul.f32.gmra.mxu0 %v2944
        %v3350 = vpop.f32.mrf.mxu0
        %v3351 = vadd.f32 0.0, %v3350
        %3352 = vmatmul.f32.gmra.mxu0 %v2947
        %v3353 = vpop.f32.mrf.mxu0
        %v3354 = vadd.f32 0.0, %v3353
        %3355 = vmatmul.f32.gmra.mxu0 %v2950
        %v3356 = vpop.f32.mrf.mxu0
        %v3357 = vadd.f32 0.0, %v3356
        %3358 = vmatmul.f32.gmra.mxu0 %v2953
        %v3359 = vpop.f32.mrf.mxu0
        %v3360 = vadd.f32 0.0, %v3359
        %3361 = vmatmul.f32.gmra.mxu0 %v2956
        %v3362 = vpop.f32.mrf.mxu0
        %v3363 = vadd.f32 0.0, %v3362
        %3364 = vmatmul.f32.gmra.mxu0 %v2959
        %v3365 = vpop.f32.mrf.mxu0
        %v3366 = vadd.f32 0.0, %v3365
        %3367 = vmatmul.f32.gmra.mxu0 %v2962
        %v3368 = vpop.f32.mrf.mxu0
        %v3369 = vadd.f32 0.0, %v3368
        %3370 = vmatmul.f32.gmra.mxu0 %v2965
        %v3371 = vpop.f32.mrf.mxu0
        %v3372 = vadd.f32 0.0, %v3371
        %3373 = vmatmul.f32.gmra.mxu0 %v2968
        %v3374 = vpop.f32.mrf.mxu0
        %v3375 = vadd.f32 0.0, %v3374
        %3376 = vmatmul.f32.gmra.mxu0 %v2971
        %v3377 = vpop.f32.mrf.mxu0
        %v3378 = vadd.f32 0.0, %v3377
        %3379 = vmatmul.f32.gmra.mxu0 %v2974
        %v3380 = vpop.f32.mrf.mxu0
        %v3381 = vadd.f32 0.0, %v3380
        %3382 = vmatmul.f32.gmra.mxu0 %v2977
        %v3383 = vpop.f32.mrf.mxu0
        %v3384 = vadd.f32 0.0, %v3383
        %3385 = vmatmul.f32.gmra.mxu0 %v2980
        %v3386 = vpop.f32.mrf.mxu0
        %v3387 = vadd.f32 0.0, %v3386
        %3388 = vmatmul.f32.gmra.mxu0 %v2983
        %v3389 = vpop.f32.mrf.mxu0
        %v3390 = vadd.f32 0.0, %v3389
        %3391 = vmatmul.f32.gmra.mxu0 %v2986
        %v3392 = vpop.f32.mrf.mxu0
        %v3393 = vadd.f32 0.0, %v3392
        %3394 = vmatmul.f32.gmra.mxu0 %v2989
        %v3395 = vpop.f32.mrf.mxu0
        %v3396 = vadd.f32 0.0, %v3395
        %3397 = vmatmul.f32.gmra.mxu0 %v2992
        %v3398 = vpop.f32.mrf.mxu0
        %v3399 = vadd.f32 0.0, %v3398
        %3400 = vmatmul.f32.gmra.mxu0 %v2995
        %v3401 = vpop.f32.mrf.mxu0
        %v3402 = vadd.f32 0.0, %v3401
        %3403 = vmatmul.f32.gmra.mxu0 %v2998
        %v3404 = vpop.f32.mrf.mxu0
        %v3405 = vadd.f32 0.0, %v3404
        %3406 = vmatmul.f32.gmra.mxu0 %v3001
        %v3407 = vpop.f32.mrf.mxu0
        %v3408 = vadd.f32 0.0, %v3407
        %3409 = vmatmul.f32.gmra.mxu0 %v3004
        %v3410 = vpop.f32.mrf.mxu0
        %v3411 = vadd.f32 0.0, %v3410
        %3412 = vmatmul.f32.gmra.mxu0 %v3007
        %v3413 = vpop.f32.mrf.mxu0
        %v3414 = vadd.f32 0.0, %v3413
        %3415 = vmatmul.f32.gmra.mxu0 %v3010
        %v3416 = vpop.f32.mrf.mxu0
        %v3417 = vadd.f32 0.0, %v3416
        %3418 = vmatmul.f32.gmra.mxu0 %v3013
        %v3419 = vpop.f32.mrf.mxu0
        %v3420 = vadd.f32 0.0, %v3419
        %3421 = vmatmul.f32.gmra.mxu0 %v3163
        %v3422 = vpop.f32.mrf.mxu0
        %v3423 = vadd.f32 0.0, %v3422
        %3424 = vmatmul.f32.gmra.mxu0 %v3166
        %v3425 = vpop.f32.mrf.mxu0
        %v3426 = vadd.f32 0.0, %v3425
        %3427 = vmatmul.f32.gmra.mxu0 %v3316
        %v3428 = vpop.f32.mrf.mxu0
        %v3429 = vadd.f32 0.0, %v3428
        %3430 = vmatmul.f32.gmra.mxu0 %v3319
        %v3431 = vpop.f32.mrf.mxu0
        %v3432 = vadd.f32 0.0, %v3431
        %3433 = vdwg.mxu0
        %v3434 = vadd.f32 %v3281, %v3339
        %v3435 = vadd.f32 %v3282, %v3342
        %v3436 = vadd.f32 %v3283, %v3345
        %v3437 = vadd.f32 %v3284, %v3348
        %v3438 = vadd.f32 %v3285, %v3351
        %v3439 = vadd.f32 %v3286, %v3354
        %v3440 = vadd.f32 %v3287, %v3357
        %v3441 = vadd.f32 %v3288, %v3360
        %v3442 = vadd.f32 %v3289, %v3363
        %v3443 = vadd.f32 %v3290, %v3366
        %v3444 = vadd.f32 %v3291, %v3369
        %v3445 = vadd.f32 %v3292, %v3372
        %v3446 = vadd.f32 %v3293, %v3375
        %v3447 = vadd.f32 %v3294, %v3378
        %v3448 = vadd.f32 %v3295, %v3381
        %v3449 = vadd.f32 %v3296, %v3384
        %v3450 = vadd.f32 %v3297, %v3387
        %v3451 = vadd.f32 %v3298, %v3390
        %v3452 = vadd.f32 %v3299, %v3393
        %v3453 = vadd.f32 %v3300, %v3396
        %v3454 = vadd.f32 %v3301, %v3399
        %v3455 = vadd.f32 %v3302, %v3402
        %v3456 = vadd.f32 %v3303, %v3405
        %v3457 = vadd.f32 %v3304, %v3408
        %v3458 = vadd.f32 %v3305, %v3411
        %v3459 = vadd.f32 %v3306, %v3414
        %v3460 = vadd.f32 %v3307, %v3417
        %v3461 = vadd.f32 %v3308, %v3420
        %v3462 = vadd.f32 %v3309, %v3423
        %v3463 = vadd.f32 %v3310, %v3426
        %v3464 = vadd.f32 %v3311, %v3429
        %v3465 = vadd.f32 %v3312, %v3432
        %v3466 = vrot.slane %v2289, 1
        %v3467 = vrot.slane %v2292, 1
        %v3468 = vrot.slane %v2295, 1
        %v3469 = vrot.slane %v2298, 1
        %v3470 = vrot.slane %v2301, 1
        %v3471 = vrot.slane %v2304, 1
        %v3472 = vrot.slane %v2307, 1
        %v3473 = vrot.slane %v2310, 1
        %v3474 = vrot.slane %v2313, 1
        %v3475 = vrot.slane %v2316, 1
        %v3476 = vrot.slane %v2319, 1
        %v3477 = vrot.slane %v2322, 1
        %v3478 = vrot.slane %v2325, 1
        %v3479 = vrot.slane %v2328, 1
        %v3480 = vrot.slane %v2331, 1
        %v3481 = vrot.slane %v2334, 1
        %v3482 = vrot.slane %v2337, 1
        %v3483 = vrot.slane %v2340, 1
        %v3484 = vrot.slane %v2290, 1
        %v3485 = vrot.slane %v2293, 1
        %v3486 = vrot.slane %v2296, 1
        %v3487 = vrot.slane %v2299, 1
        %v3488 = vrot.slane %v2302, 1
        %v3489 = vrot.slane %v2305, 1
        %v3490 = vrot.slane %v2308, 1
        %v3491 = vrot.slane %v2311, 1
        %v3492 = vrot.slane %v2314, 1
        %v3493 = vrot.slane %v2317, 1
        %v3494 = vrot.slane %v2320, 1
        %v3495 = vrot.slane %v2323, 1
        %v3496 = vrot.slane %v2326, 1
        %v3497 = vrot.slane %v2329, 1
        %v3498 = vrot.slane %v2332, 1
        %v3499 = vrot.slane %v2335, 1
        %v3500 = vrot.slane %v2338, 1
        %v3501 = vrot.slane %v2341, 1
        %v3502 = vrot.slane %v2291, 1
        %v3503 = vrot.slane %v2294, 1
        %v3504 = vrot.slane %v2297, 1
        %v3505 = vrot.slane %v2300, 1
        %v3506 = vrot.slane %v2303, 1
        %v3507 = vrot.slane %v2306, 1
        %v3508 = vrot.slane %v2309, 1
        %v3509 = vrot.slane %v2312, 1
        %v3510 = vrot.slane %v2315, 1
        %v3511 = vrot.slane %v2318, 1
        %v3512 = vrot.slane %v2321, 1
        %v3513 = vrot.slane %v2324, 1
        %v3514 = vrot.slane %v2327, 1
        %v3515 = vrot.slane %v2330, 1
        %v3516 = vrot.slane %v2333, 1
        %v3517 = vrot.slane %v2336, 1
        %v3518 = vrot.slane %v2339, 1
        %v3519 = vrot.slane %v2342, 1
        %v3520 = vsel %vm1593, %v3484, %v3502
        %v3521 = vsel %vm1593, %v3485, %v3503
        %v3522 = vsel %vm1593, %v3486, %v3504
        %v3523 = vsel %vm1593, %v3487, %v3505
        %v3524 = vsel %vm1593, %v3488, %v3506
        %v3525 = vsel %vm1593, %v3489, %v3507
        %v3526 = vsel %vm1593, %v3490, %v3508
        %v3527 = vsel %vm1593, %v3491, %v3509
        %v3528 = vsel %vm1593, %v3492, %v3510
        %v3529 = vsel %vm1593, %v3493, %v3511
        %v3530 = vsel %vm1593, %v3494, %v3512
        %v3531 = vsel %vm1593, %v3495, %v3513
        %v3532 = vsel %vm1593, %v3496, %v3514
        %v3533 = vsel %vm1593, %v3497, %v3515
        %v3534 = vsel %vm1593, %v3498, %v3516
        %v3535 = vsel %vm1593, %v3499, %v3517
        %v3536 = vsel %vm1593, %v3500, %v3518
        %v3537 = vsel %vm1593, %v3501, %v3519
        %v3538 = vsel %vm1593, %v3466, %v3484
        %v3539 = vsel %vm1593, %v3467, %v3485
        %v3540 = vsel %vm1593, %v3468, %v3486
        %v3541 = vsel %vm1593, %v3469, %v3487
        %v3542 = vsel %vm1593, %v3470, %v3488
        %v3543 = vsel %vm1593, %v3471, %v3489
        %v3544 = vsel %vm1593, %v3472, %v3490
        %v3545 = vsel %vm1593, %v3473, %v3491
        %v3546 = vsel %vm1593, %v3474, %v3492
        %v3547 = vsel %vm1593, %v3475, %v3493
        %v3548 = vsel %vm1593, %v3476, %v3494
        %v3549 = vsel %vm1593, %v3477, %v3495
        %v3550 = vsel %vm1593, %v3478, %v3496
        %v3551 = vsel %vm1593, %v3479, %v3497
        %v3552 = vsel %vm1593, %v3480, %v3498
        %v3553 = vsel %vm1593, %v3481, %v3499
        %v3554 = vsel %vm1593, %v3482, %v3500
        %v3555 = vsel %vm1593, %v3483, %v3501
        %s3556 = scalar_lea.vmem %s3, 16
        %v3557 = vld [vmem:[%s3556] sm:$0xff]
        %v3559 = vsel %vm249, %v3538, 0
        %v3562 = vsel %vm249, %v3520, 0
        %v3565 = vsel %vm249, %v3539, 0
        %v3568 = vsel %vm249, %v3521, 0
        %v3571 = vsel %vm249, %v3540, 0
        %v3574 = vsel %vm249, %v3522, 0
        %v3577 = vsel %vm249, %v3541, 0
        %v3580 = vsel %vm249, %v3523, 0
        %v3583 = vsel %vm249, %v3542, 0
        %v3586 = vsel %vm249, %v3524, 0
        %v3589 = vsel %vm249, %v3543, 0
        %v3592 = vsel %vm249, %v3525, 0
        %v3595 = vsel %vm249, %v3544, 0
        %v3598 = vsel %vm249, %v3526, 0
        %v3601 = vsel %vm249, %v3545, 0
        %v3604 = vsel %vm249, %v3527, 0
        %v3607 = vsel %vm249, %v3546, 0
        %v3610 = vsel %vm249, %v3528, 0
        %v3613 = vsel %vm249, %v3547, 0
        %v3616 = vsel %vm249, %v3529, 0
        %v3619 = vsel %vm249, %v3548, 0
        %v3622 = vsel %vm249, %v3530, 0
        %v3625 = vsel %vm249, %v3549, 0
        %v3628 = vsel %vm249, %v3531, 0
        %v3631 = vsel %vm249, %v3550, 0
        %v3634 = vsel %vm249, %v3532, 0
        %v3637 = vsel %vm249, %v3551, 0
        %v3640 = vsel %vm249, %v3533, 0
        %v3643 = vsel %vm249, %v3552, 0
        %v3646 = vsel %vm249, %v3534, 0
        %v3649 = vsel %vm249, %v3553, 0
        %v3652 = vsel %vm249, %v3535, 0
        %3654 = vmatpush.msra.mxu0 0.0
        %3655 = vmatpush.msra.mxu0 0.0
        %3656 = vmatpush.msra.mxu0 0.0
        %3657 = vmatpush.msra.mxu0 0.0
        %3658 = vmatpush.msra.mxu0 0.0
        %3659 = vmatpush.msra.mxu0 0.0
        %3660 = vmatpush.msra.mxu0 0.0
        %3661 = vmatpush.msra.mxu0 0.0
        %3662 = vmatpush.msra.mxu0 0.0
        %3663 = vmatpush.msra.mxu0 0.0
        %3664 = vmatpush.msra.mxu0 0.0
        %3665 = vmatpush.msra.mxu0 0.0
        %3666 = vmatpush.msra.mxu0 0.0
        %3667 = vmatpush.msra.mxu0 0.0
        %3668 = vmatpush.msra.mxu0 0.0
        %3669 = vmatpush.msra.mxu0 %v3557
        %3670 = vmatmul.f32.gmra.mxu0 %v3559
        %v3671 = vpop.f32.mrf.mxu0
        %v3672 = vadd.f32 0.0, %v3671
        %3673 = vmatmul.f32.gmra.mxu0 %v3562
        %v3674 = vpop.f32.mrf.mxu0
        %v3675 = vadd.f32 0.0, %v3674
        %3676 = vmatmul.f32.gmra.mxu0 %v3565
        %v3677 = vpop.f32.mrf.mxu0
        %v3678 = vadd.f32 0.0, %v3677
        %3679 = vmatmul.f32.gmra.mxu0 %v3568
        %v3680 = vpop.f32.mrf.mxu0
        %v3681 = vadd.f32 0.0, %v3680
        %3682 = vmatmul.f32.gmra.mxu0 %v3571
        %v3683 = vpop.f32.mrf.mxu0
        %v3684 = vadd.f32 0.0, %v3683
        %3685 = vmatmul.f32.gmra.mxu0 %v3574
        %v3686 = vpop.f32.mrf.mxu0
        %v3687 = vadd.f32 0.0, %v3686
        %3688 = vmatmul.f32.gmra.mxu0 %v3577
        %v3689 = vpop.f32.mrf.mxu0
        %v3690 = vadd.f32 0.0, %v3689
        %3691 = vmatmul.f32.gmra.mxu0 %v3580
        %v3692 = vpop.f32.mrf.mxu0
        %v3693 = vadd.f32 0.0, %v3692
        %3694 = vmatmul.f32.gmra.mxu0 %v3583
        %v3695 = vpop.f32.mrf.mxu0
        %v3696 = vadd.f32 0.0, %v3695
        %3697 = vmatmul.f32.gmra.mxu0 %v3586
        %v3698 = vpop.f32.mrf.mxu0
        %v3699 = vadd.f32 0.0, %v3698
        %3700 = vmatmul.f32.gmra.mxu0 %v3589
        %v3701 = vpop.f32.mrf.mxu0
        %v3702 = vadd.f32 0.0, %v3701
        %3703 = vmatmul.f32.gmra.mxu0 %v3592
        %v3704 = vpop.f32.mrf.mxu0
        %v3705 = vadd.f32 0.0, %v3704
        %3706 = vmatmul.f32.gmra.mxu0 %v3595
        %v3707 = vpop.f32.mrf.mxu0
        %v3708 = vadd.f32 0.0, %v3707
        %3709 = vmatmul.f32.gmra.mxu0 %v3598
        %v3710 = vpop.f32.mrf.mxu0
        %v3711 = vadd.f32 0.0, %v3710
        %3712 = vmatmul.f32.gmra.mxu0 %v3601
        %v3713 = vpop.f32.mrf.mxu0
        %v3714 = vadd.f32 0.0, %v3713
        %3715 = vmatmul.f32.gmra.mxu0 %v3604
        %v3716 = vpop.f32.mrf.mxu0
        %v3717 = vadd.f32 0.0, %v3716
        %3718 = vmatmul.f32.gmra.mxu0 %v3607
        %v3719 = vpop.f32.mrf.mxu0
        %v3720 = vadd.f32 0.0, %v3719
        %3721 = vmatmul.f32.gmra.mxu0 %v3610
        %v3722 = vpop.f32.mrf.mxu0
        %v3723 = vadd.f32 0.0, %v3722
        %3724 = vmatmul.f32.gmra.mxu0 %v3613
        %v3725 = vpop.f32.mrf.mxu0
        %v3726 = vadd.f32 0.0, %v3725
        %3727 = vmatmul.f32.gmra.mxu0 %v3616
        %v3728 = vpop.f32.mrf.mxu0
        %v3729 = vadd.f32 0.0, %v3728
        %3730 = vmatmul.f32.gmra.mxu0 %v3619
        %v3731 = vpop.f32.mrf.mxu0
        %v3732 = vadd.f32 0.0, %v3731
        %3733 = vmatmul.f32.gmra.mxu0 %v3622
        %v3734 = vpop.f32.mrf.mxu0
        %v3735 = vadd.f32 0.0, %v3734
        %3736 = vmatmul.f32.gmra.mxu0 %v3625
        %v3737 = vpop.f32.mrf.mxu0
        %v3738 = vadd.f32 0.0, %v3737
        %3739 = vmatmul.f32.gmra.mxu0 %v3628
        %v3740 = vpop.f32.mrf.mxu0
        %v3741 = vadd.f32 0.0, %v3740
        %3742 = vmatmul.f32.gmra.mxu0 %v3631
        %v3743 = vpop.f32.mrf.mxu0
        %v3744 = vadd.f32 0.0, %v3743
        %3745 = vmatmul.f32.gmra.mxu0 %v3634
        %v3746 = vpop.f32.mrf.mxu0
        %v3747 = vadd.f32 0.0, %v3746
        %3748 = vmatmul.f32.gmra.mxu0 %v3637
        %v3749 = vpop.f32.mrf.mxu0
        %v3750 = vadd.f32 0.0, %v3749
        %3751 = vmatmul.f32.gmra.mxu0 %v3640
        %v3752 = vpop.f32.mrf.mxu0
        %v3753 = vadd.f32 0.0, %v3752
        %3754 = vmatmul.f32.gmra.mxu0 %v3643
        %v3755 = vpop.f32.mrf.mxu0
        %v3756 = vadd.f32 0.0, %v3755
        %3757 = vmatmul.f32.gmra.mxu0 %v3646
        %v3758 = vpop.f32.mrf.mxu0
        %v3759 = vadd.f32 0.0, %v3758
        %3760 = vmatmul.f32.gmra.mxu0 %v3649
        %v3761 = vpop.f32.mrf.mxu0
        %v3762 = vadd.f32 0.0, %v3761
        %3763 = vmatmul.f32.gmra.mxu0 %v3652
        %v3764 = vpop.f32.mrf.mxu0
        %v3765 = vadd.f32 0.0, %v3764
        %3766 = vdwg.mxu0
        %v3767 = vadd.f32 %v3434, %v3672
        %v3768 = vadd.f32 %v3435, %v3675
        %v3769 = vadd.f32 %v3436, %v3678
        %v3770 = vadd.f32 %v3437, %v3681
        %v3771 = vadd.f32 %v3438, %v3684
        %v3772 = vadd.f32 %v3439, %v3687
        %v3773 = vadd.f32 %v3440, %v3690
        %v3774 = vadd.f32 %v3441, %v3693
        %v3775 = vadd.f32 %v3442, %v3696
        %v3776 = vadd.f32 %v3443, %v3699
        %v3777 = vadd.f32 %v3444, %v3702
        %v3778 = vadd.f32 %v3445, %v3705
        %v3779 = vadd.f32 %v3446, %v3708
        %v3780 = vadd.f32 %v3447, %v3711
        %v3781 = vadd.f32 %v3448, %v3714
        %v3782 = vadd.f32 %v3449, %v3717
        %v3783 = vadd.f32 %v3450, %v3720
        %v3784 = vadd.f32 %v3451, %v3723
        %v3785 = vadd.f32 %v3452, %v3726
        %v3786 = vadd.f32 %v3453, %v3729
        %v3787 = vadd.f32 %v3454, %v3732
        %v3788 = vadd.f32 %v3455, %v3735
        %v3789 = vadd.f32 %v3456, %v3738
        %v3790 = vadd.f32 %v3457, %v3741
        %v3791 = vadd.f32 %v3458, %v3744
        %v3792 = vadd.f32 %v3459, %v3747
        %v3793 = vadd.f32 %v3460, %v3750
        %v3794 = vadd.f32 %v3461, %v3753
        %v3795 = vadd.f32 %v3462, %v3756
        %v3796 = vadd.f32 %v3463, %v3759
        %v3797 = vadd.f32 %v3464, %v3762
        %v3798 = vadd.f32 %v3465, %v3765
        %s3799 = scalar_lea.vmem %s3, 40
        %v3800 = vld [vmem:[%s3799] sm:$0xff]
        %v3802 = vsel %vm249, %v3554, 0
        %v3805 = vsel %vm249, %v3536, 0
        %3807 = vmatpush.msra.mxu0 0.0
        %3808 = vmatpush.msra.mxu0 0.0
        %3809 = vmatpush.msra.mxu0 0.0
        %3810 = vmatpush.msra.mxu0 0.0
        %3811 = vmatpush.msra.mxu0 0.0
        %3812 = vmatpush.msra.mxu0 0.0
        %3813 = vmatpush.msra.mxu0 0.0
        %3814 = vmatpush.msra.mxu0 0.0
        %3815 = vmatpush.msra.mxu0 0.0
        %3816 = vmatpush.msra.mxu0 0.0
        %3817 = vmatpush.msra.mxu0 0.0
        %3818 = vmatpush.msra.mxu0 0.0
        %3819 = vmatpush.msra.mxu0 0.0
        %3820 = vmatpush.msra.mxu0 0.0
        %3821 = vmatpush.msra.mxu0 0.0
        %3822 = vmatpush.msra.mxu0 %v3800
        %3823 = vmatmul.f32.gmra.mxu0 %v3565
        %v3824 = vpop.f32.mrf.mxu0
        %v3825 = vadd.f32 0.0, %v3824
        %3826 = vmatmul.f32.gmra.mxu0 %v3568
        %v3827 = vpop.f32.mrf.mxu0
        %v3828 = vadd.f32 0.0, %v3827
        %3829 = vmatmul.f32.gmra.mxu0 %v3571
        %v3830 = vpop.f32.mrf.mxu0
        %v3831 = vadd.f32 0.0, %v3830
        %3832 = vmatmul.f32.gmra.mxu0 %v3574
        %v3833 = vpop.f32.mrf.mxu0
        %v3834 = vadd.f32 0.0, %v3833
        %3835 = vmatmul.f32.gmra.mxu0 %v3577
        %v3836 = vpop.f32.mrf.mxu0
        %v3837 = vadd.f32 0.0, %v3836
        %3838 = vmatmul.f32.gmra.mxu0 %v3580
        %v3839 = vpop.f32.mrf.mxu0
        %v3840 = vadd.f32 0.0, %v3839
        %3841 = vmatmul.f32.gmra.mxu0 %v3583
        %v3842 = vpop.f32.mrf.mxu0
        %v3843 = vadd.f32 0.0, %v3842
        %3844 = vmatmul.f32.gmra.mxu0 %v3586
        %v3845 = vpop.f32.mrf.mxu0
        %v3846 = vadd.f32 0.0, %v3845
        %3847 = vmatmul.f32.gmra.mxu0 %v3589
        %v3848 = vpop.f32.mrf.mxu0
        %v3849 = vadd.f32 0.0, %v3848
        %3850 = vmatmul.f32.gmra.mxu0 %v3592
        %v3851 = vpop.f32.mrf.mxu0
        %v3852 = vadd.f32 0.0, %v3851
        %3853 = vmatmul.f32.gmra.mxu0 %v3595
        %v3854 = vpop.f32.mrf.mxu0
        %v3855 = vadd.f32 0.0, %v3854
        %3856 = vmatmul.f32.gmra.mxu0 %v3598
        %v3857 = vpop.f32.mrf.mxu0
        %v3858 = vadd.f32 0.0, %v3857
        %3859 = vmatmul.f32.gmra.mxu0 %v3601
        %v3860 = vpop.f32.mrf.mxu0
        %v3861 = vadd.f32 0.0, %v3860
        %3862 = vmatmul.f32.gmra.mxu0 %v3604
        %v3863 = vpop.f32.mrf.mxu0
        %v3864 = vadd.f32 0.0, %v3863
        %3865 = vmatmul.f32.gmra.mxu0 %v3607
        %v3866 = vpop.f32.mrf.mxu0
        %v3867 = vadd.f32 0.0, %v3866
        %3868 = vmatmul.f32.gmra.mxu0 %v3610
        %v3869 = vpop.f32.mrf.mxu0
        %v3870 = vadd.f32 0.0, %v3869
        %3871 = vmatmul.f32.gmra.mxu0 %v3613
        %v3872 = vpop.f32.mrf.mxu0
        %v3873 = vadd.f32 0.0, %v3872
        %3874 = vmatmul.f32.gmra.mxu0 %v3616
        %v3875 = vpop.f32.mrf.mxu0
        %v3876 = vadd.f32 0.0, %v3875
        %3877 = vmatmul.f32.gmra.mxu0 %v3619
        %v3878 = vpop.f32.mrf.mxu0
        %v3879 = vadd.f32 0.0, %v3878
        %3880 = vmatmul.f32.gmra.mxu0 %v3622
        %v3881 = vpop.f32.mrf.mxu0
        %v3882 = vadd.f32 0.0, %v3881
        %3883 = vmatmul.f32.gmra.mxu0 %v3625
        %v3884 = vpop.f32.mrf.mxu0
        %v3885 = vadd.f32 0.0, %v3884
        %3886 = vmatmul.f32.gmra.mxu0 %v3628
        %v3887 = vpop.f32.mrf.mxu0
        %v3888 = vadd.f32 0.0, %v3887
        %3889 = vmatmul.f32.gmra.mxu0 %v3631
        %v3890 = vpop.f32.mrf.mxu0
        %v3891 = vadd.f32 0.0, %v3890
        %3892 = vmatmul.f32.gmra.mxu0 %v3634
        %v3893 = vpop.f32.mrf.mxu0
        %v3894 = vadd.f32 0.0, %v3893
        %3895 = vmatmul.f32.gmra.mxu0 %v3637
        %v3896 = vpop.f32.mrf.mxu0
        %v3897 = vadd.f32 0.0, %v3896
        %3898 = vmatmul.f32.gmra.mxu0 %v3640
        %v3899 = vpop.f32.mrf.mxu0
        %v3900 = vadd.f32 0.0, %v3899
        %3901 = vmatmul.f32.gmra.mxu0 %v3643
        %v3902 = vpop.f32.mrf.mxu0
        %v3903 = vadd.f32 0.0, %v3902
        %3904 = vmatmul.f32.gmra.mxu0 %v3646
        %v3905 = vpop.f32.mrf.mxu0
        %v3906 = vadd.f32 0.0, %v3905
        %3907 = vmatmul.f32.gmra.mxu0 %v3649
        %v3908 = vpop.f32.mrf.mxu0
        %v3909 = vadd.f32 0.0, %v3908
        %3910 = vmatmul.f32.gmra.mxu0 %v3652
        %v3911 = vpop.f32.mrf.mxu0
        %v3912 = vadd.f32 0.0, %v3911
        %3913 = vmatmul.f32.gmra.mxu0 %v3802
        %v3914 = vpop.f32.mrf.mxu0
        %v3915 = vadd.f32 0.0, %v3914
        %3916 = vmatmul.f32.gmra.mxu0 %v3805
        %v3917 = vpop.f32.mrf.mxu0
        %v3918 = vadd.f32 0.0, %v3917
        %3919 = vdwg.mxu0
        %v3920 = vadd.f32 %v3767, %v3825
        %v3921 = vadd.f32 %v3768, %v3828
        %v3922 = vadd.f32 %v3769, %v3831
        %v3923 = vadd.f32 %v3770, %v3834
        %v3924 = vadd.f32 %v3771, %v3837
        %v3925 = vadd.f32 %v3772, %v3840
        %v3926 = vadd.f32 %v3773, %v3843
        %v3927 = vadd.f32 %v3774, %v3846
        %v3928 = vadd.f32 %v3775, %v3849
        %v3929 = vadd.f32 %v3776, %v3852
        %v3930 = vadd.f32 %v3777, %v3855
        %v3931 = vadd.f32 %v3778, %v3858
        %v3932 = vadd.f32 %v3779, %v3861
        %v3933 = vadd.f32 %v3780, %v3864
        %v3934 = vadd.f32 %v3781, %v3867
        %v3935 = vadd.f32 %v3782, %v3870
        %v3936 = vadd.f32 %v3783, %v3873
        %v3937 = vadd.f32 %v3784, %v3876
        %v3938 = vadd.f32 %v3785, %v3879
        %v3939 = vadd.f32 %v3786, %v3882
        %v3940 = vadd.f32 %v3787, %v3885
        %v3941 = vadd.f32 %v3788, %v3888
        %v3942 = vadd.f32 %v3789, %v3891
        %v3943 = vadd.f32 %v3790, %v3894
        %v3944 = vadd.f32 %v3791, %v3897
        %v3945 = vadd.f32 %v3792, %v3900
        %v3946 = vadd.f32 %v3793, %v3903
        %v3947 = vadd.f32 %v3794, %v3906
        %v3948 = vadd.f32 %v3795, %v3909
        %v3949 = vadd.f32 %v3796, %v3912
        %v3950 = vadd.f32 %v3797, %v3915
        %v3951 = vadd.f32 %v3798, %v3918
        %s3952 = scalar_lea.vmem %s3, 64
        %v3953 = vld [vmem:[%s3952] sm:$0xff]
        %v3955 = vsel %vm249, %v3555, 0
        %v3958 = vsel %vm249, %v3537, 0
        %3960 = vmatpush.msra.mxu0 0.0
        %3961 = vmatpush.msra.mxu0 0.0
        %3962 = vmatpush.msra.mxu0 0.0
        %3963 = vmatpush.msra.mxu0 0.0
        %3964 = vmatpush.msra.mxu0 0.0
        %3965 = vmatpush.msra.mxu0 0.0
        %3966 = vmatpush.msra.mxu0 0.0
        %3967 = vmatpush.msra.mxu0 0.0
        %3968 = vmatpush.msra.mxu0 0.0
        %3969 = vmatpush.msra.mxu0 0.0
        %3970 = vmatpush.msra.mxu0 0.0
        %3971 = vmatpush.msra.mxu0 0.0
        %3972 = vmatpush.msra.mxu0 0.0
        %3973 = vmatpush.msra.mxu0 0.0
        %3974 = vmatpush.msra.mxu0 0.0
        %3975 = vmatpush.msra.mxu0 %v3953
        %3976 = vmatmul.f32.gmra.mxu0 %v3571
        %v3977 = vpop.f32.mrf.mxu0
        %v3978 = vadd.f32 0.0, %v3977
        %3979 = vmatmul.f32.gmra.mxu0 %v3574
        %v3980 = vpop.f32.mrf.mxu0
        %v3981 = vadd.f32 0.0, %v3980
        %3982 = vmatmul.f32.gmra.mxu0 %v3577
        %v3983 = vpop.f32.mrf.mxu0
        %v3984 = vadd.f32 0.0, %v3983
        %3985 = vmatmul.f32.gmra.mxu0 %v3580
        %v3986 = vpop.f32.mrf.mxu0
        %v3987 = vadd.f32 0.0, %v3986
        %3988 = vmatmul.f32.gmra.mxu0 %v3583
        %v3989 = vpop.f32.mrf.mxu0
        %v3990 = vadd.f32 0.0, %v3989
        %3991 = vmatmul.f32.gmra.mxu0 %v3586
        %v3992 = vpop.f32.mrf.mxu0
        %v3993 = vadd.f32 0.0, %v3992
        %3994 = vmatmul.f32.gmra.mxu0 %v3589
        %v3995 = vpop.f32.mrf.mxu0
        %v3996 = vadd.f32 0.0, %v3995
        %3997 = vmatmul.f32.gmra.mxu0 %v3592
        %v3998 = vpop.f32.mrf.mxu0
        %v3999 = vadd.f32 0.0, %v3998
        %4000 = vmatmul.f32.gmra.mxu0 %v3595
        %v4001 = vpop.f32.mrf.mxu0
        %v4002 = vadd.f32 0.0, %v4001
        %4003 = vmatmul.f32.gmra.mxu0 %v3598
        %v4004 = vpop.f32.mrf.mxu0
        %v4005 = vadd.f32 0.0, %v4004
        %4006 = vmatmul.f32.gmra.mxu0 %v3601
        %v4007 = vpop.f32.mrf.mxu0
        %v4008 = vadd.f32 0.0, %v4007
        %4009 = vmatmul.f32.gmra.mxu0 %v3604
        %v4010 = vpop.f32.mrf.mxu0
        %v4011 = vadd.f32 0.0, %v4010
        %4012 = vmatmul.f32.gmra.mxu0 %v3607
        %v4013 = vpop.f32.mrf.mxu0
        %v4014 = vadd.f32 0.0, %v4013
        %4015 = vmatmul.f32.gmra.mxu0 %v3610
        %v4016 = vpop.f32.mrf.mxu0
        %v4017 = vadd.f32 0.0, %v4016
        %4018 = vmatmul.f32.gmra.mxu0 %v3613
        %v4019 = vpop.f32.mrf.mxu0
        %v4020 = vadd.f32 0.0, %v4019
        %4021 = vmatmul.f32.gmra.mxu0 %v3616
        %v4022 = vpop.f32.mrf.mxu0
        %v4023 = vadd.f32 0.0, %v4022
        %4024 = vmatmul.f32.gmra.mxu0 %v3619
        %v4025 = vpop.f32.mrf.mxu0
        %v4026 = vadd.f32 0.0, %v4025
        %4027 = vmatmul.f32.gmra.mxu0 %v3622
        %v4028 = vpop.f32.mrf.mxu0
        %v4029 = vadd.f32 0.0, %v4028
        %4030 = vmatmul.f32.gmra.mxu0 %v3625
        %v4031 = vpop.f32.mrf.mxu0
        %v4032 = vadd.f32 0.0, %v4031
        %4033 = vmatmul.f32.gmra.mxu0 %v3628
        %v4034 = vpop.f32.mrf.mxu0
        %v4035 = vadd.f32 0.0, %v4034
        %4036 = vmatmul.f32.gmra.mxu0 %v3631
        %v4037 = vpop.f32.mrf.mxu0
        %v4038 = vadd.f32 0.0, %v4037
        %4039 = vmatmul.f32.gmra.mxu0 %v3634
        %v4040 = vpop.f32.mrf.mxu0
        %v4041 = vadd.f32 0.0, %v4040
        %4042 = vmatmul.f32.gmra.mxu0 %v3637
        %v4043 = vpop.f32.mrf.mxu0
        %v4044 = vadd.f32 0.0, %v4043
        %4045 = vmatmul.f32.gmra.mxu0 %v3640
        %v4046 = vpop.f32.mrf.mxu0
        %v4047 = vadd.f32 0.0, %v4046
        %4048 = vmatmul.f32.gmra.mxu0 %v3643
        %v4049 = vpop.f32.mrf.mxu0
        %v4050 = vadd.f32 0.0, %v4049
        %4051 = vmatmul.f32.gmra.mxu0 %v3646
        %v4052 = vpop.f32.mrf.mxu0
        %v4053 = vadd.f32 0.0, %v4052
        %4054 = vmatmul.f32.gmra.mxu0 %v3649
        %v4055 = vpop.f32.mrf.mxu0
        %v4056 = vadd.f32 0.0, %v4055
        %4057 = vmatmul.f32.gmra.mxu0 %v3652
        %v4058 = vpop.f32.mrf.mxu0
        %v4059 = vadd.f32 0.0, %v4058
        %4060 = vmatmul.f32.gmra.mxu0 %v3802
        %v4061 = vpop.f32.mrf.mxu0
        %v4062 = vadd.f32 0.0, %v4061
        %4063 = vmatmul.f32.gmra.mxu0 %v3805
        %v4064 = vpop.f32.mrf.mxu0
        %v4065 = vadd.f32 0.0, %v4064
        %4066 = vmatmul.f32.gmra.mxu0 %v3955
        %v4067 = vpop.f32.mrf.mxu0
        %v4068 = vadd.f32 0.0, %v4067
        %4069 = vmatmul.f32.gmra.mxu0 %v3958
        %v4070 = vpop.f32.mrf.mxu0
        %v4071 = vadd.f32 0.0, %v4070
        %4072 = vdwg.mxu0
        %v4073 = vadd.f32 %v3920, %v3978
        %v4074 = vadd.f32 %v3921, %v3981
        %v4075 = vadd.f32 %v3922, %v3984
        %v4076 = vadd.f32 %v3923, %v3987
        %v4077 = vadd.f32 %v3924, %v3990
        %v4078 = vadd.f32 %v3925, %v3993
        %v4079 = vadd.f32 %v3926, %v3996
        %v4080 = vadd.f32 %v3927, %v3999
        %v4081 = vadd.f32 %v3928, %v4002
        %v4082 = vadd.f32 %v3929, %v4005
        %v4083 = vadd.f32 %v3930, %v4008
        %v4084 = vadd.f32 %v3931, %v4011
        %v4085 = vadd.f32 %v3932, %v4014
        %v4086 = vadd.f32 %v3933, %v4017
        %v4087 = vadd.f32 %v3934, %v4020
        %v4088 = vadd.f32 %v3935, %v4023
        %v4089 = vadd.f32 %v3936, %v4026
        %v4090 = vadd.f32 %v3937, %v4029
        %v4091 = vadd.f32 %v3938, %v4032
        %v4092 = vadd.f32 %v3939, %v4035
        %v4093 = vadd.f32 %v3940, %v4038
        %v4094 = vadd.f32 %v3941, %v4041
        %v4095 = vadd.f32 %v3942, %v4044
        %v4096 = vadd.f32 %v3943, %v4047
        %v4097 = vadd.f32 %v3944, %v4050
        %v4098 = vadd.f32 %v3945, %v4053
        %v4099 = vadd.f32 %v3946, %v4056
        %v4100 = vadd.f32 %v3947, %v4059
        %v4101 = vadd.f32 %v3948, %v4062
        %v4102 = vadd.f32 %v3949, %v4065
        %v4103 = vadd.f32 %v3950, %v4068
        %v4104 = vadd.f32 %v3951, %v4071
        %v4105 = vld [vmem:[%s4] sm:$0x1]
        %v4107 = vperm.slane %v4105, 0
        %v4109 = vadd.f32 %v4073, %v4107
        %v4110 = vadd.f32 %v4074, %v4107
        %v4111 = vadd.f32 %v4075, %v4107
        %v4112 = vadd.f32 %v4076, %v4107
        %v4113 = vadd.f32 %v4077, %v4107
        %v4114 = vadd.f32 %v4078, %v4107
        %v4115 = vadd.f32 %v4079, %v4107
        %v4116 = vadd.f32 %v4080, %v4107
        %v4117 = vadd.f32 %v4081, %v4107
        %v4118 = vadd.f32 %v4082, %v4107
        %v4119 = vadd.f32 %v4083, %v4107
        %v4120 = vadd.f32 %v4084, %v4107
        %v4121 = vadd.f32 %v4085, %v4107
        %v4122 = vadd.f32 %v4086, %v4107
        %v4123 = vadd.f32 %v4087, %v4107
        %v4124 = vadd.f32 %v4088, %v4107
        %v4125 = vadd.f32 %v4089, %v4107
        %v4126 = vadd.f32 %v4090, %v4107
        %v4127 = vadd.f32 %v4091, %v4107
        %v4128 = vadd.f32 %v4092, %v4107
        %v4129 = vadd.f32 %v4093, %v4107
        %v4130 = vadd.f32 %v4094, %v4107
        %v4131 = vadd.f32 %v4095, %v4107
        %v4132 = vadd.f32 %v4096, %v4107
        %v4133 = vadd.f32 %v4097, %v4107
        %v4134 = vadd.f32 %v4098, %v4107
        %v4135 = vadd.f32 %v4099, %v4107
        %v4136 = vadd.f32 %v4100, %v4107
        %v4137 = vadd.f32 %v4101, %v4107
        %v4138 = vadd.f32 %v4102, %v4107
        %v4139 = vadd.f32 %v4103, %v4107
        %v4140 = vadd.f32 %v4104, %v4107
        %v4141 = vmax.f32 %v4109, 0.0
        %v4142 = vmax.f32 %v4110, 0.0
        %v4143 = vmax.f32 %v4111, 0.0
        %v4144 = vmax.f32 %v4112, 0.0
        %v4145 = vmax.f32 %v4113, 0.0
        %v4146 = vmax.f32 %v4114, 0.0
        %v4147 = vmax.f32 %v4115, 0.0
        %v4148 = vmax.f32 %v4116, 0.0
        %v4149 = vmax.f32 %v4117, 0.0
        %v4150 = vmax.f32 %v4118, 0.0
        %v4151 = vmax.f32 %v4119, 0.0
        %v4152 = vmax.f32 %v4120, 0.0
        %v4153 = vmax.f32 %v4121, 0.0
        %v4154 = vmax.f32 %v4122, 0.0
        %v4155 = vmax.f32 %v4123, 0.0
        %v4156 = vmax.f32 %v4124, 0.0
        %v4157 = vmax.f32 %v4125, 0.0
        %v4158 = vmax.f32 %v4126, 0.0
        %v4159 = vmax.f32 %v4127, 0.0
        %v4160 = vmax.f32 %v4128, 0.0
        %v4161 = vmax.f32 %v4129, 0.0
        %v4162 = vmax.f32 %v4130, 0.0
        %v4163 = vmax.f32 %v4131, 0.0
        %v4164 = vmax.f32 %v4132, 0.0
        %v4165 = vmax.f32 %v4133, 0.0
        %v4166 = vmax.f32 %v4134, 0.0
        %v4167 = vmax.f32 %v4135, 0.0
        %v4168 = vmax.f32 %v4136, 0.0
        %v4169 = vmax.f32 %v4137, 0.0
        %v4170 = vmax.f32 %v4138, 0.0
        %v4171 = vmax.f32 %v4139, 0.0
        %v4172 = vmax.f32 %v4140, 0.0
        %4173 = vxpose.xlu0.b32.start [1/16] %v4141, 128
        %4174 = vxpose.xlu0.b32.cont [2/16] %v4142, 128
        %4175 = vxpose.xlu0.b32.cont [3/16] %v4143, 128
        %4176 = vxpose.xlu0.b32.cont [4/16] %v4144, 128
        %4177 = vxpose.xlu0.b32.cont [5/16] %v4145, 128
        %4178 = vxpose.xlu0.b32.cont [6/16] %v4146, 128
        %4179 = vxpose.xlu0.b32.cont [7/16] %v4147, 128
        %4180 = vxpose.xlu0.b32.cont [8/16] %v4148, 128
        %4181 = vxpose.xlu0.b32.cont [9/16] %v4149, 128
        %4182 = vxpose.xlu0.b32.cont [10/16] %v4150, 128
        %4183 = vxpose.xlu0.b32.cont [11/16] %v4151, 128
        %4184 = vxpose.xlu0.b32.cont [12/16] %v4152, 128
        %4185 = vxpose.xlu0.b32.cont [13/16] %v4153, 128
        %4186 = vxpose.xlu0.b32.cont [14/16] %v4154, 128
        %4187 = vxpose.xlu0.b32.cont [15/16] %v4155, 128
        %4188 = vxpose.xlu0.b32.end [16/16] %v4156, 128
        %v4189 = vpop.trf.xlu0
        %v4190 = vpop.trf.xlu0
        %v4191 = vpop.trf.xlu0
        %v4192 = vpop.trf.xlu0
        %v4193 = vpop.trf.xlu0
        %v4194 = vpop.trf.xlu0
        %v4195 = vpop.trf.xlu0
        %v4196 = vpop.trf.xlu0
        %v4197 = vpop.trf.xlu0
        %v4198 = vpop.trf.xlu0
        %v4199 = vpop.trf.xlu0
        %v4200 = vpop.trf.xlu0
        %v4201 = vpop.trf.xlu0
        %v4202 = vpop.trf.xlu0
        %v4203 = vpop.trf.xlu0
        %v4204 = vpop.trf.xlu0
        %4205 = vxpose.xlu0.b32.start [1/16] %v4157, 128
        %4206 = vxpose.xlu0.b32.cont [2/16] %v4158, 128
        %4207 = vxpose.xlu0.b32.cont [3/16] %v4159, 128
        %4208 = vxpose.xlu0.b32.cont [4/16] %v4160, 128
        %4209 = vxpose.xlu0.b32.cont [5/16] %v4161, 128
        %4210 = vxpose.xlu0.b32.cont [6/16] %v4162, 128
        %4211 = vxpose.xlu0.b32.cont [7/16] %v4163, 128
        %4212 = vxpose.xlu0.b32.cont [8/16] %v4164, 128
        %4213 = vxpose.xlu0.b32.cont [9/16] %v4165, 128
        %4214 = vxpose.xlu0.b32.cont [10/16] %v4166, 128
        %4215 = vxpose.xlu0.b32.cont [11/16] %v4167, 128
        %4216 = vxpose.xlu0.b32.cont [12/16] %v4168, 128
        %4217 = vxpose.xlu0.b32.cont [13/16] %v4169, 128
        %4218 = vxpose.xlu0.b32.cont [14/16] %v4170, 128
        %4219 = vxpose.xlu0.b32.cont [15/16] %v4171, 128
        %4220 = vxpose.xlu0.b32.end [16/16] %v4172, 128
        %v4221 = vpop.trf.xlu0
        %v4222 = vpop.trf.xlu0
        %v4223 = vpop.trf.xlu0
        %v4224 = vpop.trf.xlu0
        %v4225 = vpop.trf.xlu0
        %v4226 = vpop.trf.xlu0
        %v4227 = vpop.trf.xlu0
        %v4228 = vpop.trf.xlu0
        %v4229 = vpop.trf.xlu0
        %v4230 = vpop.trf.xlu0
        %v4231 = vpop.trf.xlu0
        %v4232 = vpop.trf.xlu0
        %v4233 = vpop.trf.xlu0
        %v4234 = vpop.trf.xlu0
        %v4235 = vpop.trf.xlu0
        %v4236 = vpop.trf.xlu0
        %4237 = vst [vmem:[%s217] sm:$0xff] %v4189
        %4238 = vst [vmem:[%s217 + $0x8] sm:$0xff] %v4221
        %s4239 = sand.u32 %s137, 1
        %s4240 = scalar_lea.sflag [#allocation5], %s4239
        %s4241 = sand.u32 %s137, 1
        %s4242 = smul.addr %s4241, 16
        %s4243 = scalar_lea.vmem [#allocation4], %s4242
        // Predicated region
        $region41: #{tpu_custom_call.1} parent=39 // pred_check
          %p4244 = pneg %p147
        $region42: #{tpu_custom_call.1} parent=39 // pred_check_branch
          %4246 = sbr.rel (%p4244) target = $region44
        $region43: #{tpu_custom_call.1} parent=39 // pred_region
          %4248 = vsyncadd %s4240, 0
          %s4249 = smul.addr %s19, 2
          %s4250 = smul.addr %s4249, 8
          %s4251 = scalar_lea.hbm %s5, %s4250
          %s4253 = sshll.u32 %s4243, 4
          %s4254 = int_to_ptr.vmem [resolvable:$true] %s4253
          %s4255 = sshll.u32 %s4251, 4
          %s4256 = int_to_ptr.hbm [resolvable:$true] %s4255
          %4258 = dma.vmem_to_hbm [thread:$0]  %s4254, 256, %s4256, %s4240
        $region44: #{tpu_custom_call.1} parent=39 // pred_fallthru
          _
      $region40: #{tpu_custom_call.1} parent=5 // pred_fallthru
        _
      %p4259 = scmp.le.s32.totalorder 2, %s14
      // Predicated region
      $region45: #{tpu_custom_call.1} parent=5 // pred_check
        %p4260 = pneg %p4259
      $region46: #{tpu_custom_call.1} parent=5 // pred_check_branch
        %4262 = sbr.rel (%p4260) target = $region48
      $region47: #{tpu_custom_call.1} parent=5 // pred_region
        %s4263 = ssub.s32 %s14, 2
        // Predicated region
        $region49: #{tpu_custom_call.1} parent=47 // pred_check
          %p4264 = pneg %p153
        $region50: #{tpu_custom_call.1} parent=47 // pred_check_branch
          %4266 = sbr.rel (%p4264) target = $region52
        $region51: #{tpu_custom_call.1} parent=47 // pred_region
          %s4267 = sand.u32 %s138, 1
          %s4268 = scalar_lea.sflag [#allocation5], %s4267
          %s4269 = sand.u32 %s138, 1
          %s4270 = smul.addr %s4269, 16
          %s4271 = scalar_lea.vmem [#allocation4], %s4270
          %4273 = dma.done %s4268, 256
        $region52: #{tpu_custom_call.1} parent=47 // pred_fallthru
          _
      $region48: #{tpu_custom_call.1} parent=5 // pred_fallthru
        _
    $region6: #{tpu_custom_call.1} parent=1 // loop_footer
      %s18 = sadd.s32 1, %s14
    $region7: #{tpu_custom_call.1} parent=1 // loop_footer_branch
      %13 = sbr.rel target = $region3
    $region8: #{tpu_custom_call.1} parent=1 // loop_exit
      _
    %4274 = vsyncpa [#allocation5], 1
    %s4275 = scalar_lea.sflag [#allocation5], 1
    %4276 = vsyncpa %s4275, 1

</llo_original>
